<compile_context>
chip_gen: v7x
topology: tpu7x:2x2x1
jax: 0.10.0
libtpu: 0.0.40
codegen_flags: <defaults>
</compile_context>

<pallas_src>
import jax
import jax.numpy as jnp
from jax.experimental import pallas as pl
from jax.experimental.pallas import tpu as pltpu

# ---------------- model hyper-parameters (from the PyTorch module) -------------
DEPTH_1 = 128
DEPTH_2 = 64
DIMS = 3
K1 = 3                                    # conv1 kernel size
K2 = 1                                    # conv2 kernel size
NUM_HIDDEN = 512
NUM_LABELS = 120
NUM_LABELS_PAD = 128                      # lane-padded fc2 output
STRIDE = 2
NUM_FRAMES = 100
NUM_JOINTS = 25
NUM_CHANNELS = NUM_JOINTS * DIMS          # 75
LSTM_H = 12

# derived temporal lengths
L1 = (NUM_FRAMES - K1) // STRIDE + 1      # 49  (conv1 output length)
L2 = (L1 - K2) // STRIDE + 1              # 25  (conv2 output length)
LP = (L2 - 2) // STRIDE + 1               # 12  (maxpool output length)
FEAT_DIR = DEPTH_2 * LSTM_H               # 768  (per-direction fc1 features)
FEAT = 2 * FEAT_DIR                       # 1536 (fc1 in-features)
KPACK = 256                               # packed conv1 contraction (3*75 -> 256)

LSTM_OUT_DT = jnp.bfloat16                # hidden-state output dtype (feeds fc1)


def _pick_tile(total, prefer):
    """Largest preferred divisor of `total`, else `total` (block == full array)."""
    for d in prefer:
        if total % d == 0:
            return d
    return total


# ------------------------------- Pallas kernels --------------------------------
def conv_block_kernel(a_ref, b_ref, wp_ref, b1_ref, wc2_ref, bc2_ref, o_ref):
    """Fused conv1(k=3,s=2)+ReLU -> conv2(k=1,s=2)+ReLU -> MaxPool1d(2,2).

    a_ref / b_ref hold the pre-packed input taps (bf16, 256 lanes) for the two conv1
    positions (4t and 4t+2) that feed pooling window t; rows are (batch-in-tile)*LP + t.
    wp_ref is the packed (256,128) conv1 weight (3 taps stacked, 3*exp(h) folded in).
    """
    wp = wp_ref[...]
    wc2 = wc2_ref[...]
    b1 = b1_ref[...]
    bc2 = bc2_ref[...]

    def conv_branch(u):
        y = jnp.dot(u, wp, preferred_element_type=jnp.float32) + b1     # conv1
        y = jnp.maximum(y, 0.0).astype(jnp.bfloat16)                    # ReLU -> bf16
        z = jnp.dot(y, wc2, preferred_element_type=jnp.float32) + bc2   # conv2
        return jnp.maximum(z, 0.0)                                      # ReLU  (R, 64)

    o_ref[...] = jnp.maximum(conv_branch(a_ref[...]), conv_branch(b_ref[...]))  # pool


def lstm_kernel(p_ref, wih_ref, whh_f_ref, whh_b_ref, of_ref, ob_ref,
                gin_f_ref, gin_b_ref):
    """Bidirectional LSTM(12 -> 12) in transposed orientation.

    PyTorch feeds the pooled tensor (B, 64, 12) as (seq=B, batch=64, input=12), so the
    recurrence runs over the minibatch axis.  p_ref[b] is (13, 64): pooled[b].T augmented
    with a ones row so the combined bias is folded into the stacked input weights.

    Review items applied:
      * input projections for all steps / both directions hoisted into a pre-pass
        (one (96,13)@(13,64) dot per step, off the serial chain, bias included);
      * fwd and bwd recurrences fused into one fori_loop (independent carries);
      * per step only the (48,12)@(12,64) W_hh dot + elementwise remains per direction.
    Gate order in the packed weights is PyTorch's i, f, g, o.
    """
    nseq = p_ref.shape[0]
    h = LSTM_H
    nc = p_ref.shape[2]                    # 64 "batch" channels live on lanes

    wih = wih_ref[...]                     # (96, 13)  [fwd gates ; bwd gates] x [12 | bias]
    whh_f = whh_f_ref[...]                 # (48, 12)
    whh_b = whh_b_ref[...]                 # (48, 12)

    # ---- hoisted input projection (all steps, both directions, bias folded) ----
    def proj(b, carry):
        g = jnp.dot(wih, p_ref[b], preferred_element_type=jnp.float32)   # (96, 64)
        gin_f_ref[b] = g[0:4 * h]
        gin_b_ref[b] = g[4 * h:8 * h]
        return carry
    jax.lax.fori_loop(0, nseq, proj, 0)

    def cell(g, c_prev):
        i_g = jax.nn.sigmoid(g[0:h])
        f_g = jax.nn.sigmoid(g[h:2 * h])
        g_g = jnp.tanh(g[2 * h:3 * h])
        o_g = jax.nn.sigmoid(g[3 * h:4 * h])
        c_n = f_g * c_prev + i_g * g_g
        return o_g * jnp.tanh(c_n), c_n

    zero = jnp.zeros((h, nc), jnp.float32)

    # ---- fused fwd/bwd recurrence: one loop, two independent dependency chains ----
    def step(s, carry):
        h_f, c_f, h_b, c_b = carry
        t_b = nseq - 1 - s
        g_f = jnp.dot(whh_f, h_f, preferred_element_type=jnp.float32) + gin_f_ref[s]
        g_b = jnp.dot(whh_b, h_b, preferred_element_type=jnp.float32) + gin_b_ref[t_b]
        h_f, c_f = cell(g_f, c_f)
        h_b, c_b = cell(g_b, c_b)
        of_ref[s] = h_f.astype(LSTM_OUT_DT)
        ob_ref[t_b] = h_b.astype(LSTM_OUT_DT)
        return (h_f, c_f, h_b, c_b)

    jax.lax.fori_loop(0, nseq, step, (zero, zero, zero, zero))


def fc_kernel(xf_ref, xb_ref, w1f_ref, w1b_ref, b1_ref, w2_ref, b2_ref, o_ref):
    """out = Linear2( relu( Linear1([feat_fwd | feat_bwd]) ) ); dropouts are identity.

    bf16 operands, f32 accumulation (preferred_element_type).
    """
    hid = (jnp.dot(xf_ref[...], w1f_ref[...], preferred_element_type=jnp.float32)
           + jnp.dot(xb_ref[...], w1b_ref[...], preferred_element_type=jnp.float32)
           + b1_ref[...])
    hid = jnp.maximum(hid, 0.0).astype(jnp.bfloat16)
    o_ref[...] = (jnp.dot(hid, w2_ref[...], preferred_element_type=jnp.float32)
                  + b2_ref[...])


# ------------------------------- forward wrapper -------------------------------
def rigidnet120_forward(x, params):
    B = x.shape[0]
    f32 = jnp.float32
    bf16 = jnp.bfloat16
    x = x.astype(f32)

    # einsum('ijkl,kno->ijkl', x, exp(h)*I3 per joint) == x * 3*exp(h); since conv is
    # linear the scale is folded into the packed conv1 weights (bias unscaled).
    scale = 3.0 * jnp.exp(params["mat_adap_glob_h"]).astype(f32)

    x_r = x.reshape(B, NUM_CHANNELS, NUM_FRAMES)              # == x.view(B, 75, 100)
    x_t = jnp.transpose(x_r, (0, 2, 1))                       # (B, 100, 75)

    # Only conv1 positions {4t, 4t+2 : t<12} survive conv2(s=2)+pool(2,2).  Pack the three
    # taps of each branch along channels (75*3=225), pad to 256 lanes, cast to bf16.
    def pack_branch(ks):
        taps = [x_t[:, k::8, :][:, :LP, :] for k in ks]                      # 3x (B,12,75)
        u = jnp.concatenate(taps, axis=-1).reshape(B * LP, 3 * NUM_CHANNELS)  # (B*12, 225)
        u = jnp.pad(u, ((0, 0), (0, KPACK - 3 * NUM_CHANNELS)))
        return u.astype(bf16)                                                 # (B*12, 256)

    br_a = pack_branch((0, 1, 2))                              # conv1 position 4t
    br_b = pack_branch((4, 5, 6))                              # conv1 position 4t + 2

    # Packed conv1 weight: row k*75+ch = conv1_w[:, ch, k] (scale folded), padded to 256.
    w1c = params["conv1_w"].astype(f32) * scale                # (128, 75, 3)
    wp = jnp.transpose(w1c, (2, 1, 0)).reshape(3 * NUM_CHANNELS, DEPTH_1)
    wp = jnp.pad(wp, ((0, KPACK - 3 * NUM_CHANNELS), (0, 0))).astype(bf16)    # (256, 128)
    b1 = params["conv1_b"].reshape(1, DEPTH_1).astype(f32)
    wc2 = params["conv2_w"].reshape(DEPTH_2, DEPTH_1).T.astype(bf16)          # (128, 64)
    bc2 = params["conv2_b"].reshape(1, DEPTH_2).astype(f32)

    # Batch tile (multiple of 4 keeps bf16 blocks 16-sublane aligned; fallback = full B).
    TB = _pick_tile(B, (128, 64, 32, 16, 8, 4))
    R = TB * LP
    row_spec = pl.BlockSpec((R, KPACK), lambda i: (i, 0))
    rep = lambda shape: pl.BlockSpec(shape, lambda i: (0, 0))

    pooled = pl.pallas_call(
        conv_block_kernel,
        out_shape=jax.ShapeDtypeStruct((B * LP, DEPTH_2), f32),
        grid=(B // TB,),
        in_specs=[row_spec, row_spec,
                  rep((KPACK, DEPTH_1)), rep((1, DEPTH_1)),
                  rep((DEPTH_1, DEPTH_2)), rep((1, DEPTH_2))],
        out_specs=pl.BlockSpec((R, DEPTH_2), lambda i: (i, 0)),
        compiler_params=pltpu.CompilerParams(dimension_semantics=("parallel",)),
    )(br_a, br_b, wp, b1, wc2, bc2)                            # (B*12, 64)

    pooled3 = pooled.reshape(B, LP, DEPTH_2)                   # (B, 12, 64)
    # Augment with a ones row so the LSTM input-projection bias is a weight column.
    p_aug = jnp.concatenate([pooled3, jnp.ones((B, 1, DEPTH_2), f32)], axis=1)  # (B,13,64)

    # ---- bidirectional LSTM(12, 12); stacked input weights with folded biases ----
    def aug_ih(w_ih, b_ih, b_hh):
        return jnp.concatenate([w_ih.astype(f32), (b_ih + b_hh).reshape(4 * LSTM_H, 1).astype(f32)],
                               axis=1)                                        # (48, 13)

    wih_stack = jnp.concatenate(
        [aug_ih(params["lstm_w_ih_f"], params["lstm_b_ih_f"], params["lstm_b_hh_f"]),
         aug_ih(params["lstm_w_ih_b"], params["lstm_b_ih_b"], params["lstm_b_hh_b"])],
        axis=0)                                                              # (96, 13)
    whh_f = params["lstm_w_hh_f"].astype(f32)
    whh_b = params["lstm_w_hh_b"].astype(f32)

    # VMEM budget for the gridless LSTM call (review: v5e 16 MiB / v7x 32 MiB scoped
    # defaults).  ~64 KiB resident per batch element (p_aug + gate scratch + outputs).
    # TODO(synk): for very large B (>~1.5K) the gate scratch should be chunked instead.
    est = B * 70_000 + (8 << 20)
    vmem_lim = int(min(100 << 20, max(32 << 20, est)))

    vmem = lambda: pl.BlockSpec(memory_space=pltpu.MemorySpace.VMEM)
    out_f, out_b = pl.pallas_call(
        lstm_kernel,
        out_shape=(jax.ShapeDtypeStruct((B, LSTM_H, DEPTH_2), LSTM_OUT_DT),
                   jax.ShapeDtypeStruct((B, LSTM_H, DEPTH_2), LSTM_OUT_DT)),
        in_specs=[vmem() for _ in range(4)],
        out_specs=(vmem(), vmem()),
        scratch_shapes=[pltpu.VMEM((B, 4 * LSTM_H, DEPTH_2), jnp.float32),   # fwd gate pre-acts
                        pltpu.VMEM((B, 4 * LSTM_H, DEPTH_2), jnp.float32)],  # bwd gate pre-acts
        compiler_params=pltpu.CompilerParams(vmem_limit_bytes=vmem_lim),
    )(p_aug, wih_stack, whh_f, whh_b)                          # each (B, 12, 64) bf16

    # out_*[b, j, c] = h_dir[b, channel c, hidden j]; free reshapes to (B, 768).
    feat_f = out_f.reshape(B, FEAT_DIR)
    feat_b = out_b.reshape(B, FEAT_DIR)

    # ---- fc1 + ReLU + fc2 (bf16 weights/activations, f32 accumulate) ----
    # PyTorch feature index = 24*c + 12*d + j; our per-direction index = 64*j + c, so
    # permute fc1's input dimension accordingly (one-time wrapper op).
    w4 = params["fc1_w"].astype(f32).reshape(NUM_HIDDEN, DEPTH_2, 2, LSTM_H)   # [u, c, d, j]
    w_fc1_f = jnp.transpose(w4[:, :, 0, :], (2, 1, 0)).reshape(FEAT_DIR, NUM_HIDDEN).astype(bf16)
    w_fc1_b = jnp.transpose(w4[:, :, 1, :], (2, 1, 0)).reshape(FEAT_DIR, NUM_HIDDEN).astype(bf16)
    b_fc1 = params["fc1_b"].reshape(1, NUM_HIDDEN).astype(f32)
    # fc2 padded 120 -> 128 lanes (zero weights/bias), sliced back after the call.
    w_fc2 = jnp.pad(params["fc2_w"].astype(f32).T,
                    ((0, 0), (0, NUM_LABELS_PAD - NUM_LABELS))).astype(bf16)
    b_fc2 = jnp.pad(params["fc2_b"].astype(f32),
                    (0, NUM_LABELS_PAD - NUM_LABELS)).reshape(1, NUM_LABELS_PAD)

    TBF = _pick_tile(B, (512, 256, 128, 64, 32, 16))
    out_pad = pl.pallas_call(
        fc_kernel,
        out_shape=jax.ShapeDtypeStruct((B, NUM_LABELS_PAD), f32),
        grid=(B // TBF,),
        in_specs=[
            pl.BlockSpec((TBF, FEAT_DIR), lambda i: (i, 0)),
            pl.BlockSpec((TBF, FEAT_DIR), lambda i: (i, 0)),
            pl.BlockSpec((FEAT_DIR, NUM_HIDDEN), lambda i: (0, 0)),
            pl.BlockSpec((FEAT_DIR, NUM_HIDDEN), lambda i: (0, 0)),
            pl.BlockSpec((1, NUM_HIDDEN), lambda i: (0, 0)),
            pl.BlockSpec((NUM_HIDDEN, NUM_LABELS_PAD), lambda i: (0, 0)),
            pl.BlockSpec((1, NUM_LABELS_PAD), lambda i: (0, 0)),
        ],
        out_specs=pl.BlockSpec((TBF, NUM_LABELS_PAD), lambda i: (i, 0)),
        compiler_params=pltpu.CompilerParams(dimension_semantics=("parallel",)),
    )(feat_f, feat_b, w_fc1_f, w_fc1_b, b_fc1, w_fc2, b_fc2)

    return out_pad[:, :NUM_LABELS]                             # (B, 120)


# ------------------------------- parameter init --------------------------------
def init_params(key):
    ks = jax.random.split(key, 18)

    def u(k, shape, scl=0.08):
        return scl * jax.random.uniform(k, shape, jnp.float32, -1.0, 1.0)

    return {
        # nn.Parameter(2*rand(1)-1)
        "mat_adap_glob_h": jax.random.uniform(ks[0], (), jnp.float32, -1.0, 1.0),
        # Conv1d(75, 128, 3, stride=2)
        "conv1_w": u(ks[1], (DEPTH_1, NUM_CHANNELS, K1)),
        "conv1_b": u(ks[2], (DEPTH_1,)),
        # Conv1d(128, 64, 1, stride=2)
        "conv2_w": u(ks[3], (DEPTH_2, DEPTH_1, K2)),
        "conv2_b": u(ks[4], (DEPTH_2,)),
        # LSTM(12, 12, bidirectional=True)  (PyTorch gate order i, f, g, o)
        "lstm_w_ih_f": u(ks[5], (4 * LSTM_H, LSTM_H)),
        "lstm_w_hh_f": u(ks[6], (4 * LSTM_H, LSTM_H)),
        "lstm_b_ih_f": u(ks[7], (4 * LSTM_H,)),
        "lstm_b_hh_f": u(ks[8], (4 * LSTM_H,)),
        "lstm_w_ih_b": u(ks[9], (4 * LSTM_H, LSTM_H)),
        "lstm_w_hh_b": u(ks[10], (4 * LSTM_H, LSTM_H)),
        "lstm_b_ih_b": u(ks[11], (4 * LSTM_H,)),
        "lstm_b_hh_b": u(ks[12], (4 * LSTM_H,)),
        # Linear(1536, 512) and Linear(512, 120)
        "fc1_w": u(ks[13], (NUM_HIDDEN, FEAT)),
        "fc1_b": u(ks[14], (NUM_HIDDEN,)),
        "fc2_w": u(ks[15], (NUM_LABELS, NUM_HIDDEN)),
        "fc2_b": u(ks[16], (NUM_LABELS,)),
    }


if __name__ == "__main__":
    key = jax.random.PRNGKey(0)
    pkey, xkey = jax.random.split(key)
    params = init_params(pkey)

    B = 2  # small batch; frames/joints are fixed by the architecture (fc1 = 64*24 -> 512)
    x = jax.random.normal(xkey, (B, DIMS, NUM_JOINTS, NUM_FRAMES), jnp.float32)

    fwd = jax.jit(rigidnet120_forward)
    out = fwd(x, params)
    out = jax.block_until_ready(out)

    assert out.shape == (B, NUM_LABELS), out.shape
    assert bool(jnp.all(jnp.isfinite(out)))
    print("KERNEL_OK")
</pallas_src>

<mosaic_0001>
module attributes {stable_mosaic.version = 11 : i64} {
  func.func @conv_block_kernel(%arg0: i32, %arg1: memref<24x256xbf16, #tpu.memory_space<vmem>>, %arg2: memref<24x256xbf16, #tpu.memory_space<vmem>>, %arg3: memref<256x128xbf16, #tpu.memory_space<vmem>>, %arg4: memref<1x128xf32, #tpu.memory_space<vmem>>, %arg5: memref<128x64xbf16, #tpu.memory_space<vmem>>, %arg6: memref<1x64xf32, #tpu.memory_space<vmem>>, %arg7: memref<24x64xf32, #tpu.memory_space<vmem>>) attributes {dimension_semantics = [#tpu.dimension_semantics<parallel>], iteration_bounds = array<i64: 1>, scalar_prefetch = 0 : i64, scratch_operands = 0 : i64, tpu.core_type = #tpu.core_type<tc>, window_params = [{transform_indices = @transform_0, window_bounds = array<i64: 24, 256>}, {transform_indices = @transform_1, window_bounds = array<i64: 24, 256>}, {pipeline_mode = #tpu.pipeline_mode<synchronous>, transform_indices = @transform_2, window_bounds = array<i64: 256, 128>}, {pipeline_mode = #tpu.pipeline_mode<synchronous>, transform_indices = @transform_3, window_bounds = array<i64: 1, 128>}, {pipeline_mode = #tpu.pipeline_mode<synchronous>, transform_indices = @transform_4, window_bounds = array<i64: 128, 64>}, {pipeline_mode = #tpu.pipeline_mode<synchronous>, transform_indices = @transform_5, window_bounds = array<i64: 1, 64>}, {transform_indices = @transform_6, window_bounds = array<i64: 24, 64>}]} {
    %c0 = arith.constant 0 : index
    %c0_0 = arith.constant 0 : index
    %0 = vector.load %arg3[%c0, %c0_0] : memref<256x128xbf16, #tpu.memory_space<vmem>>, vector<256x128xbf16>
    %c0_1 = arith.constant 0 : index
    %c0_2 = arith.constant 0 : index
    %1 = vector.load %arg5[%c0_1, %c0_2] : memref<128x64xbf16, #tpu.memory_space<vmem>>, vector<128x64xbf16>
    %c0_3 = arith.constant 0 : index
    %c0_4 = arith.constant 0 : index
    %2 = vector.load %arg4[%c0_3, %c0_4] : memref<1x128xf32, #tpu.memory_space<vmem>>, vector<1x128xf32>
    %c0_5 = arith.constant 0 : index
    %c0_6 = arith.constant 0 : index
    %3 = vector.load %arg6[%c0_5, %c0_6] : memref<1x64xf32, #tpu.memory_space<vmem>>, vector<1x64xf32>
    %c0_7 = arith.constant 0 : index
    %c0_8 = arith.constant 0 : index
    %4 = vector.load %arg1[%c0_7, %c0_8] : memref<24x256xbf16, #tpu.memory_space<vmem>>, vector<24x256xbf16>
    %cst = arith.constant dense<0.000000e+00> : vector<24x128xf32>
    %5 = tpu.matmul %4, %0, %cst {dimension_numbers = #tpu.dot_dimension_numbers<[1], [0], [0], [1], [0, 0, 1, 1], [], []>} : vector<24x256xbf16>, vector<256x128xbf16>, vector<24x128xf32> -> vector<24x128xf32>
    %6 = vector.broadcast %2 : vector<1x128xf32> to vector<24x128xf32>
    %7 = arith.addf %5, %6 : vector<24x128xf32>
    %cst_9 = arith.constant 0.000000e+00 : f32
    %8 = vector.broadcast %cst_9 : f32 to vector<24x128xf32>
    %9 = arith.maximumf %7, %8 : vector<24x128xf32>
    %10 = arith.truncf %9 : vector<24x128xf32> to vector<24x128xbf16>
    %cst_10 = arith.constant dense<0.000000e+00> : vector<24x64xf32>
    %11 = tpu.matmul %10, %1, %cst_10 {dimension_numbers = #tpu.dot_dimension_numbers<[1], [0], [0], [1], [0, 0, 1, 1], [], []>} : vector<24x128xbf16>, vector<128x64xbf16>, vector<24x64xf32> -> vector<24x64xf32>
    %12 = vector.broadcast %3 : vector<1x64xf32> to vector<24x64xf32>
    %13 = arith.addf %11, %12 : vector<24x64xf32>
    %cst_11 = arith.constant 0.000000e+00 : f32
    %14 = vector.broadcast %cst_11 : f32 to vector<24x64xf32>
    %15 = arith.maximumf %13, %14 : vector<24x64xf32>
    %c0_12 = arith.constant 0 : index
    %c0_13 = arith.constant 0 : index
    %16 = vector.load %arg2[%c0_12, %c0_13] : memref<24x256xbf16, #tpu.memory_space<vmem>>, vector<24x256xbf16>
    %cst_14 = arith.constant dense<0.000000e+00> : vector<24x128xf32>
    %17 = tpu.matmul %16, %0, %cst_14 {dimension_numbers = #tpu.dot_dimension_numbers<[1], [0], [0], [1], [0, 0, 1, 1], [], []>} : vector<24x256xbf16>, vector<256x128xbf16>, vector<24x128xf32> -> vector<24x128xf32>
    %18 = vector.broadcast %2 : vector<1x128xf32> to vector<24x128xf32>
    %19 = arith.addf %17, %18 : vector<24x128xf32>
    %cst_15 = arith.constant 0.000000e+00 : f32
    %20 = vector.broadcast %cst_15 : f32 to vector<24x128xf32>
    %21 = arith.maximumf %19, %20 : vector<24x128xf32>
    %22 = arith.truncf %21 : vector<24x128xf32> to vector<24x128xbf16>
    %cst_16 = arith.constant dense<0.000000e+00> : vector<24x64xf32>
    %23 = tpu.matmul %22, %1, %cst_16 {dimension_numbers = #tpu.dot_dimension_numbers<[1], [0], [0], [1], [0, 0, 1, 1], [], []>} : vector<24x128xbf16>, vector<128x64xbf16>, vector<24x64xf32> -> vector<24x64xf32>
    %24 = vector.broadcast %3 : vector<1x64xf32> to vector<24x64xf32>
    %25 = arith.addf %23, %24 : vector<24x64xf32>
    %cst_17 = arith.constant 0.000000e+00 : f32
    %26 = vector.broadcast %cst_17 : f32 to vector<24x64xf32>
    %27 = arith.maximumf %25, %26 : vector<24x64xf32>
    %28 = arith.maximumf %15, %27 : vector<24x64xf32>
    %c0_18 = arith.constant 0 : index
    %c0_19 = arith.constant 0 : index
    %29 = vector.load %arg7[%c0_18, %c0_19] : memref<24x64xf32, #tpu.memory_space<vmem>>, vector<24x64xf32>
    tpu.vector_store %arg7[%c0_18, %c0_19], %28 {strides = array<i32>} : memref<24x64xf32, #tpu.memory_space<vmem>>, vector<24x64xf32>,
    return
  }
  func.func @transform_0(%arg0: i32) -> (i32, i32) {
    %c0_i32 = arith.constant 0 : i32
    %c0_i32_0 = arith.constant 0 : i32
    return %arg0, %c0_i32 : i32, i32
  }
  func.func @transform_1(%arg0: i32) -> (i32, i32) {
    %c0_i32 = arith.constant 0 : i32
    %c0_i32_0 = arith.constant 0 : i32
    return %arg0, %c0_i32 : i32, i32
  }
  func.func @transform_2(%arg0: i32) -> (i32, i32) {
    %c0_i32 = arith.constant 0 : i32
    %c0_i32_0 = arith.constant 0 : i32
    %c0_i32_1 = arith.constant 0 : i32
    return %c0_i32, %c0_i32_0 : i32, i32
  }
  func.func @transform_3(%arg0: i32) -> (i32, i32) {
    %c0_i32 = arith.constant 0 : i32
    %c0_i32_0 = arith.constant 0 : i32
    %c0_i32_1 = arith.constant 0 : i32
    return %c0_i32, %c0_i32_0 : i32, i32
  }
  func.func @transform_4(%arg0: i32) -> (i32, i32) {
    %c0_i32 = arith.constant 0 : i32
    %c0_i32_0 = arith.constant 0 : i32
    %c0_i32_1 = arith.constant 0 : i32
    return %c0_i32, %c0_i32_0 : i32, i32
  }
  func.func @transform_5(%arg0: i32) -> (i32, i32) {
    %c0_i32 = arith.constant 0 : i32
    %c0_i32_0 = arith.constant 0 : i32
    %c0_i32_1 = arith.constant 0 : i32
    return %c0_i32, %c0_i32_0 : i32, i32
  }
  func.func @transform_6(%arg0: i32) -> (i32, i32) {
    %c0_i32 = arith.constant 0 : i32
    %c0_i32_0 = arith.constant 0 : i32
    return %arg0, %c0_i32 : i32, i32
  }
}

module attributes {stable_mosaic.version = 11 : i64} {
  func.func @lstm_kernel(%arg0: memref<2x13x64xf32, #tpu.memory_space<vmem>>, %arg1: memref<96x13xf32, #tpu.memory_space<vmem>>, %arg2: memref<48x12xf32, #tpu.memory_space<vmem>>, %arg3: memref<48x12xf32, #tpu.memory_space<vmem>>, %arg4: memref<2x12x64xbf16, #tpu.memory_space<vmem>>, %arg5: memref<2x12x64xbf16, #tpu.memory_space<vmem>>, %arg6: memref<2x48x64xf32, #tpu.memory_space<vmem>>, %arg7: memref<2x48x64xf32, #tpu.memory_space<vmem>>) attributes {dimension_semantics = [], scalar_prefetch = 0 : i64, scratch_operands = 2 : i64, tpu.core_type = #tpu.core_type<tc>} {
    %c0 = arith.constant 0 : index
    %c0_0 = arith.constant 0 : index
    %0 = vector.load %arg1[%c0, %c0_0] : memref<96x13xf32, #tpu.memory_space<vmem>>, vector<96x13xf32>
    %c0_1 = arith.constant 0 : index
    %c0_2 = arith.constant 0 : index
    %1 = vector.load %arg2[%c0_1, %c0_2] : memref<48x12xf32, #tpu.memory_space<vmem>>, vector<48x12xf32>
    %c0_3 = arith.constant 0 : index
    %c0_4 = arith.constant 0 : index
    %2 = vector.load %arg3[%c0_3, %c0_4] : memref<48x12xf32, #tpu.memory_space<vmem>>, vector<48x12xf32>
    %c0_i32 = arith.constant 0 : i32
    %c2_i32 = arith.constant 2 : i32
    %3 = arith.addi %c0_i32, %c2_i32 : i32
    %c1_i32 = arith.constant 1 : i32
    scf.for %arg8 = %c0_i32 to %3 step %c1_i32  : i32 {
      %7 = arith.index_cast %arg8 : i32 to index
      %c0_10 = arith.constant 0 : index
      %c0_11 = arith.constant 0 : index
      %8 = vector.load %arg0[%7, %c0_10, %c0_11] : memref<2x13x64xf32, #tpu.memory_space<vmem>>, vector<1x13x64xf32>
      %9 = vector.shape_cast %8 : vector<1x13x64xf32> to vector<13x64xf32>
      %cst_12 = arith.constant dense<0.000000e+00> : vector<96x64xf32>
      %10 = tpu.matmul %0, %9, %cst_12 {dimension_numbers = #tpu.dot_dimension_numbers<[1], [0], [0], [1], [0, 0, 1, 1], [], []>} : vector<96x13xf32>, vector<13x64xf32>, vector<96x64xf32> -> vector<96x64xf32>
      %11 = vector.extract_strided_slice %10 {offsets = [0, 0], sizes = [48, 64], strides = [1, 1]} : vector<96x64xf32> to vector<48x64xf32>
      %12 = arith.index_cast %arg8 : i32 to index
      %c0_13 = arith.constant 0 : index
      %c0_14 = arith.constant 0 : index
      %13 = vector.load %arg6[%12, %c0_13, %c0_14] : memref<2x48x64xf32, #tpu.memory_space<vmem>>, vector<1x48x64xf32>
      %14 = vector.shape_cast %13 : vector<1x48x64xf32> to vector<48x64xf32>
      %15 = vector.shape_cast %11 : vector<48x64xf32> to vector<1x48x64xf32>
      tpu.vector_store %arg6[%12, %c0_13, %c0_14], %15 {strides = array<i32>} : memref<2x48x64xf32, #tpu.memory_space<vmem>>, vector<1x48x64xf32>,
      %16 = vector.extract_strided_slice %10 {offsets = [48, 0], sizes = [48, 64], strides = [1, 1]} : vector<96x64xf32> to vector<48x64xf32>
      %17 = arith.index_cast %arg8 : i32 to index
      %c0_15 = arith.constant 0 : index
      %c0_16 = arith.constant 0 : index
      %18 = vector.load %arg7[%17, %c0_15, %c0_16] : memref<2x48x64xf32, #tpu.memory_space<vmem>>, vector<1x48x64xf32>
      %19 = vector.shape_cast %18 : vector<1x48x64xf32> to vector<48x64xf32>
      %20 = vector.shape_cast %16 : vector<48x64xf32> to vector<1x48x64xf32>
      tpu.vector_store %arg7[%17, %c0_15, %c0_16], %20 {strides = array<i32>} : memref<2x48x64xf32, #tpu.memory_space<vmem>>, vector<1x48x64xf32>,
    }
    %c2_i32_5 = arith.constant 2 : i32
    %cst = arith.constant 0.000000e+00 : f32
    %4 = vector.broadcast %cst : f32 to vector<12x64xf32>
    %c0_i32_6 = arith.constant 0 : i32
    %c2_i32_7 = arith.constant 2 : i32
    %5 = arith.addi %c0_i32_6, %c2_i32_7 : i32
    %c1_i32_8 = arith.constant 1 : i32
    %6:4 = scf.for %arg8 = %c0_i32_6 to %5 step %c1_i32_8 iter_args(%arg9 = %4, %arg10 = %4, %arg11 = %4, %arg12 = %4) -> (vector<12x64xf32>, vector<12x64xf32>, vector<12x64xf32>, vector<12x64xf32>)  : i32 {
      %c1_i32_10 = arith.constant 1 : i32
      %7 = arith.subi %c1_i32_10, %arg8 : i32
      %cst_11 = arith.constant dense<0.000000e+00> : vector<48x64xf32>
      %8 = tpu.matmul %1, %arg9, %cst_11 {dimension_numbers = #tpu.dot_dimension_numbers<[1], [0], [0], [1], [0, 0, 1, 1], [], []>} : vector<48x12xf32>, vector<12x64xf32>, vector<48x64xf32> -> vector<48x64xf32>
      %9 = arith.index_cast %arg8 : i32 to index
      %c0_12 = arith.constant 0 : index
      %c0_13 = arith.constant 0 : index
      %10 = vector.load %arg6[%9, %c0_12, %c0_13] : memref<2x48x64xf32, #tpu.memory_space<vmem>>, vector<1x48x64xf32>
      %11 = vector.shape_cast %10 : vector<1x48x64xf32> to vector<48x64xf32>
      %12 = arith.addf %8, %11 : vector<48x64xf32>
      %cst_14 = arith.constant dense<0.000000e+00> : vector<48x64xf32>
      %13 = tpu.matmul %2, %arg11, %cst_14 {dimension_numbers = #tpu.dot_dimension_numbers<[1], [0], [0], [1], [0, 0, 1, 1], [], []>} : vector<48x12xf32>, vector<12x64xf32>, vector<48x64xf32> -> vector<48x64xf32>
      %14 = arith.index_cast %7 : i32 to index
      %c0_15 = arith.constant 0 : index
      %c0_16 = arith.constant 0 : index
      %15 = vector.load %arg7[%14, %c0_15, %c0_16] : memref<2x48x64xf32, #tpu.memory_space<vmem>>, vector<1x48x64xf32>
      %16 = vector.shape_cast %15 : vector<1x48x64xf32> to vector<48x64xf32>
      %17 = arith.addf %13, %16 : vector<48x64xf32>
      %18 = vector.extract_strided_slice %12 {offsets = [0, 0], sizes = [12, 64], strides = [1, 1]} : vector<48x64xf32> to vector<12x64xf32>
      %19 = arith.negf %18 : vector<12x64xf32>
      %20 = math.exp %19 : vector<12x64xf32>
      %cst_17 = arith.constant 1.000000e+00 : f32
      %21 = vector.broadcast %cst_17 : f32 to vector<12x64xf32>
      %22 = arith.addf %21, %20 : vector<12x64xf32>
      %23 = arith.divf %21, %22 : vector<12x64xf32>
      %24 = vector.extract_strided_slice %12 {offsets = [12, 0], sizes = [12, 64], strides = [1, 1]} : vector<48x64xf32> to vector<12x64xf32>
      %25 = arith.negf %24 : vector<12x64xf32>
      %26 = math.exp %25 : vector<12x64xf32>
      %cst_18 = arith.constant 1.000000e+00 : f32
      %27 = vector.broadcast %cst_18 : f32 to vector<12x64xf32>
      %28 = arith.addf %27, %26 : vector<12x64xf32>
      %29 = arith.divf %27, %28 : vector<12x64xf32>
      %30 = vector.extract_strided_slice %12 {offsets = [24, 0], sizes = [12, 64], strides = [1, 1]} : vector<48x64xf32> to vector<12x64xf32>
      %31 = math.tanh %30 : vector<12x64xf32>
      %32 = vector.extract_strided_slice %12 {offsets = [36, 0], sizes = [12, 64], strides = [1, 1]} : vector<48x64xf32> to vector<12x64xf32>
      %33 = arith.negf %32 : vector<12x64xf32>
      %34 = math.exp %33 : vector<12x64xf32>
      %cst_19 = arith.constant 1.000000e+00 : f32
      %35 = vector.broadcast %cst_19 : f32 to vector<12x64xf32>
      %36 = arith.addf %35, %34 : vector<12x64xf32>
      %37 = arith.divf %35, %36 : vector<12x64xf32>
      %38 = arith.mulf %29, %arg10 : vector<12x64xf32>
      %39 = arith.mulf %23, %31 : vector<12x64xf32>
      %40 = arith.addf %38, %39 : vector<12x64xf32>
      %41 = math.tanh %40 : vector<12x64xf32>
      %42 = arith.mulf %37, %41 : vector<12x64xf32>
      %43 = vector.extract_strided_slice %17 {offsets = [0, 0], sizes = [12, 64], strides = [1, 1]} : vector<48x64xf32> to vector<12x64xf32>
      %44 = arith.negf %43 : vector<12x64xf32>
      %45 = math.exp %44 : vector<12x64xf32>
      %cst_20 = arith.constant 1.000000e+00 : f32
      %46 = vector.broadcast %cst_20 : f32 to vector<12x64xf32>
      %47 = arith.addf %46, %45 : vector<12x64xf32>
      %48 = arith.divf %46, %47 : vector<12x64xf32>
      %49 = vector.extract_strided_slice %17 {offsets = [12, 0], sizes = [12, 64], strides = [1, 1]} : vector<48x64xf32> to vector<12x64xf32>
      %50 = arith.negf %49 : vector<12x64xf32>
      %51 = math.exp %50 : vector<12x64xf32>
      %cst_21 = arith.constant 1.000000e+00 : f32
      %52 = vector.broadcast %cst_21 : f32 to vector<12x64xf32>
      %53 = arith.addf %52, %51 : vector<12x64xf32>
      %54 = arith.divf %52, %53 : vector<12x64xf32>
      %55 = vector.extract_strided_slice %17 {offsets = [24, 0], sizes = [12, 64], strides = [1, 1]} : vector<48x64xf32> to vector<12x64xf32>
      %56 = math.tanh %55 : vector<12x64xf32>
      %57 = vector.extract_strided_slice %17 {offsets = [36, 0], sizes = [12, 64], strides = [1, 1]} : vector<48x64xf32> to vector<12x64xf32>
      %58 = arith.negf %57 : vector<12x64xf32>
      %59 = math.exp %58 : vector<12x64xf32>
      %cst_22 = arith.constant 1.000000e+00 : f32
      %60 = vector.broadcast %cst_22 : f32 to vector<12x64xf32>
      %61 = arith.addf %60, %59 : vector<12x64xf32>
      %62 = arith.divf %60, %61 : vector<12x64xf32>
      %63 = arith.mulf %54, %arg12 : vector<12x64xf32>
      %64 = arith.mulf %48, %56 : vector<12x64xf32>
      %65 = arith.addf %63, %64 : vector<12x64xf32>
      %66 = math.tanh %65 : vector<12x64xf32>
      %67 = arith.mulf %62, %66 : vector<12x64xf32>
      %68 = arith.truncf %42 : vector<12x64xf32> to vector<12x64xbf16>
      %69 = arith.index_cast %arg8 : i32 to index
      %c0_23 = arith.constant 0 : index
      %c0_24 = arith.constant 0 : index
      %70 = vector.load %arg4[%69, %c0_23, %c0_24] : memref<2x12x64xbf16, #tpu.memory_space<vmem>>, vector<1x12x64xbf16>
      %71 = vector.shape_cast %70 : vector<1x12x64xbf16> to vector<12x64xbf16>
      %72 = vector.shape_cast %68 : vector<12x64xbf16> to vector<1x12x64xbf16>
      tpu.vector_store %arg4[%69, %c0_23, %c0_24], %72 {strides = array<i32>} : memref<2x12x64xbf16, #tpu.memory_space<vmem>>, vector<1x12x64xbf16>,
      %73 = arith.truncf %67 : vector<12x64xf32> to vector<12x64xbf16>
      %74 = arith.index_cast %7 : i32 to index
      %c0_25 = arith.constant 0 : index
      %c0_26 = arith.constant 0 : index
      %75 = vector.load %arg5[%74, %c0_25, %c0_26] : memref<2x12x64xbf16, #tpu.memory_space<vmem>>, vector<1x12x64xbf16>
      %76 = vector.shape_cast %75 : vector<1x12x64xbf16> to vector<12x64xbf16>
      %77 = vector.shape_cast %73 : vector<12x64xbf16> to vector<1x12x64xbf16>
      tpu.vector_store %arg5[%74, %c0_25, %c0_26], %77 {strides = array<i32>} : memref<2x12x64xbf16, #tpu.memory_space<vmem>>, vector<1x12x64xbf16>,
      scf.yield %42, %40, %67, %65 : vector<12x64xf32>, vector<12x64xf32>, vector<12x64xf32>, vector<12x64xf32>
    }
    %c2_i32_9 = arith.constant 2 : i32
    return
  }
}

module attributes {stable_mosaic.version = 11 : i64} {
  func.func @fc_kernel(%arg0: i32, %arg1: memref<2x768xbf16, #tpu.memory_space<vmem>>, %arg2: memref<2x768xbf16, #tpu.memory_space<vmem>>, %arg3: memref<768x512xbf16, #tpu.memory_space<vmem>>, %arg4: memref<768x512xbf16, #tpu.memory_space<vmem>>, %arg5: memref<1x512xf32, #tpu.memory_space<vmem>>, %arg6: memref<512x128xbf16, #tpu.memory_space<vmem>>, %arg7: memref<1x128xf32, #tpu.memory_space<vmem>>, %arg8: memref<2x128xf32, #tpu.memory_space<vmem>>) attributes {dimension_semantics = [#tpu.dimension_semantics<parallel>], iteration_bounds = array<i64: 1>, scalar_prefetch = 0 : i64, scratch_operands = 0 : i64, tpu.core_type = #tpu.core_type<tc>, window_params = [{transform_indices = @transform_0, window_bounds = array<i64: 2, 768>}, {transform_indices = @transform_1, window_bounds = array<i64: 2, 768>}, {pipeline_mode = #tpu.pipeline_mode<synchronous>, transform_indices = @transform_2, window_bounds = array<i64: 768, 512>}, {pipeline_mode = #tpu.pipeline_mode<synchronous>, transform_indices = @transform_3, window_bounds = array<i64: 768, 512>}, {pipeline_mode = #tpu.pipeline_mode<synchronous>, transform_indices = @transform_4, window_bounds = array<i64: 1, 512>}, {pipeline_mode = #tpu.pipeline_mode<synchronous>, transform_indices = @transform_5, window_bounds = array<i64: 512, 128>}, {pipeline_mode = #tpu.pipeline_mode<synchronous>, transform_indices = @transform_6, window_bounds = array<i64: 1, 128>}, {transform_indices = @transform_7, window_bounds = array<i64: 2, 128>}]} {
    %c0 = arith.constant 0 : index
    %c0_0 = arith.constant 0 : index
    %0 = vector.load %arg1[%c0, %c0_0] : memref<2x768xbf16, #tpu.memory_space<vmem>>, vector<2x768xbf16>
    %c0_1 = arith.constant 0 : index
    %c0_2 = arith.constant 0 : index
    %1 = vector.load %arg3[%c0_1, %c0_2] : memref<768x512xbf16, #tpu.memory_space<vmem>>, vector<768x512xbf16>
    %cst = arith.constant dense<0.000000e+00> : vector<2x512xf32>
    %2 = tpu.matmul %0, %1, %cst {dimension_numbers = #tpu.dot_dimension_numbers<[1], [0], [0], [1], [0, 0, 1, 1], [], []>} : vector<2x768xbf16>, vector<768x512xbf16>, vector<2x512xf32> -> vector<2x512xf32>
    %c0_3 = arith.constant 0 : index
    %c0_4 = arith.constant 0 : index
    %3 = vector.load %arg2[%c0_3, %c0_4] : memref<2x768xbf16, #tpu.memory_space<vmem>>, vector<2x768xbf16>
    %c0_5 = arith.constant 0 : index
    %c0_6 = arith.constant 0 : index
    %4 = vector.load %arg4[%c0_5, %c0_6] : memref<768x512xbf16, #tpu.memory_space<vmem>>, vector<768x512xbf16>
    %cst_7 = arith.constant dense<0.000000e+00> : vector<2x512xf32>
    %5 = tpu.matmul %3, %4, %cst_7 {dimension_numbers = #tpu.dot_dimension_numbers<[1], [0], [0], [1], [0, 0, 1, 1], [], []>} : vector<2x768xbf16>, vector<768x512xbf16>, vector<2x512xf32> -> vector<2x512xf32>
    %6 = arith.addf %2, %5 : vector<2x512xf32>
    %c0_8 = arith.constant 0 : index
    %c0_9 = arith.constant 0 : index
    %7 = vector.load %arg5[%c0_8, %c0_9] : memref<1x512xf32, #tpu.memory_space<vmem>>, vector<1x512xf32>
    %8 = vector.broadcast %7 : vector<1x512xf32> to vector<2x512xf32>
    %9 = arith.addf %6, %8 : vector<2x512xf32>
    %cst_10 = arith.constant 0.000000e+00 : f32
    %10 = vector.broadcast %cst_10 : f32 to vector<2x512xf32>
    %11 = arith.maximumf %9, %10 : vector<2x512xf32>
    %12 = arith.truncf %11 : vector<2x512xf32> to vector<2x512xbf16>
    %c0_11 = arith.constant 0 : index
    %c0_12 = arith.constant 0 : index
    %13 = vector.load %arg6[%c0_11, %c0_12] : memref<512x128xbf16, #tpu.memory_space<vmem>>, vector<512x128xbf16>
    %cst_13 = arith.constant dense<0.000000e+00> : vector<2x128xf32>
    %14 = tpu.matmul %12, %13, %cst_13 {dimension_numbers = #tpu.dot_dimension_numbers<[1], [0], [0], [1], [0, 0, 1, 1], [], []>} : vector<2x512xbf16>, vector<512x128xbf16>, vector<2x128xf32> -> vector<2x128xf32>
    %c0_14 = arith.constant 0 : index
    %c0_15 = arith.constant 0 : index
    %15 = vector.load %arg7[%c0_14, %c0_15] : memref<1x128xf32, #tpu.memory_space<vmem>>, vector<1x128xf32>
    %16 = vector.broadcast %15 : vector<1x128xf32> to vector<2x128xf32>
    %17 = arith.addf %14, %16 : vector<2x128xf32>
    %c0_16 = arith.constant 0 : index
    %c0_17 = arith.constant 0 : index
    %18 = vector.load %arg8[%c0_16, %c0_17] : memref<2x128xf32, #tpu.memory_space<vmem>>, vector<2x128xf32>
    tpu.vector_store %arg8[%c0_16, %c0_17], %17 {strides = array<i32>} : memref<2x128xf32, #tpu.memory_space<vmem>>, vector<2x128xf32>,
    return
  }
  func.func @transform_0(%arg0: i32) -> (i32, i32) {
    %c0_i32 = arith.constant 0 : i32
    %c0_i32_0 = arith.constant 0 : i32
    return %arg0, %c0_i32 : i32, i32
  }
  func.func @transform_1(%arg0: i32) -> (i32, i32) {
    %c0_i32 = arith.constant 0 : i32
    %c0_i32_0 = arith.constant 0 : i32
    return %arg0, %c0_i32 : i32, i32
  }
  func.func @transform_2(%arg0: i32) -> (i32, i32) {
    %c0_i32 = arith.constant 0 : i32
    %c0_i32_0 = arith.constant 0 : i32
    %c0_i32_1 = arith.constant 0 : i32
    return %c0_i32, %c0_i32_0 : i32, i32
  }
  func.func @transform_3(%arg0: i32) -> (i32, i32) {
    %c0_i32 = arith.constant 0 : i32
    %c0_i32_0 = arith.constant 0 : i32
    %c0_i32_1 = arith.constant 0 : i32
    return %c0_i32, %c0_i32_0 : i32, i32
  }
  func.func @transform_4(%arg0: i32) -> (i32, i32) {
    %c0_i32 = arith.constant 0 : i32
    %c0_i32_0 = arith.constant 0 : i32
    %c0_i32_1 = arith.constant 0 : i32
    return %c0_i32, %c0_i32_0 : i32, i32
  }
  func.func @transform_5(%arg0: i32) -> (i32, i32) {
    %c0_i32 = arith.constant 0 : i32
    %c0_i32_0 = arith.constant 0 : i32
    %c0_i32_1 = arith.constant 0 : i32
    return %c0_i32, %c0_i32_0 : i32, i32
  }
  func.func @transform_6(%arg0: i32) -> (i32, i32) {
    %c0_i32 = arith.constant 0 : i32
    %c0_i32_0 = arith.constant 0 : i32
    %c0_i32_1 = arith.constant 0 : i32
    return %c0_i32, %c0_i32_0 : i32, i32
  }
  func.func @transform_7(%arg0: i32) -> (i32, i32) {
    %c0_i32 = arith.constant 0 : i32
    %c0_i32_0 = arith.constant 0 : i32
    return %arg0, %c0_i32 : i32, i32
  }
}

</mosaic_0001>

<llo_original>
// kernel: rigidnet120_forward.4
$region0: #{rigidnet120_forward.4}
  #allocation0 [shape = 'u32[]', space=smem, size = 0x4, offset = 0x4, fixed_abs, tag = 'smem constant byte address 0x4 - core index']
  #allocation1 [shape = 'u32[144,128]{1,0:T(1,128)}', space=vmem, size = 0x12000, scoped, tag = 'internal scratch']
  #allocation2 [shape = 'f32[2,48,64]{2,1,0:T(8,128)}', space=vmem, size = 0xc000, scoped, tag = 'scratch operand']
  #allocation3 [shape = 'f32[2,48,64]{2,1,0:T(8,128)}', space=vmem, size = 0xc000, scoped, tag = 'scratch operand']
  %s0 = inlined_call_operand.vmem [shape: f32[2,13,64], index: 0, kind: input, shape index: {}]
  %s1 = inlined_call_operand.vmem [shape: f32[96,13], index: 1, kind: input, shape index: {}]
  %s2 = inlined_call_operand.vmem [shape: f32[48,12], index: 2, kind: input, shape index: {}]
  %s3 = inlined_call_operand.vmem [shape: f32[48,12], index: 3, kind: input, shape index: {}]
  %s4 = inlined_call_operand.vmem [shape: bf16[2,12,64], index: 4, kind: output, shape index: {0}]
  %s5 = inlined_call_operand.vmem [shape: bf16[2,12,64], index: 5, kind: output, shape index: {1}]
  %6 = xla_tuple %s4, %s5
  %s7 = sld [smem:[#allocation0]]
  $region48: #{rigidnet120_forward.4} parent=0
    _
  %s9 = ssub.s32 1, %s7
  %s10 = scalar_select 0, %s9, %s7
  // Predicated region
  $region2: #{rigidnet120_forward.4} parent=0 // pred_check
    _
  $region3: #{rigidnet120_forward.4} parent=0 // pred_check_branch
    %12 = sbr.rel (0) target = $region5
  $region4: #{rigidnet120_forward.4} parent=0 // pred_region
    _
  $region5: #{rigidnet120_forward.4} parent=0 // pred_fallthru
    _
  // Predicated region
  $region6: #{rigidnet120_forward.4} parent=0 // pred_check
    _
  $region7: #{rigidnet120_forward.4} parent=0 // pred_check_branch
    %14 = sbr.rel (0) target = $region9
  $region8: #{rigidnet120_forward.4} parent=0 // pred_region
    _
  $region9: #{rigidnet120_forward.4} parent=0 // pred_fallthru
    _
  // Predicated region
  $region10: #{rigidnet120_forward.4} parent=0 // pred_check
    _
  $region11: #{rigidnet120_forward.4} parent=0 // pred_check_branch
    %16 = sbr.rel (0) target = $region13
  $region12: #{rigidnet120_forward.4} parent=0 // pred_region
    _
  $region13: #{rigidnet120_forward.4} parent=0 // pred_fallthru
    _
  // Predicated region
  $region14: #{rigidnet120_forward.4} parent=0 // pred_check
    _
  $region15: #{rigidnet120_forward.4} parent=0 // pred_check_branch
    %18 = sbr.rel (0) target = $region17
  $region16: #{rigidnet120_forward.4} parent=0 // pred_region
    _
  $region17: #{rigidnet120_forward.4} parent=0 // pred_fallthru
    _
  %v19 = vld [vmem:[%s1] sm:$0xff]
  %v20 = vld [vmem:[%s1 + $0x8] sm:$0xff]
  %v21 = vld [vmem:[%s1 + $0x10] sm:$0xff]
  %v22 = vld [vmem:[%s1 + $0x18] sm:$0xff]
  %v23 = vld [vmem:[%s1 + $0x20] sm:$0xff]
  %v24 = vld [vmem:[%s1 + $0x28] sm:$0xff]
  %v25 = vld [vmem:[%s1 + $0x30] sm:$0xff]
  %v26 = vld [vmem:[%s1 + $0x38] sm:$0xff]
  %v27 = vld [vmem:[%s1 + $0x40] sm:$0xff]
  %v28 = vld [vmem:[%s1 + $0x48] sm:$0xff]
  %v29 = vld [vmem:[%s1 + $0x50] sm:$0xff]
  %v30 = vld [vmem:[%s1 + $0x58] sm:$0xff]
  %v31 = vld [vmem:[%s2] sm:$0xff]
  %v32 = vld [vmem:[%s2 + $0x8] sm:$0xff]
  %v33 = vld [vmem:[%s2 + $0x10] sm:$0xff]
  %v34 = vld [vmem:[%s2 + $0x18] sm:$0xff]
  %v35 = vld [vmem:[%s2 + $0x20] sm:$0xff]
  %v36 = vld [vmem:[%s2 + $0x28] sm:$0xff]
  %v37 = vld [vmem:[%s3] sm:$0xff]
  %v38 = vld [vmem:[%s3 + $0x8] sm:$0xff]
  %v39 = vld [vmem:[%s3 + $0x10] sm:$0xff]
  %v40 = vld [vmem:[%s3 + $0x18] sm:$0xff]
  %v41 = vld [vmem:[%s3 + $0x20] sm:$0xff]
  %v42 = vld [vmem:[%s3 + $0x28] sm:$0xff]
  loop: start=0, step=1, limit=2
  $region18: #{rigidnet120_forward.4} parent=0 // loop_pre_header
    _
  $region19: #{rigidnet120_forward.4} parent=0 // loop_header
    %s44 = sphi 0, %s48
    %p45 = scmp.ge.s32.totalorder %s44, 2
  $region20: #{rigidnet120_forward.4} parent=0 // loop_header_branch
    %47 = sbr.rel (%p45) target = $region24
  $region21: #{rigidnet120_forward.4} parent=0 // loop_body
    %s49 = smul.u32 %s44, 16
    %s50 = scalar_lea.vmem %s0, %s49
    %v51 = vld [vmem:[%s50] sm:$0xff]
    %v52 = vld [vmem:[%s50 + $0x8] sm:$0x1f]
    %vm53 = vcmask 105472
    %v55 = vsel %vm53, %v19, 0
    %v58 = vsel %vm53, %v20, 0
    %v61 = vsel %vm53, %v21, 0
    %v64 = vsel %vm53, %v22, 0
    %v67 = vsel %vm53, %v23, 0
    %v70 = vsel %vm53, %v24, 0
    %v73 = vsel %vm53, %v25, 0
    %v76 = vsel %vm53, %v26, 0
    %v79 = vsel %vm53, %v27, 0
    %v82 = vsel %vm53, %v28, 0
    %v85 = vsel %vm53, %v29, 0
    %v88 = vsel %vm53, %v30, 0
    %vm90 = vcmask 1044480
    %v92 = vsel %vm90, %v52, 0
    %94 = vmatprep.subr.mxu0 0.0
    %95 = vmatpush1.msra.mxu0 %v51
    %96 = vmatprep.subr.mxu0 0.0
    %97 = vmatpush1.msra.mxu0 %v92
    %98 = vmatprep.subr.mxu0 0.0
    %99 = vmatpush1.msra.mxu0 0.0
    %100 = vmatprep.subr.mxu0 0.0
    %101 = vmatpush1.msra.mxu0 0.0
    %102 = vmatprep.subr.mxu0 0.0
    %103 = vmatpush1.msra.mxu0 0.0
    %104 = vmatprep.subr.mxu0 0.0
    %105 = vmatpush1.msra.mxu0 0.0
    %106 = vmatprep.subr.mxu0 0.0
    %107 = vmatpush1.msra.mxu0 0.0
    %108 = vmatprep.subr.mxu0 0.0
    %109 = vmatpush1.msra.mxu0 0.0
    %110 = vmatprep.subr.mxu0 0.0
    %111 = vmatpush1.msra.mxu0 0.0
    %112 = vmatprep.subr.mxu0 0.0
    %113 = vmatpush1.msra.mxu0 0.0
    %114 = vmatprep.subr.mxu0 0.0
    %115 = vmatpush1.msra.mxu0 0.0
    %116 = vmatprep.subr.mxu0 0.0
    %117 = vmatpush1.msra.mxu0 0.0
    %118 = vmatprep.subr.mxu0 0.0
    %119 = vmatpush1.msra.mxu0 0.0
    %120 = vmatprep.subr.mxu0 0.0
    %121 = vmatpush1.msra.mxu0 0.0
    %122 = vmatprep.subr.mxu0 0.0
    %123 = vmatpush1.msra.mxu0 0.0
    %124 = vmatprep.subr.mxu0 0.0
    %125 = vmatpush1.msra.mxu0 0.0
    %126 = vmatprep.subr.mxu0 0.0
    %127 = vmatpush1.msra.mxu0 0.0
    %128 = vmatprep.subr.mxu0 0.0
    %129 = vmatpush1.msra.mxu0 0.0
    %130 = vmatprep.subr.mxu0 0.0
    %131 = vmatpush1.msra.mxu0 0.0
    %132 = vmatprep.subr.mxu0 0.0
    %133 = vmatpush1.msra.mxu0 0.0
    %134 = vmatprep.subr.mxu0 0.0
    %135 = vmatpush1.msra.mxu0 0.0
    %136 = vmatprep.subr.mxu0 0.0
    %137 = vmatpush1.msra.mxu0 0.0
    %138 = vmatprep.subr.mxu0 0.0
    %139 = vmatpush1.msra.mxu0 0.0
    %140 = vmatprep.subr.mxu0 0.0
    %141 = vmatpush1.msra.mxu0 0.0
    %142 = vmatprep.subr.mxu0 0.0
    %143 = vmatpush1.msra.mxu0 0.0
    %144 = vmatprep.subr.mxu0 0.0
    %145 = vmatpush1.msra.mxu0 0.0
    %146 = vmatprep.subr.mxu0 0.0
    %147 = vmatpush1.msra.mxu0 0.0
    %148 = vmatprep.subr.mxu0 0.0
    %149 = vmatpush1.msra.mxu0 0.0
    %150 = vmatprep.subr.mxu0 0.0
    %151 = vmatpush1.msra.mxu0 0.0
    %152 = vmatprep.subr.mxu0 0.0
    %153 = vmatpush1.msra.mxu0 0.0
    %154 = vmatprep.subr.mxu0 0.0
    %155 = vmatpush1.msra.mxu0 0.0
    %156 = vmatprep.subr.mxu0 0.0
    %157 = vmatpush1.msra.mxu0 0.0
    %158 = vmatprep.mubr.f32.mxu0 0.0
    %159 = vmatmul.mubr.f32.gmra.mrb[0].mxu0 %v55
    %v160 = vpop.f32.mrb[0].mxu0
    %v161 = vadd.f32 0.0, %v160
    %v162 = vpop.f32.mrb[0].mxu0
    %163 = vmatprep.mubr.f32.mxu0 0.0
    %164 = vmatmul.mubr.f32.gmra.mrb[0].mxu0 %v58
    %v165 = vpop.f32.mrb[0].mxu0
    %v166 = vadd.f32 0.0, %v165
    %v167 = vpop.f32.mrb[0].mxu0
    %168 = vmatprep.mubr.f32.mxu0 0.0
    %169 = vmatmul.mubr.f32.gmra.mrb[0].mxu0 %v61
    %v170 = vpop.f32.mrb[0].mxu0
    %v171 = vadd.f32 0.0, %v170
    %v172 = vpop.f32.mrb[0].mxu0
    %173 = vmatprep.mubr.f32.mxu0 0.0
    %174 = vmatmul.mubr.f32.gmra.mrb[0].mxu0 %v64
    %v175 = vpop.f32.mrb[0].mxu0
    %v176 = vadd.f32 0.0, %v175
    %v177 = vpop.f32.mrb[0].mxu0
    %178 = vmatprep.mubr.f32.mxu0 0.0
    %179 = vmatmul.mubr.f32.gmra.mrb[0].mxu0 %v67
    %v180 = vpop.f32.mrb[0].mxu0
    %v181 = vadd.f32 0.0, %v180
    %v182 = vpop.f32.mrb[0].mxu0
    %183 = vmatprep.mubr.f32.mxu0 0.0
    %184 = vmatmul.mubr.f32.gmra.mrb[0].mxu0 %v70
    %v185 = vpop.f32.mrb[0].mxu0
    %v186 = vadd.f32 0.0, %v185
    %v187 = vpop.f32.mrb[0].mxu0
    %188 = vmatprep.mubr.f32.mxu0 0.0
    %189 = vmatmul.mubr.f32.gmra.mrb[0].mxu0 %v73
    %v190 = vpop.f32.mrb[0].mxu0
    %v191 = vadd.f32 0.0, %v190
    %v192 = vpop.f32.mrb[0].mxu0
    %193 = vmatprep.mubr.f32.mxu0 0.0
    %194 = vmatmul.mubr.f32.gmra.mrb[0].mxu0 %v76
    %v195 = vpop.f32.mrb[0].mxu0
    %v196 = vadd.f32 0.0, %v195
    %v197 = vpop.f32.mrb[0].mxu0
    %198 = vmatprep.mubr.f32.mxu0 0.0
    %199 = vmatmul.mubr.f32.gmra.mrb[0].mxu0 %v79
    %v200 = vpop.f32.mrb[0].mxu0
    %v201 = vadd.f32 0.0, %v200
    %v202 = vpop.f32.mrb[0].mxu0
    %203 = vmatprep.mubr.f32.mxu0 0.0
    %204 = vmatmul.mubr.f32.gmra.mrb[0].mxu0 %v82
    %v205 = vpop.f32.mrb[0].mxu0
    %v206 = vadd.f32 0.0, %v205
    %v207 = vpop.f32.mrb[0].mxu0
    %208 = vmatprep.mubr.f32.mxu0 0.0
    %209 = vmatmul.mubr.f32.gmra.mrb[0].mxu0 %v85
    %v210 = vpop.f32.mrb[0].mxu0
    %v211 = vadd.f32 0.0, %v210
    %v212 = vpop.f32.mrb[0].mxu0
    %213 = vmatprep.mubr.f32.mxu0 0.0
    %214 = vmatmul.mubr.f32.gmra.mrb[0].mxu0 %v88
    %v215 = vpop.f32.mrb[0].mxu0
    %v216 = vadd.f32 0.0, %v215
    %v217 = vpop.f32.mrb[0].mxu0
    %218 = vdwg.mxu0
    %s219 = smul.u32 %s44, 48
    %s220 = scalar_lea.vmem [#allocation2], %s219
    %vm221 = vcmask 523264
    %222 = vst.msk [vmem:[%s220] sm:$0xff] %vm221, %v161
    %223 = vst.msk [vmem:[%s220 + $0x8] sm:$0xff] %vm221, %v166
    %224 = vst.msk [vmem:[%s220 + $0x10] sm:$0xff] %vm221, %v171
    %225 = vst.msk [vmem:[%s220 + $0x18] sm:$0xff] %vm221, %v176
    %226 = vst.msk [vmem:[%s220 + $0x20] sm:$0xff] %vm221, %v181
    %227 = vst.msk [vmem:[%s220 + $0x28] sm:$0xff] %vm221, %v186
    %s228 = scalar_lea.vmem [#allocation3], %s219
    %229 = vst.msk [vmem:[%s228] sm:$0xff] %vm221, %v191
    %230 = vst.msk [vmem:[%s228 + $0x8] sm:$0xff] %vm221, %v196
    %231 = vst.msk [vmem:[%s228 + $0x10] sm:$0xff] %vm221, %v201
    %232 = vst.msk [vmem:[%s228 + $0x18] sm:$0xff] %vm221, %v206
    %233 = vst.msk [vmem:[%s228 + $0x20] sm:$0xff] %vm221, %v211
    %234 = vst.msk [vmem:[%s228 + $0x28] sm:$0xff] %vm221, %v216
  $region22: #{rigidnet120_forward.4} parent=0 // loop_footer
    %s48 = sadd.s32 1, %s44
  $region23: #{rigidnet120_forward.4} parent=0 // loop_footer_branch
    %43 = sbr.rel target = $region19
  $region24: #{rigidnet120_forward.4} parent=0 // loop_exit
    _
  loop: start=0, step=1, limit=2
  $region25: #{rigidnet120_forward.4} parent=0 // loop_pre_header
    _
  $region26: #{rigidnet120_forward.4} parent=0 // loop_header
    %s236 = sphi 0, %s240
    %p237 = scmp.ge.s32.totalorder %s236, 2
    %v241 = vphi 0.0, %v557
    %v242 = vphi 0.0, %v558
    %v243 = vphi 0.0, %v553
    %v244 = vphi 0.0, %v554
    %v245 = vphi 0.0, %v606
    %v246 = vphi 0.0, %v607
    %v247 = vphi 0.0, %v602
    %v248 = vphi 0.0, %v603
  $region27: #{rigidnet120_forward.4} parent=0 // loop_header_branch
    %239 = sbr.rel (%p237) target = $region31
  $region28: #{rigidnet120_forward.4} parent=0 // loop_body
    %s249 = ssub.s32 1, %s236
    %s250 = smul.u32 %s236, 48
    %s251 = scalar_lea.vmem [#allocation2], %s250
    %v252 = vld [vmem:[%s251] sm:$0xff]
    %v253 = vld [vmem:[%s251 + $0x8] sm:$0xff]
    %v254 = vld [vmem:[%s251 + $0x10] sm:$0xff]
    %v255 = vld [vmem:[%s251 + $0x18] sm:$0xff]
    %v256 = vld [vmem:[%s251 + $0x20] sm:$0xff]
    %v257 = vld [vmem:[%s251 + $0x28] sm:$0xff]
    %vm260 = vcmask 1043456
    %v261 = vrot.slane %v241, 4
    %v262 = vrot.slane %v242, 4
    %v263 = vsel %vm260, %v261, %v262
    %vm265 = vcmask 97280
    %v267 = vsel %vm265, %v31, 0
    %v270 = vsel %vm265, %v32, 0
    %v273 = vsel %vm265, %v33, 0
    %v276 = vsel %vm265, %v34, 0
    %v279 = vsel %vm265, %v35, 0
    %v282 = vsel %vm265, %v36, 0
    %v284 = vsel %vm260, %v262, 0
    %286 = vmatprep.subr.mxu0 0.0
    %287 = vmatpush1.msra.mxu0 %v263
    %288 = vmatprep.subr.mxu0 0.0
    %289 = vmatpush1.msra.mxu0 %v284
    %290 = vmatprep.subr.mxu0 0.0
    %291 = vmatpush1.msra.mxu0 0.0
    %292 = vmatprep.subr.mxu0 0.0
    %293 = vmatpush1.msra.mxu0 0.0
    %294 = vmatprep.subr.mxu0 0.0
    %295 = vmatpush1.msra.mxu0 0.0
    %296 = vmatprep.subr.mxu0 0.0
    %297 = vmatpush1.msra.mxu0 0.0
    %298 = vmatprep.subr.mxu0 0.0
    %299 = vmatpush1.msra.mxu0 0.0
    %300 = vmatprep.subr.mxu0 0.0
    %301 = vmatpush1.msra.mxu0 0.0
    %302 = vmatprep.subr.mxu0 0.0
    %303 = vmatpush1.msra.mxu0 0.0
    %304 = vmatprep.subr.mxu0 0.0
    %305 = vmatpush1.msra.mxu0 0.0
    %306 = vmatprep.subr.mxu0 0.0
    %307 = vmatpush1.msra.mxu0 0.0
    %308 = vmatprep.subr.mxu0 0.0
    %309 = vmatpush1.msra.mxu0 0.0
    %310 = vmatprep.subr.mxu0 0.0
    %311 = vmatpush1.msra.mxu0 0.0
    %312 = vmatprep.subr.mxu0 0.0
    %313 = vmatpush1.msra.mxu0 0.0
    %314 = vmatprep.subr.mxu0 0.0
    %315 = vmatpush1.msra.mxu0 0.0
    %316 = vmatprep.subr.mxu0 0.0
    %317 = vmatpush1.msra.mxu0 0.0
    %318 = vmatprep.subr.mxu0 0.0
    %319 = vmatpush1.msra.mxu0 0.0
    %320 = vmatprep.subr.mxu0 0.0
    %321 = vmatpush1.msra.mxu0 0.0
    %322 = vmatprep.subr.mxu0 0.0
    %323 = vmatpush1.msra.mxu0 0.0
    %324 = vmatprep.subr.mxu0 0.0
    %325 = vmatpush1.msra.mxu0 0.0
    %326 = vmatprep.subr.mxu0 0.0
    %327 = vmatpush1.msra.mxu0 0.0
    %328 = vmatprep.subr.mxu0 0.0
    %329 = vmatpush1.msra.mxu0 0.0
    %330 = vmatprep.subr.mxu0 0.0
    %331 = vmatpush1.msra.mxu0 0.0
    %332 = vmatprep.subr.mxu0 0.0
    %333 = vmatpush1.msra.mxu0 0.0
    %334 = vmatprep.subr.mxu0 0.0
    %335 = vmatpush1.msra.mxu0 0.0
    %336 = vmatprep.subr.mxu0 0.0
    %337 = vmatpush1.msra.mxu0 0.0
    %338 = vmatprep.subr.mxu0 0.0
    %339 = vmatpush1.msra.mxu0 0.0
    %340 = vmatprep.subr.mxu0 0.0
    %341 = vmatpush1.msra.mxu0 0.0
    %342 = vmatprep.subr.mxu0 0.0
    %343 = vmatpush1.msra.mxu0 0.0
    %344 = vmatprep.subr.mxu0 0.0
    %345 = vmatpush1.msra.mxu0 0.0
    %346 = vmatprep.subr.mxu0 0.0
    %347 = vmatpush1.msra.mxu0 0.0
    %348 = vmatprep.subr.mxu0 0.0
    %349 = vmatpush1.msra.mxu0 0.0
    %350 = vmatprep.mubr.f32.mxu0 0.0
    %351 = vmatmul.mubr.f32.gmra.mrb[0].mxu0 %v267
    %v352 = vpop.f32.mrb[0].mxu0
    %v353 = vadd.f32 %v252, %v352
    %v354 = vpop.f32.mrb[0].mxu0
    %355 = vmatprep.mubr.f32.mxu0 0.0
    %356 = vmatmul.mubr.f32.gmra.mrb[0].mxu0 %v270
    %v357 = vpop.f32.mrb[0].mxu0
    %v358 = vadd.f32 %v253, %v357
    %v359 = vpop.f32.mrb[0].mxu0
    %360 = vmatprep.mubr.f32.mxu0 0.0
    %361 = vmatmul.mubr.f32.gmra.mrb[0].mxu0 %v273
    %v362 = vpop.f32.mrb[0].mxu0
    %v363 = vadd.f32 %v254, %v362
    %v364 = vpop.f32.mrb[0].mxu0
    %365 = vmatprep.mubr.f32.mxu0 0.0
    %366 = vmatmul.mubr.f32.gmra.mrb[0].mxu0 %v276
    %v367 = vpop.f32.mrb[0].mxu0
    %v368 = vadd.f32 %v255, %v367
    %v369 = vpop.f32.mrb[0].mxu0
    %370 = vmatprep.mubr.f32.mxu0 0.0
    %371 = vmatmul.mubr.f32.gmra.mrb[0].mxu0 %v279
    %v372 = vpop.f32.mrb[0].mxu0
    %v373 = vadd.f32 %v256, %v372
    %v374 = vpop.f32.mrb[0].mxu0
    %375 = vmatprep.mubr.f32.mxu0 0.0
    %376 = vmatmul.mubr.f32.gmra.mrb[0].mxu0 %v282
    %v377 = vpop.f32.mrb[0].mxu0
    %v378 = vadd.f32 %v257, %v377
    %v379 = vpop.f32.mrb[0].mxu0
    %380 = vdwg.mxu0
    %s381 = smul.u32 %s249, 48
    %s382 = scalar_lea.vmem [#allocation3], %s381
    %v383 = vld [vmem:[%s382] sm:$0xff]
    %v384 = vld [vmem:[%s382 + $0x8] sm:$0xff]
    %v385 = vld [vmem:[%s382 + $0x10] sm:$0xff]
    %v386 = vld [vmem:[%s382 + $0x18] sm:$0xff]
    %v387 = vld [vmem:[%s382 + $0x20] sm:$0xff]
    %v388 = vld [vmem:[%s382 + $0x28] sm:$0xff]
    %v391 = vrot.slane %v245, 4
    %v392 = vrot.slane %v246, 4
    %v393 = vsel %vm260, %v391, %v392
    %v396 = vsel %vm265, %v37, 0
    %v399 = vsel %vm265, %v38, 0
    %v402 = vsel %vm265, %v39, 0
    %v405 = vsel %vm265, %v40, 0
    %v408 = vsel %vm265, %v41, 0
    %v411 = vsel %vm265, %v42, 0
    %v413 = vsel %vm260, %v392, 0
    %415 = vmatprep.subr.mxu0 0.0
    %416 = vmatpush1.msra.mxu0 %v393
    %417 = vmatprep.subr.mxu0 0.0
    %418 = vmatpush1.msra.mxu0 %v413
    %419 = vmatprep.subr.mxu0 0.0
    %420 = vmatpush1.msra.mxu0 0.0
    %421 = vmatprep.subr.mxu0 0.0
    %422 = vmatpush1.msra.mxu0 0.0
    %423 = vmatprep.subr.mxu0 0.0
    %424 = vmatpush1.msra.mxu0 0.0
    %425 = vmatprep.subr.mxu0 0.0
    %426 = vmatpush1.msra.mxu0 0.0
    %427 = vmatprep.subr.mxu0 0.0
    %428 = vmatpush1.msra.mxu0 0.0
    %429 = vmatprep.subr.mxu0 0.0
    %430 = vmatpush1.msra.mxu0 0.0
    %431 = vmatprep.subr.mxu0 0.0
    %432 = vmatpush1.msra.mxu0 0.0
    %433 = vmatprep.subr.mxu0 0.0
    %434 = vmatpush1.msra.mxu0 0.0
    %435 = vmatprep.subr.mxu0 0.0
    %436 = vmatpush1.msra.mxu0 0.0
    %437 = vmatprep.subr.mxu0 0.0
    %438 = vmatpush1.msra.mxu0 0.0
    %439 = vmatprep.subr.mxu0 0.0
    %440 = vmatpush1.msra.mxu0 0.0
    %441 = vmatprep.subr.mxu0 0.0
    %442 = vmatpush1.msra.mxu0 0.0
    %443 = vmatprep.subr.mxu0 0.0
    %444 = vmatpush1.msra.mxu0 0.0
    %445 = vmatprep.subr.mxu0 0.0
    %446 = vmatpush1.msra.mxu0 0.0
    %447 = vmatprep.subr.mxu0 0.0
    %448 = vmatpush1.msra.mxu0 0.0
    %449 = vmatprep.subr.mxu0 0.0
    %450 = vmatpush1.msra.mxu0 0.0
    %451 = vmatprep.subr.mxu0 0.0
    %452 = vmatpush1.msra.mxu0 0.0
    %453 = vmatprep.subr.mxu0 0.0
    %454 = vmatpush1.msra.mxu0 0.0
    %455 = vmatprep.subr.mxu0 0.0
    %456 = vmatpush1.msra.mxu0 0.0
    %457 = vmatprep.subr.mxu0 0.0
    %458 = vmatpush1.msra.mxu0 0.0
    %459 = vmatprep.subr.mxu0 0.0
    %460 = vmatpush1.msra.mxu0 0.0
    %461 = vmatprep.subr.mxu0 0.0
    %462 = vmatpush1.msra.mxu0 0.0
    %463 = vmatprep.subr.mxu0 0.0
    %464 = vmatpush1.msra.mxu0 0.0
    %465 = vmatprep.subr.mxu0 0.0
    %466 = vmatpush1.msra.mxu0 0.0
    %467 = vmatprep.subr.mxu0 0.0
    %468 = vmatpush1.msra.mxu0 0.0
    %469 = vmatprep.subr.mxu0 0.0
    %470 = vmatpush1.msra.mxu0 0.0
    %471 = vmatprep.subr.mxu0 0.0
    %472 = vmatpush1.msra.mxu0 0.0
    %473 = vmatprep.subr.mxu0 0.0
    %474 = vmatpush1.msra.mxu0 0.0
    %475 = vmatprep.subr.mxu0 0.0
    %476 = vmatpush1.msra.mxu0 0.0
    %477 = vmatprep.subr.mxu0 0.0
    %478 = vmatpush1.msra.mxu0 0.0
    %479 = vmatprep.mubr.f32.mxu0 0.0
    %480 = vmatmul.mubr.f32.gmra.mrb[0].mxu0 %v396
    %v481 = vpop.f32.mrb[0].mxu0
    %v482 = vadd.f32 %v383, %v481
    %v483 = vpop.f32.mrb[0].mxu0
    %484 = vmatprep.mubr.f32.mxu0 0.0
    %485 = vmatmul.mubr.f32.gmra.mrb[0].mxu0 %v399
    %v486 = vpop.f32.mrb[0].mxu0
    %v487 = vadd.f32 %v384, %v486
    %v488 = vpop.f32.mrb[0].mxu0
    %489 = vmatprep.mubr.f32.mxu0 0.0
    %490 = vmatmul.mubr.f32.gmra.mrb[0].mxu0 %v402
    %v491 = vpop.f32.mrb[0].mxu0
    %v492 = vadd.f32 %v385, %v491
    %v493 = vpop.f32.mrb[0].mxu0
    %494 = vmatprep.mubr.f32.mxu0 0.0
    %495 = vmatmul.mubr.f32.gmra.mrb[0].mxu0 %v405
    %v496 = vpop.f32.mrb[0].mxu0
    %v497 = vadd.f32 %v386, %v496
    %v498 = vpop.f32.mrb[0].mxu0
    %499 = vmatprep.mubr.f32.mxu0 0.0
    %500 = vmatmul.mubr.f32.gmra.mrb[0].mxu0 %v408
    %v501 = vpop.f32.mrb[0].mxu0
    %v502 = vadd.f32 %v387, %v501
    %v503 = vpop.f32.mrb[0].mxu0
    %504 = vmatprep.mubr.f32.mxu0 0.0
    %505 = vmatmul.mubr.f32.gmra.mrb[0].mxu0 %v411
    %v506 = vpop.f32.mrb[0].mxu0
    %v507 = vadd.f32 %v388, %v506
    %v508 = vpop.f32.mrb[0].mxu0
    %509 = vdwg.mxu0
    %v510 = vxor.u32 %v353, 2147483648
    %v511 = vxor.u32 %v358, 2147483648
    %v512 = vmul.f32 %v510, 1.442695
    %v513 = vpow.pop %v512
    %v514 = vmul.f32 %v511, 1.442695
    %v515 = vpow.pop %v514
    %v516 = vadd.f32 %v513, 1.0
    %v517 = vadd.f32 %v515, 1.0
    %v518 = vrcp.pop %v516
    %v519 = vmul.f32 1.0, %v518
    %v520 = vrcp.pop %v517
    %v521 = vmul.f32 1.0, %v520
    %v522 = vxor.u32 %v363, 2147483648
    %v523 = vmul.f32 %v522, 1.442695
    %v524 = vpow.pop %v523
    %v525 = vadd.f32 %v524, 1.0
    %v526 = vrcp.pop %v525
    %v527 = vmul.f32 1.0, %v526
    %v528 = vtanh.pop %v368
    %v529 = vtanh.pop %v373
    %v530 = vxor.u32 %v373, 2147483648
    %v531 = vxor.u32 %v378, 2147483648
    %v532 = vmul.f32 %v530, 1.442695
    %v533 = vpow.pop %v532
    %v534 = vmul.f32 %v531, 1.442695
    %v535 = vpow.pop %v534
    %v536 = vadd.f32 %v533, 1.0
    %v537 = vadd.f32 %v535, 1.0
    %v538 = vrcp.pop %v536
    %v539 = vmul.f32 1.0, %v538
    %v540 = vrcp.pop %v537
    %v541 = vmul.f32 1.0, %v540
    %v542 = vmul.f32 %v521, %v243
    %v543 = vmul.f32 %v527, %v244
    %v544 = vmul.f32 %v519, %v528
    %v545 = vmul.f32 %v521, %v529
    %v548 = vrot.slane %v544, 4
    %v549 = vrot.slane %v545, 4
    %v550 = vsel %vm260, %v548, %v549
    %v553 = vadd.f32 %v542, %v548
    %v554 = vadd.f32 %v543, %v550
    %v555 = vtanh.pop %v553
    %v556 = vtanh.pop %v554
    %v557 = vmul.f32 %v539, %v555
    %v558 = vmul.f32 %v541, %v556
    %v559 = vxor.u32 %v482, 2147483648
    %v560 = vxor.u32 %v487, 2147483648
    %v561 = vmul.f32 %v559, 1.442695
    %v562 = vpow.pop %v561
    %v563 = vmul.f32 %v560, 1.442695
    %v564 = vpow.pop %v563
    %v565 = vadd.f32 %v562, 1.0
    %v566 = vadd.f32 %v564, 1.0
    %v567 = vrcp.pop %v565
    %v568 = vmul.f32 1.0, %v567
    %v569 = vrcp.pop %v566
    %v570 = vmul.f32 1.0, %v569
    %v571 = vxor.u32 %v492, 2147483648
    %v572 = vmul.f32 %v571, 1.442695
    %v573 = vpow.pop %v572
    %v574 = vadd.f32 %v573, 1.0
    %v575 = vrcp.pop %v574
    %v576 = vmul.f32 1.0, %v575
    %v577 = vtanh.pop %v497
    %v578 = vtanh.pop %v502
    %v579 = vxor.u32 %v502, 2147483648
    %v580 = vxor.u32 %v507, 2147483648
    %v581 = vmul.f32 %v579, 1.442695
    %v582 = vpow.pop %v581
    %v583 = vmul.f32 %v580, 1.442695
    %v584 = vpow.pop %v583
    %v585 = vadd.f32 %v582, 1.0
    %v586 = vadd.f32 %v584, 1.0
    %v587 = vrcp.pop %v585
    %v588 = vmul.f32 1.0, %v587
    %v589 = vrcp.pop %v586
    %v590 = vmul.f32 1.0, %v589
    %v591 = vmul.f32 %v570, %v247
    %v592 = vmul.f32 %v576, %v248
    %v593 = vmul.f32 %v568, %v577
    %v594 = vmul.f32 %v570, %v578
    %v597 = vrot.slane %v593, 4
    %v598 = vrot.slane %v594, 4
    %v599 = vsel %vm260, %v597, %v598
    %v602 = vadd.f32 %v591, %v597
    %v603 = vadd.f32 %v592, %v599
    %v604 = vtanh.pop %v602
    %v605 = vtanh.pop %v603
    %v606 = vmul.f32 %v588, %v604
    %v607 = vmul.f32 %v590, %v605
    %v608 = vpack.c.bf16 %v558, %v557
    %v610 = vunpack.c.l.b16 %v608
    %v611 = vunpack.c.h.b16 %v608
    %v612 = vpack.c.b16 %v610, %v610
    %v613 = vpack.c.b16 %v611, %v611
    %vm614 = vcmask 1041408
    %vm615 = vcmask 1045508
    %vm616 = vmor %vm614, %vm615
    %v617 = vrot.slane %v612, 6
    %v618 = vrot.slane %v617, 4
    %v619 = vrot.slane %v613, 6
    %v620 = vsel %vm616, %v618, %v619
    %v621 = vrot.slane %v619, 4
    %s624 = smul.u32 %s236, 2
    %s625 = smul.addr %s624, 4
    %s626 = scalar_lea.vmem %s4, %s625
    %vm627 = vcmask 519168
    %628 = vst.msk [vmem:[%s626] sm:$0xf] %vm627, %v620
    %vm629 = vcmask 517120
    %630 = vst.msk [vmem:[%s626 + $0x4] sm:$0x3] %vm629, %v621
    %v631 = vpack.c.bf16 %v607, %v606
    %v633 = vunpack.c.l.b16 %v631
    %v634 = vunpack.c.h.b16 %v631
    %v635 = vpack.c.b16 %v633, %v633
    %v636 = vpack.c.b16 %v634, %v634
    %v637 = vrot.slane %v635, 6
    %v638 = vrot.slane %v637, 4
    %v639 = vrot.slane %v636, 6
    %v640 = vsel %vm616, %v638, %v639
    %v641 = vrot.slane %v639, 4
    %s644 = smul.u32 %s249, 2
    %s645 = smul.addr %s644, 4
    %s646 = scalar_lea.vmem %s5, %s645
    %647 = vst.msk [vmem:[%s646] sm:$0xf] %vm627, %v640
    %648 = vst.msk [vmem:[%s646 + $0x4] sm:$0x3] %vm629, %v641
  $region29: #{rigidnet120_forward.4} parent=0 // loop_footer
    %s240 = sadd.s32 1, %s236
  $region30: #{rigidnet120_forward.4} parent=0 // loop_footer_branch
    %235 = sbr.rel target = $region26
  $region31: #{rigidnet120_forward.4} parent=0 // loop_exit
    _
  // Predicated region
  $region32: #{rigidnet120_forward.4} parent=0 // pred_check
    _
  $region33: #{rigidnet120_forward.4} parent=0 // pred_check_branch
    %650 = sbr.rel (0) target = $region35
  $region34: #{rigidnet120_forward.4} parent=0 // pred_region
    _
  $region35: #{rigidnet120_forward.4} parent=0 // pred_fallthru
    _
  // Predicated region
  $region36: #{rigidnet120_forward.4} parent=0 // pred_check
    _
  $region37: #{rigidnet120_forward.4} parent=0 // pred_check_branch
    %652 = sbr.rel (0) target = $region39
  $region38: #{rigidnet120_forward.4} parent=0 // pred_region
    _
  $region39: #{rigidnet120_forward.4} parent=0 // pred_fallthru
    _
  // Predicated region
  $region40: #{rigidnet120_forward.4} parent=0 // pred_check
    _
  $region41: #{rigidnet120_forward.4} parent=0 // pred_check_branch
    %654 = sbr.rel (0) target = $region43
  $region42: #{rigidnet120_forward.4} parent=0 // pred_region
    _
  $region43: #{rigidnet120_forward.4} parent=0 // pred_fallthru
    _
  // Predicated region
  $region44: #{rigidnet120_forward.4} parent=0 // pred_check
    _
  $region45: #{rigidnet120_forward.4} parent=0 // pred_check_branch
    %656 = sbr.rel (0) target = $region47
  $region46: #{rigidnet120_forward.4} parent=0 // pred_region
    _
  $region47: #{rigidnet120_forward.4} parent=0 // pred_fallthru
    _

// kernel: rigidnet120_forward.3
$region0: #{rigidnet120_forward.3}
  #allocation0 [shape = 'u32[]', space=smem, size = 0x4, offset = 0x4, fixed_abs, tag = 'smem constant byte address 0x4 - core index']
  #allocation1 [shape = 'u32[144,128]{1,0:T(1,128)}', space=vmem, size = 0x12000, scoped, tag = 'internal scratch']
  %s0 = inlined_call_operand.vmem [shape: bf16[24,256], index: 0, kind: input, shape index: {}]
  %s1 = inlined_call_operand.vmem [shape: bf16[24,256], index: 1, kind: input, shape index: {}]
  %s2 = inlined_call_operand.vmem [shape: bf16[256,128], index: 2, kind: input, shape index: {}]
  %s3 = inlined_call_operand.hbm [shape: f32[1,128], index: 3, kind: input, shape index: {}]
  %s4 = inlined_call_operand.vmem [shape: bf16[128,64], index: 4, kind: input, shape index: {}]
  %s5 = inlined_call_operand.hbm [shape: f32[1,64], index: 5, kind: input, shape index: {}]
  %s6 = inlined_call_operand.vmem [shape: f32[24,64], index: 6, kind: output, shape index: {}]
  %s7 = sld [smem:[#allocation0]]
  $region42: #{rigidnet120_forward.3} parent=0
    _
  %s9 = ssub.s32 1, %s7
  %s10 = scalar_select 0, %s9, %s7
  $region1: #{rigidnet120_forward.3} parent=0
    #allocation2 [shape = 'u8[512]{0}', space=vmem, size = 0x400, scoped, tag = 'input window, operand 3, single buffered']
    #allocation3 [shape = 's32[1]{0}', space=sflag, size = 0x4, scoped, tag = 'scoped memory for rigidnet120_forward.3']
    #allocation4 [shape = 'u8[512]{0}', space=vmem, size = 0x400, scoped, tag = 'input window, operand 5, single buffered']
    #allocation5 [shape = 's32[1]{0}', space=sflag, size = 0x4, scoped, tag = 'scoped memory for rigidnet120_forward.3']
    %11 = vsyncpa [#allocation3], 0
    %12 = vsyncpa [#allocation5], 0
    // Predicated region
    $region2: #{rigidnet120_forward.3} parent=1 // pred_check
      _
    $region3: #{rigidnet120_forward.3} parent=1 // pred_check_branch
      %14 = sbr.rel (0) target = $region5
    $region4: #{rigidnet120_forward.3} parent=1 // pred_region
      _
    $region5: #{rigidnet120_forward.3} parent=1 // pred_fallthru
      _
    // Predicated region
    $region6: #{rigidnet120_forward.3} parent=1 // pred_check
      _
    $region7: #{rigidnet120_forward.3} parent=1 // pred_check_branch
      %16 = sbr.rel (0) target = $region9
    $region8: #{rigidnet120_forward.3} parent=1 // pred_region
      _
    $region9: #{rigidnet120_forward.3} parent=1 // pred_fallthru
      _
    // Predicated region
    $region10: #{rigidnet120_forward.3} parent=1 // pred_check
      _
    $region11: #{rigidnet120_forward.3} parent=1 // pred_check_branch
      %18 = sbr.rel (0) target = $region13
    $region12: #{rigidnet120_forward.3} parent=1 // pred_region
      _
    $region13: #{rigidnet120_forward.3} parent=1 // pred_fallthru
      _
    // Predicated region
    $region14: #{rigidnet120_forward.3} parent=1 // pred_check
      _
    $region15: #{rigidnet120_forward.3} parent=1 // pred_check_branch
      %20 = sbr.rel (0) target = $region17
    $region16: #{rigidnet120_forward.3} parent=1 // pred_region
      %s22 = ssub.s32 16, 16
      %23 = vsyncadd [#allocation3], %s22
      %s25 = sshll.u32 [#allocation2], 4
      %s26 = int_to_ptr.vmem [resolvable:$true] %s25
      %28 = dma.hbm_to_vmem [thread:$0]  %s3, 16, %s26, [#allocation3]
    $region17: #{rigidnet120_forward.3} parent=1 // pred_fallthru
      _
    // Predicated region
    $region18: #{rigidnet120_forward.3} parent=1 // pred_check
      _
    $region19: #{rigidnet120_forward.3} parent=1 // pred_check_branch
      %30 = sbr.rel (0) target = $region21
    $region20: #{rigidnet120_forward.3} parent=1 // pred_region
      _
    $region21: #{rigidnet120_forward.3} parent=1 // pred_fallthru
      _
    // Predicated region
    $region22: #{rigidnet120_forward.3} parent=1 // pred_check
      _
    $region23: #{rigidnet120_forward.3} parent=1 // pred_check_branch
      %32 = sbr.rel (0) target = $region25
    $region24: #{rigidnet120_forward.3} parent=1 // pred_region
      %s34 = ssub.s32 16, 16
      %35 = vsyncadd [#allocation5], %s34
      %s37 = sshll.u32 [#allocation4], 4
      %s38 = int_to_ptr.vmem [resolvable:$true] %s37
      %40 = dma.hbm_to_vmem [thread:$0]  %s5, 16, %s38, [#allocation5]
    $region25: #{rigidnet120_forward.3} parent=1 // pred_fallthru
      _
    // Predicated region
    $region26: #{rigidnet120_forward.3} parent=1 // pred_check
      _
    $region27: #{rigidnet120_forward.3} parent=1 // pred_check_branch
      %42 = sbr.rel (0) target = $region29
    $region28: #{rigidnet120_forward.3} parent=1 // pred_region
      %43 = dma.done [#allocation3], 16
    $region29: #{rigidnet120_forward.3} parent=1 // pred_fallthru
      _
    // Predicated region
    $region30: #{rigidnet120_forward.3} parent=1 // pred_check
      _
    $region31: #{rigidnet120_forward.3} parent=1 // pred_check_branch
      %45 = sbr.rel (0) target = $region33
    $region32: #{rigidnet120_forward.3} parent=1 // pred_region
      %46 = dma.done [#allocation5], 16
    $region33: #{rigidnet120_forward.3} parent=1 // pred_fallthru
      _
    %v48 = vld [vmem:[%s2] sm:$0xf]
    %v49 = vld [vmem:[%s2 + $0x4] sm:$0xf]
    %v50 = vld [vmem:[%s2 + $0x8] sm:$0xf]
    %v51 = vld [vmem:[%s2 + $0xc] sm:$0xf]
    %v52 = vld [vmem:[%s2 + $0x10] sm:$0xf]
    %v53 = vld [vmem:[%s2 + $0x14] sm:$0xf]
    %v54 = vld [vmem:[%s2 + $0x18] sm:$0xf]
    %v55 = vld [vmem:[%s2 + $0x1c] sm:$0xf]
    %v56 = vld [vmem:[%s2 + $0x20] sm:$0xf]
    %v57 = vld [vmem:[%s2 + $0x24] sm:$0xf]
    %v58 = vld [vmem:[%s2 + $0x28] sm:$0xf]
    %v59 = vld [vmem:[%s2 + $0x2c] sm:$0xf]
    %v60 = vld [vmem:[%s2 + $0x30] sm:$0xf]
    %v61 = vld [vmem:[%s2 + $0x34] sm:$0xf]
    %v62 = vld [vmem:[%s2 + $0x38] sm:$0xf]
    %v63 = vld [vmem:[%s2 + $0x3c] sm:$0xf]
    %v64 = vld [vmem:[%s2 + $0x40] sm:$0xf]
    %v65 = vld [vmem:[%s2 + $0x44] sm:$0xf]
    %v66 = vld [vmem:[%s2 + $0x48] sm:$0xf]
    %v67 = vld [vmem:[%s2 + $0x4c] sm:$0xf]
    %v68 = vld [vmem:[%s2 + $0x50] sm:$0xf]
    %v69 = vld [vmem:[%s2 + $0x54] sm:$0xf]
    %v70 = vld [vmem:[%s2 + $0x58] sm:$0xf]
    %v71 = vld [vmem:[%s2 + $0x5c] sm:$0xf]
    %v72 = vld [vmem:[%s2 + $0x60] sm:$0xf]
    %v73 = vld [vmem:[%s2 + $0x64] sm:$0xf]
    %v74 = vld [vmem:[%s2 + $0x68] sm:$0xf]
    %v75 = vld [vmem:[%s2 + $0x6c] sm:$0xf]
    %v76 = vld [vmem:[%s2 + $0x70] sm:$0xf]
    %v77 = vld [vmem:[%s2 + $0x74] sm:$0xf]
    %v78 = vld [vmem:[%s2 + $0x78] sm:$0xf]
    %v79 = vld [vmem:[%s2 + $0x7c] sm:$0xf]
    %v80 = vld [vmem:[%s4] sm:$0xf]
    %v81 = vld [vmem:[%s4 + $0x4] sm:$0xf]
    %v82 = vld [vmem:[%s4 + $0x8] sm:$0xf]
    %v83 = vld [vmem:[%s4 + $0xc] sm:$0xf]
    %v84 = vld [vmem:[%s4 + $0x10] sm:$0xf]
    %v85 = vld [vmem:[%s4 + $0x14] sm:$0xf]
    %v86 = vld [vmem:[%s4 + $0x18] sm:$0xf]
    %v87 = vld [vmem:[%s4 + $0x1c] sm:$0xf]
    %v88 = vld [vmem:[%s4 + $0x20] sm:$0xf]
    %v89 = vld [vmem:[%s4 + $0x24] sm:$0xf]
    %v90 = vld [vmem:[%s4 + $0x28] sm:$0xf]
    %v91 = vld [vmem:[%s4 + $0x2c] sm:$0xf]
    %v92 = vld [vmem:[%s4 + $0x30] sm:$0xf]
    %v93 = vld [vmem:[%s4 + $0x34] sm:$0xf]
    %v94 = vld [vmem:[%s4 + $0x38] sm:$0xf]
    %v95 = vld [vmem:[%s4 + $0x3c] sm:$0xf]
    %v96 = vld [vmem:[#allocation2] sm:$0x1]
    %v97 = vld [vmem:[#allocation4] sm:$0x1]
    %v98 = vld [vmem:[%s0] sm:$0xff]
    %v99 = vld [vmem:[%s0 + $0x8] sm:$0xff]
    %v100 = vld [vmem:[%s0 + $0x10] sm:$0xff]
    %v102 = vlaneseq
    %v103 = vshrl.u32 %v102, 7
    %v104 = vsub.s32 0, %v103
    %v105 = vrot.slane %v96, %v104
    %v110 = vunpack.c.l.b16 %v98
    %v111 = vunpack.c.h.b16 %v98
    %v112 = vunpack.c.l.b16 %v99
    %v113 = vunpack.c.h.b16 %v99
    %v114 = vunpack.c.l.b16 %v100
    %v115 = vunpack.c.h.b16 %v100
    %v116 = vpack.c.b16 %v112, %v110
    %v117 = vpack.c.b16 %v113, %v111
    %v118 = vpack.c.b16 %v114, %v114
    %v119 = vpack.c.b16 %v115, %v115
    %v156 = vunpack.c.l.b16 %v48
    %v157 = vunpack.c.l.b16 %v49
    %v158 = vunpack.c.l.b16 %v50
    %v159 = vunpack.c.l.b16 %v51
    %v160 = vunpack.c.l.b16 %v52
    %v161 = vunpack.c.l.b16 %v53
    %v162 = vunpack.c.l.b16 %v54
    %v163 = vunpack.c.l.b16 %v55
    %v164 = vunpack.c.l.b16 %v56
    %v165 = vunpack.c.l.b16 %v57
    %v166 = vunpack.c.l.b16 %v58
    %v167 = vunpack.c.l.b16 %v59
    %v168 = vunpack.c.l.b16 %v60
    %v169 = vunpack.c.l.b16 %v61
    %v170 = vunpack.c.l.b16 %v62
    %v171 = vunpack.c.l.b16 %v63
    %v172 = vunpack.c.l.b16 %v64
    %v173 = vunpack.c.l.b16 %v65
    %v174 = vunpack.c.l.b16 %v66
    %v175 = vunpack.c.l.b16 %v67
    %v176 = vunpack.c.l.b16 %v68
    %v177 = vunpack.c.l.b16 %v69
    %v178 = vunpack.c.l.b16 %v70
    %v179 = vunpack.c.l.b16 %v71
    %v180 = vunpack.c.l.b16 %v72
    %v181 = vunpack.c.l.b16 %v73
    %v182 = vunpack.c.l.b16 %v74
    %v183 = vunpack.c.l.b16 %v75
    %v184 = vunpack.c.l.b16 %v76
    %v185 = vunpack.c.l.b16 %v77
    %v186 = vunpack.c.l.b16 %v78
    %v187 = vunpack.c.l.b16 %v79
    %v188 = vpack.c.b16 %v157, %v156
    %v189 = vpack.c.b16 %v159, %v158
    %v190 = vpack.c.b16 %v161, %v160
    %v191 = vpack.c.b16 %v163, %v162
    %v192 = vpack.c.b16 %v165, %v164
    %v193 = vpack.c.b16 %v167, %v166
    %v194 = vpack.c.b16 %v169, %v168
    %v195 = vpack.c.b16 %v171, %v170
    %v196 = vpack.c.b16 %v173, %v172
    %v197 = vpack.c.b16 %v175, %v174
    %v198 = vpack.c.b16 %v177, %v176
    %v199 = vpack.c.b16 %v179, %v178
    %v200 = vpack.c.b16 %v181, %v180
    %v201 = vpack.c.b16 %v183, %v182
    %v202 = vpack.c.b16 %v185, %v184
    %v203 = vpack.c.b16 %v187, %v186
    %220 = vmatprep.subr.bf16.mxu0 0
    %221 = vmatpush1.bf16.msra.mxu0 %v188
    %222 = vmatprep.subr.bf16.mxu0 0
    %223 = vmatpush1.bf16.msra.mxu0 %v189
    %224 = vmatprep.subr.bf16.mxu0 0
    %225 = vmatpush1.bf16.msra.mxu0 %v190
    %226 = vmatprep.subr.bf16.mxu0 0
    %227 = vmatpush1.bf16.msra.mxu0 %v191
    %228 = vmatprep.subr.bf16.mxu0 0
    %229 = vmatpush1.bf16.msra.mxu0 %v192
    %230 = vmatprep.subr.bf16.mxu0 0
    %231 = vmatpush1.bf16.msra.mxu0 %v193
    %232 = vmatprep.subr.bf16.mxu0 0
    %233 = vmatpush1.bf16.msra.mxu0 %v194
    %234 = vmatprep.subr.bf16.mxu0 0
    %235 = vmatpush1.bf16.msra.mxu0 %v195
    %236 = vmatprep.subr.bf16.mxu0 0
    %237 = vmatpush1.bf16.msra.mxu0 %v196
    %238 = vmatprep.subr.bf16.mxu0 0
    %239 = vmatpush1.bf16.msra.mxu0 %v197
    %240 = vmatprep.subr.bf16.mxu0 0
    %241 = vmatpush1.bf16.msra.mxu0 %v198
    %242 = vmatprep.subr.bf16.mxu0 0
    %243 = vmatpush1.bf16.msra.mxu0 %v199
    %244 = vmatprep.subr.bf16.mxu0 0
    %245 = vmatpush1.bf16.msra.mxu0 %v200
    %246 = vmatprep.subr.bf16.mxu0 0
    %247 = vmatpush1.bf16.msra.mxu0 %v201
    %248 = vmatprep.subr.bf16.mxu0 0
    %249 = vmatpush1.bf16.msra.mxu0 %v202
    %250 = vmatprep.subr.bf16.mxu0 0
    %251 = vmatpush1.bf16.msra.mxu0 %v203
    %252 = vmatprep.mubr.bf16.mxu0 %v117
    %253 = vmatmul.mubr.bf16.gmra.mrb[0].mxu0 %v116
    %v254 = vpop.f32.mrb[0].mxu0
    %v255 = vadd.f32 %v105, %v254
    %v256 = vpop.f32.mrb[0].mxu0
    %v257 = vpop.f32.mrb[0].mxu0
    %v258 = vadd.f32 %v105, %v257
    %v259 = vpop.f32.mrb[0].mxu0
    %260 = vmatprep.mubr.bf16.mxu0 %v119
    %261 = vmatmul.mubr.bf16.gmra.mrb[0].mxu0 %v118
    %v262 = vpop.f32.mrb[0].mxu0
    %v263 = vadd.f32 %v105, %v262
    %v264 = vpop.f32.mrb[0].mxu0
    %v265 = vpop.f32.mrb[0].mxu0
    %v266 = vpop.f32.mrb[0].mxu0
    %267 = vdwg.mxu0
    %v268 = vmax.f32 %v255, 0.0
    %v269 = vmax.f32 %v258, 0.0
    %v270 = vmax.f32 %v263, 0.0
    %v271 = vpack.c.bf16 %v269, %v268
    %v272 = vpack.c.bf16 %v270, %v270
    %v274 = vlaneseq
    %v275 = vshrl.u32 %v274, 7
    %v276 = vsub.s32 0, %v275
    %v277 = vrot.slane %v97, %v276
    %v295 = vunpack.c.l.b16 %v80
    %v296 = vunpack.c.l.b16 %v81
    %v297 = vunpack.c.l.b16 %v82
    %v298 = vunpack.c.l.b16 %v83
    %v299 = vunpack.c.l.b16 %v84
    %v300 = vunpack.c.l.b16 %v85
    %v301 = vunpack.c.l.b16 %v86
    %v302 = vunpack.c.l.b16 %v87
    %v303 = vunpack.c.l.b16 %v88
    %v304 = vunpack.c.l.b16 %v89
    %v305 = vunpack.c.l.b16 %v90
    %v306 = vunpack.c.l.b16 %v91
    %v307 = vunpack.c.l.b16 %v92
    %v308 = vunpack.c.l.b16 %v93
    %v309 = vunpack.c.l.b16 %v94
    %v310 = vunpack.c.l.b16 %v95
    %v311 = vpack.c.b16 %v296, %v295
    %v312 = vpack.c.b16 %v298, %v297
    %v313 = vpack.c.b16 %v300, %v299
    %v314 = vpack.c.b16 %v302, %v301
    %v315 = vpack.c.b16 %v304, %v303
    %v316 = vpack.c.b16 %v306, %v305
    %v317 = vpack.c.b16 %v308, %v307
    %v318 = vpack.c.b16 %v310, %v309
    %327 = vmatprep.subr.bf16.mxu0 0
    %328 = vmatpush1.bf16.msra.mxu0 %v311
    %329 = vmatprep.subr.bf16.mxu0 0
    %330 = vmatpush1.bf16.msra.mxu0 %v312
    %331 = vmatprep.subr.bf16.mxu0 0
    %332 = vmatpush1.bf16.msra.mxu0 %v313
    %333 = vmatprep.subr.bf16.mxu0 0
    %334 = vmatpush1.bf16.msra.mxu0 %v314
    %335 = vmatprep.subr.bf16.mxu0 0
    %336 = vmatpush1.bf16.msra.mxu0 %v315
    %337 = vmatprep.subr.bf16.mxu0 0
    %338 = vmatpush1.bf16.msra.mxu0 %v316
    %339 = vmatprep.subr.bf16.mxu0 0
    %340 = vmatpush1.bf16.msra.mxu0 %v317
    %341 = vmatprep.subr.bf16.mxu0 0
    %342 = vmatpush1.bf16.msra.mxu0 %v318
    %343 = vmatprep.subr.bf16.mxu0 0
    %344 = vmatpush1.bf16.msra.mxu0 0
    %345 = vmatprep.subr.bf16.mxu0 0
    %346 = vmatpush1.bf16.msra.mxu0 0
    %347 = vmatprep.subr.bf16.mxu0 0
    %348 = vmatpush1.bf16.msra.mxu0 0
    %349 = vmatprep.subr.bf16.mxu0 0
    %350 = vmatpush1.bf16.msra.mxu0 0
    %351 = vmatprep.subr.bf16.mxu0 0
    %352 = vmatpush1.bf16.msra.mxu0 0
    %353 = vmatprep.subr.bf16.mxu0 0
    %354 = vmatpush1.bf16.msra.mxu0 0
    %355 = vmatprep.subr.bf16.mxu0 0
    %356 = vmatpush1.bf16.msra.mxu0 0
    %357 = vmatprep.subr.bf16.mxu0 0
    %358 = vmatpush1.bf16.msra.mxu0 0
    %359 = vmatprep.mubr.bf16.mxu0 0
    %360 = vmatmul.mubr.bf16.gmra.mrb[0].mxu0 %v271
    %v361 = vpop.f32.mrb[0].mxu0
    %v362 = vadd.f32 %v277, %v361
    %v363 = vpop.f32.mrb[0].mxu0
    %v364 = vpop.f32.mrb[0].mxu0
    %v365 = vadd.f32 %v277, %v364
    %v366 = vpop.f32.mrb[0].mxu0
    %367 = vmatprep.mubr.bf16.mxu0 0
    %368 = vmatmul.mubr.bf16.gmra.mrb[0].mxu0 %v272
    %v369 = vpop.f32.mrb[0].mxu0
    %v370 = vadd.f32 %v277, %v369
    %v371 = vpop.f32.mrb[0].mxu0
    %v372 = vpop.f32.mrb[0].mxu0
    %v373 = vpop.f32.mrb[0].mxu0
    %374 = vdwg.mxu0
    %v375 = vmax.f32 %v362, 0.0
    %v376 = vmax.f32 %v365, 0.0
    %v377 = vmax.f32 %v370, 0.0
    %v378 = vld [vmem:[%s1] sm:$0xff]
    %v379 = vld [vmem:[%s1 + $0x8] sm:$0xff]
    %v380 = vld [vmem:[%s1 + $0x10] sm:$0xff]
    %v384 = vunpack.c.l.b16 %v378
    %v385 = vunpack.c.h.b16 %v378
    %v386 = vunpack.c.l.b16 %v379
    %v387 = vunpack.c.h.b16 %v379
    %v388 = vunpack.c.l.b16 %v380
    %v389 = vunpack.c.h.b16 %v380
    %v390 = vpack.c.b16 %v386, %v384
    %v391 = vpack.c.b16 %v387, %v385
    %v392 = vpack.c.b16 %v388, %v388
    %v393 = vpack.c.b16 %v389, %v389
    %398 = vmatprep.subr.bf16.mxu0 0
    %399 = vmatpush1.bf16.msra.mxu0 %v188
    %400 = vmatprep.subr.bf16.mxu0 0
    %401 = vmatpush1.bf16.msra.mxu0 %v189
    %402 = vmatprep.subr.bf16.mxu0 0
    %403 = vmatpush1.bf16.msra.mxu0 %v190
    %404 = vmatprep.subr.bf16.mxu0 0
    %405 = vmatpush1.bf16.msra.mxu0 %v191
    %406 = vmatprep.subr.bf16.mxu0 0
    %407 = vmatpush1.bf16.msra.mxu0 %v192
    %408 = vmatprep.subr.bf16.mxu0 0
    %409 = vmatpush1.bf16.msra.mxu0 %v193
    %410 = vmatprep.subr.bf16.mxu0 0
    %411 = vmatpush1.bf16.msra.mxu0 %v194
    %412 = vmatprep.subr.bf16.mxu0 0
    %413 = vmatpush1.bf16.msra.mxu0 %v195
    %414 = vmatprep.subr.bf16.mxu0 0
    %415 = vmatpush1.bf16.msra.mxu0 %v196
    %416 = vmatprep.subr.bf16.mxu0 0
    %417 = vmatpush1.bf16.msra.mxu0 %v197
    %418 = vmatprep.subr.bf16.mxu0 0
    %419 = vmatpush1.bf16.msra.mxu0 %v198
    %420 = vmatprep.subr.bf16.mxu0 0
    %421 = vmatpush1.bf16.msra.mxu0 %v199
    %422 = vmatprep.subr.bf16.mxu0 0
    %423 = vmatpush1.bf16.msra.mxu0 %v200
    %424 = vmatprep.subr.bf16.mxu0 0
    %425 = vmatpush1.bf16.msra.mxu0 %v201
    %426 = vmatprep.subr.bf16.mxu0 0
    %427 = vmatpush1.bf16.msra.mxu0 %v202
    %428 = vmatprep.subr.bf16.mxu0 0
    %429 = vmatpush1.bf16.msra.mxu0 %v203
    %430 = vmatprep.mubr.bf16.mxu0 %v391
    %431 = vmatmul.mubr.bf16.gmra.mrb[0].mxu0 %v390
    %v432 = vpop.f32.mrb[0].mxu0
    %v433 = vadd.f32 %v105, %v432
    %v434 = vpop.f32.mrb[0].mxu0
    %v435 = vpop.f32.mrb[0].mxu0
    %v436 = vadd.f32 %v105, %v435
    %v437 = vpop.f32.mrb[0].mxu0
    %438 = vmatprep.mubr.bf16.mxu0 %v393
    %439 = vmatmul.mubr.bf16.gmra.mrb[0].mxu0 %v392
    %v440 = vpop.f32.mrb[0].mxu0
    %v441 = vadd.f32 %v105, %v440
    %v442 = vpop.f32.mrb[0].mxu0
    %v443 = vpop.f32.mrb[0].mxu0
    %v444 = vpop.f32.mrb[0].mxu0
    %445 = vdwg.mxu0
    %v446 = vmax.f32 %v433, 0.0
    %v447 = vmax.f32 %v436, 0.0
    %v448 = vmax.f32 %v441, 0.0
    %v449 = vpack.c.bf16 %v447, %v446
    %v450 = vpack.c.bf16 %v448, %v448
    %451 = vmatprep.subr.bf16.mxu0 0
    %452 = vmatpush1.bf16.msra.mxu0 %v311
    %453 = vmatprep.subr.bf16.mxu0 0
    %454 = vmatpush1.bf16.msra.mxu0 %v312
    %455 = vmatprep.subr.bf16.mxu0 0
    %456 = vmatpush1.bf16.msra.mxu0 %v313
    %457 = vmatprep.subr.bf16.mxu0 0
    %458 = vmatpush1.bf16.msra.mxu0 %v314
    %459 = vmatprep.subr.bf16.mxu0 0
    %460 = vmatpush1.bf16.msra.mxu0 %v315
    %461 = vmatprep.subr.bf16.mxu0 0
    %462 = vmatpush1.bf16.msra.mxu0 %v316
    %463 = vmatprep.subr.bf16.mxu0 0
    %464 = vmatpush1.bf16.msra.mxu0 %v317
    %465 = vmatprep.subr.bf16.mxu0 0
    %466 = vmatpush1.bf16.msra.mxu0 %v318
    %467 = vmatprep.subr.bf16.mxu0 0
    %468 = vmatpush1.bf16.msra.mxu0 0
    %469 = vmatprep.subr.bf16.mxu0 0
    %470 = vmatpush1.bf16.msra.mxu0 0
    %471 = vmatprep.subr.bf16.mxu0 0
    %472 = vmatpush1.bf16.msra.mxu0 0
    %473 = vmatprep.subr.bf16.mxu0 0
    %474 = vmatpush1.bf16.msra.mxu0 0
    %475 = vmatprep.subr.bf16.mxu0 0
    %476 = vmatpush1.bf16.msra.mxu0 0
    %477 = vmatprep.subr.bf16.mxu0 0
    %478 = vmatpush1.bf16.msra.mxu0 0
    %479 = vmatprep.subr.bf16.mxu0 0
    %480 = vmatpush1.bf16.msra.mxu0 0
    %481 = vmatprep.subr.bf16.mxu0 0
    %482 = vmatpush1.bf16.msra.mxu0 0
    %483 = vmatprep.mubr.bf16.mxu0 0
    %484 = vmatmul.mubr.bf16.gmra.mrb[0].mxu0 %v449
    %v485 = vpop.f32.mrb[0].mxu0
    %v486 = vadd.f32 %v277, %v485
    %v487 = vpop.f32.mrb[0].mxu0
    %v488 = vpop.f32.mrb[0].mxu0
    %v489 = vadd.f32 %v277, %v488
    %v490 = vpop.f32.mrb[0].mxu0
    %491 = vmatprep.mubr.bf16.mxu0 0
    %492 = vmatmul.mubr.bf16.gmra.mrb[0].mxu0 %v450
    %v493 = vpop.f32.mrb[0].mxu0
    %v494 = vadd.f32 %v277, %v493
    %v495 = vpop.f32.mrb[0].mxu0
    %v496 = vpop.f32.mrb[0].mxu0
    %v497 = vpop.f32.mrb[0].mxu0
    %498 = vdwg.mxu0
    %v499 = vmax.f32 %v486, 0.0
    %v500 = vmax.f32 %v489, 0.0
    %v501 = vmax.f32 %v494, 0.0
    %v502 = vmax.f32 %v375, %v499
    %v503 = vmax.f32 %v376, %v500
    %v504 = vmax.f32 %v377, %v501
    %vm505 = vcmask 523264
    %506 = vst.msk [vmem:[%s6] sm:$0xff] %vm505, %v502
    %507 = vst.msk [vmem:[%s6 + $0x8] sm:$0xff] %vm505, %v503
    %508 = vst.msk [vmem:[%s6 + $0x10] sm:$0xff] %vm505, %v504
    // Predicated region
    $region34: #{rigidnet120_forward.3} parent=1 // pred_check
      _
    $region35: #{rigidnet120_forward.3} parent=1 // pred_check_branch
      %510 = sbr.rel (0) target = $region37
    $region36: #{rigidnet120_forward.3} parent=1 // pred_region
      _
    $region37: #{rigidnet120_forward.3} parent=1 // pred_fallthru
      _
    // Predicated region
    $region38: #{rigidnet120_forward.3} parent=1 // pred_check
      _
    $region39: #{rigidnet120_forward.3} parent=1 // pred_check_branch
      %512 = sbr.rel (0) target = $region41
    $region40: #{rigidnet120_forward.3} parent=1 // pred_region
      _
    $region41: #{rigidnet120_forward.3} parent=1 // pred_fallthru
      _
    %513 = vsyncpa [#allocation3], 1
    %514 = vsyncpa [#allocation5], 1

// kernel: rigidnet120_forward.5
$region0: #{rigidnet120_forward.5}
  #allocation0 [shape = 'u32[]', space=smem, size = 0x4, offset = 0x4, fixed_abs, tag = 'smem constant byte address 0x4 - core index']
  #allocation1 [shape = 'u32[144,128]{1,0:T(1,128)}', space=vmem, size = 0x12000, scoped, tag = 'internal scratch']
  %s0 = inlined_call_operand.vmem [shape: bf16[2,768], index: 0, kind: input, shape index: {}]
  %s1 = inlined_call_operand.vmem [shape: bf16[2,768], index: 1, kind: input, shape index: {}]
  %s2 = inlined_call_operand.vmem [shape: bf16[768,512], index: 2, kind: input, shape index: {}]
  %s3 = inlined_call_operand.vmem [shape: bf16[768,512], index: 3, kind: input, shape index: {}]
  %s4 = inlined_call_operand.vmem [shape: f32[1,512], index: 4, kind: input, shape index: {}]
  %s5 = inlined_call_operand.vmem [shape: bf16[512,128], index: 5, kind: input, shape index: {}]
  %s6 = inlined_call_operand.vmem [shape: f32[1,128], index: 6, kind: input, shape index: {}]
  %s7 = inlined_call_operand.hbm [shape: f32[2,128], index: 7, kind: output, shape index: {}]
  %s8 = sld [smem:[#allocation0]]
  $region38: #{rigidnet120_forward.5} parent=0
    _
  %s10 = ssub.s32 1, %s8
  %s11 = scalar_select 0, %s10, %s8
  $region1: #{rigidnet120_forward.5} parent=0
    #allocation2 [shape = 'u8[1024]{0}', space=vmem, size = 0x400, scoped, tag = 'output window, operand 0, single buffered']
    #allocation3 [shape = 's32[1]{0}', space=sflag, size = 0x4, scoped, tag = 'scoped memory for rigidnet120_forward.5']
    %12 = vsyncpa [#allocation3], 0
    // Predicated region
    $region2: #{rigidnet120_forward.5} parent=1 // pred_check
      _
    $region3: #{rigidnet120_forward.5} parent=1 // pred_check_branch
      %14 = sbr.rel (0) target = $region5
    $region4: #{rigidnet120_forward.5} parent=1 // pred_region
      _
    $region5: #{rigidnet120_forward.5} parent=1 // pred_fallthru
      _
    // Predicated region
    $region6: #{rigidnet120_forward.5} parent=1 // pred_check
      _
    $region7: #{rigidnet120_forward.5} parent=1 // pred_check_branch
      %16 = sbr.rel (0) target = $region9
    $region8: #{rigidnet120_forward.5} parent=1 // pred_region
      _
    $region9: #{rigidnet120_forward.5} parent=1 // pred_fallthru
      _
    // Predicated region
    $region10: #{rigidnet120_forward.5} parent=1 // pred_check
      _
    $region11: #{rigidnet120_forward.5} parent=1 // pred_check_branch
      %18 = sbr.rel (0) target = $region13
    $region12: #{rigidnet120_forward.5} parent=1 // pred_region
      _
    $region13: #{rigidnet120_forward.5} parent=1 // pred_fallthru
      _
    // Predicated region
    $region14: #{rigidnet120_forward.5} parent=1 // pred_check
      _
    $region15: #{rigidnet120_forward.5} parent=1 // pred_check_branch
      %20 = sbr.rel (0) target = $region17
    $region16: #{rigidnet120_forward.5} parent=1 // pred_region
      _
    $region17: #{rigidnet120_forward.5} parent=1 // pred_fallthru
      _
    // Predicated region
    $region18: #{rigidnet120_forward.5} parent=1 // pred_check
      _
    $region19: #{rigidnet120_forward.5} parent=1 // pred_check_branch
      %22 = sbr.rel (0) target = $region21
    $region20: #{rigidnet120_forward.5} parent=1 // pred_region
      _
    $region21: #{rigidnet120_forward.5} parent=1 // pred_fallthru
      _
    // Predicated region
    $region22: #{rigidnet120_forward.5} parent=1 // pred_check
      _
    $region23: #{rigidnet120_forward.5} parent=1 // pred_check_branch
      %24 = sbr.rel (0) target = $region25
    $region24: #{rigidnet120_forward.5} parent=1 // pred_region
      _
    $region25: #{rigidnet120_forward.5} parent=1 // pred_fallthru
      _
    // Predicated region
    $region26: #{rigidnet120_forward.5} parent=1 // pred_check
      _
    $region27: #{rigidnet120_forward.5} parent=1 // pred_check_branch
      %26 = sbr.rel (0) target = $region29
    $region28: #{rigidnet120_forward.5} parent=1 // pred_region
      _
    $region29: #{rigidnet120_forward.5} parent=1 // pred_fallthru
      _
    %v28 = vld [vmem:[%s0] sm:$0x3f]
    %v29 = vld [vmem:[%s2] sm:$0xff]
    %v30 = vld [vmem:[%s2 + $0x8] sm:$0xff]
    %v31 = vld [vmem:[%s2 + $0x10] sm:$0xff]
    %v32 = vld [vmem:[%s2 + $0x18] sm:$0xff]
    %v33 = vld [vmem:[%s2 + $0x20] sm:$0xff]
    %v34 = vld [vmem:[%s2 + $0x28] sm:$0xff]
    %v35 = vld [vmem:[%s2 + $0x30] sm:$0xff]
    %v36 = vld [vmem:[%s2 + $0x38] sm:$0xff]
    %v37 = vld [vmem:[%s2 + $0x40] sm:$0xff]
    %v38 = vld [vmem:[%s2 + $0x48] sm:$0xff]
    %v39 = vld [vmem:[%s2 + $0x50] sm:$0xff]
    %v40 = vld [vmem:[%s2 + $0x58] sm:$0xff]
    %v41 = vld [vmem:[%s2 + $0x60] sm:$0xff]
    %v42 = vld [vmem:[%s2 + $0x68] sm:$0xff]
    %v43 = vld [vmem:[%s2 + $0x70] sm:$0xff]
    %v44 = vld [vmem:[%s2 + $0x78] sm:$0xff]
    %v45 = vld [vmem:[%s2 + $0x80] sm:$0xff]
    %v46 = vld [vmem:[%s2 + $0x88] sm:$0xff]
    %v47 = vld [vmem:[%s2 + $0x90] sm:$0xff]
    %v48 = vld [vmem:[%s2 + $0x98] sm:$0xff]
    %v49 = vld [vmem:[%s2 + $0xa0] sm:$0xff]
    %v50 = vld [vmem:[%s2 + $0xa8] sm:$0xff]
    %v51 = vld [vmem:[%s2 + $0xb0] sm:$0xff]
    %v52 = vld [vmem:[%s2 + $0xb8] sm:$0xff]
    %v53 = vld [vmem:[%s2 + $0xc0] sm:$0xff]
    %v54 = vld [vmem:[%s2 + $0xc8] sm:$0xff]
    %v55 = vld [vmem:[%s2 + $0xd0] sm:$0xff]
    %v56 = vld [vmem:[%s2 + $0xd8] sm:$0xff]
    %v57 = vld [vmem:[%s2 + $0xe0] sm:$0xff]
    %v58 = vld [vmem:[%s2 + $0xe8] sm:$0xff]
    %v59 = vld [vmem:[%s2 + $0xf0] sm:$0xff]
    %v60 = vld [vmem:[%s2 + $0xf8] sm:$0xff]
    %v61 = vld [vmem:[%s2 + $0x100] sm:$0xff]
    %v62 = vld [vmem:[%s2 + $0x108] sm:$0xff]
    %v63 = vld [vmem:[%s2 + $0x110] sm:$0xff]
    %v64 = vld [vmem:[%s2 + $0x118] sm:$0xff]
    %v65 = vld [vmem:[%s2 + $0x120] sm:$0xff]
    %v66 = vld [vmem:[%s2 + $0x128] sm:$0xff]
    %v67 = vld [vmem:[%s2 + $0x130] sm:$0xff]
    %v68 = vld [vmem:[%s2 + $0x138] sm:$0xff]
    %v69 = vld [vmem:[%s2 + $0x140] sm:$0xff]
    %v70 = vld [vmem:[%s2 + $0x148] sm:$0xff]
    %v71 = vld [vmem:[%s2 + $0x150] sm:$0xff]
    %v72 = vld [vmem:[%s2 + $0x158] sm:$0xff]
    %v73 = vld [vmem:[%s2 + $0x160] sm:$0xff]
    %v74 = vld [vmem:[%s2 + $0x168] sm:$0xff]
    %v75 = vld [vmem:[%s2 + $0x170] sm:$0xff]
    %v76 = vld [vmem:[%s2 + $0x178] sm:$0xff]
    %v77 = vld [vmem:[%s2 + $0x180] sm:$0xff]
    %v78 = vld [vmem:[%s2 + $0x188] sm:$0xff]
    %v79 = vld [vmem:[%s2 + $0x190] sm:$0xff]
    %v80 = vld [vmem:[%s2 + $0x198] sm:$0xff]
    %v81 = vld [vmem:[%s2 + $0x1a0] sm:$0xff]
    %v82 = vld [vmem:[%s2 + $0x1a8] sm:$0xff]
    %v83 = vld [vmem:[%s2 + $0x1b0] sm:$0xff]
    %v84 = vld [vmem:[%s2 + $0x1b8] sm:$0xff]
    %v85 = vld [vmem:[%s2 + $0x1c0] sm:$0xff]
    %v86 = vld [vmem:[%s2 + $0x1c8] sm:$0xff]
    %v87 = vld [vmem:[%s2 + $0x1d0] sm:$0xff]
    %v88 = vld [vmem:[%s2 + $0x1d8] sm:$0xff]
    %v89 = vld [vmem:[%s2 + $0x1e0] sm:$0xff]
    %v90 = vld [vmem:[%s2 + $0x1e8] sm:$0xff]
    %v91 = vld [vmem:[%s2 + $0x1f0] sm:$0xff]
    %v92 = vld [vmem:[%s2 + $0x1f8] sm:$0xff]
    %v93 = vld [vmem:[%s2 + $0x200] sm:$0xff]
    %v94 = vld [vmem:[%s2 + $0x208] sm:$0xff]
    %v95 = vld [vmem:[%s2 + $0x210] sm:$0xff]
    %v96 = vld [vmem:[%s2 + $0x218] sm:$0xff]
    %v97 = vld [vmem:[%s2 + $0x220] sm:$0xff]
    %v98 = vld [vmem:[%s2 + $0x228] sm:$0xff]
    %v99 = vld [vmem:[%s2 + $0x230] sm:$0xff]
    %v100 = vld [vmem:[%s2 + $0x238] sm:$0xff]
    %v101 = vld [vmem:[%s2 + $0x240] sm:$0xff]
    %v102 = vld [vmem:[%s2 + $0x248] sm:$0xff]
    %v103 = vld [vmem:[%s2 + $0x250] sm:$0xff]
    %v104 = vld [vmem:[%s2 + $0x258] sm:$0xff]
    %v105 = vld [vmem:[%s2 + $0x260] sm:$0xff]
    %v106 = vld [vmem:[%s2 + $0x268] sm:$0xff]
    %v107 = vld [vmem:[%s2 + $0x270] sm:$0xff]
    %v108 = vld [vmem:[%s2 + $0x278] sm:$0xff]
    %v109 = vld [vmem:[%s2 + $0x280] sm:$0xff]
    %v110 = vld [vmem:[%s2 + $0x288] sm:$0xff]
    %v111 = vld [vmem:[%s2 + $0x290] sm:$0xff]
    %v112 = vld [vmem:[%s2 + $0x298] sm:$0xff]
    %v113 = vld [vmem:[%s2 + $0x2a0] sm:$0xff]
    %v114 = vld [vmem:[%s2 + $0x2a8] sm:$0xff]
    %v115 = vld [vmem:[%s2 + $0x2b0] sm:$0xff]
    %v116 = vld [vmem:[%s2 + $0x2b8] sm:$0xff]
    %v117 = vld [vmem:[%s2 + $0x2c0] sm:$0xff]
    %v118 = vld [vmem:[%s2 + $0x2c8] sm:$0xff]
    %v119 = vld [vmem:[%s2 + $0x2d0] sm:$0xff]
    %v120 = vld [vmem:[%s2 + $0x2d8] sm:$0xff]
    %v121 = vld [vmem:[%s2 + $0x2e0] sm:$0xff]
    %v122 = vld [vmem:[%s2 + $0x2e8] sm:$0xff]
    %v123 = vld [vmem:[%s2 + $0x2f0] sm:$0xff]
    %v124 = vld [vmem:[%s2 + $0x2f8] sm:$0xff]
    %v125 = vld [vmem:[%s2 + $0x300] sm:$0xff]
    %v126 = vld [vmem:[%s2 + $0x308] sm:$0xff]
    %v127 = vld [vmem:[%s2 + $0x310] sm:$0xff]
    %v128 = vld [vmem:[%s2 + $0x318] sm:$0xff]
    %v129 = vld [vmem:[%s2 + $0x320] sm:$0xff]
    %v130 = vld [vmem:[%s2 + $0x328] sm:$0xff]
    %v131 = vld [vmem:[%s2 + $0x330] sm:$0xff]
    %v132 = vld [vmem:[%s2 + $0x338] sm:$0xff]
    %v133 = vld [vmem:[%s2 + $0x340] sm:$0xff]
    %v134 = vld [vmem:[%s2 + $0x348] sm:$0xff]
    %v135 = vld [vmem:[%s2 + $0x350] sm:$0xff]
    %v136 = vld [vmem:[%s2 + $0x358] sm:$0xff]
    %v137 = vld [vmem:[%s2 + $0x360] sm:$0xff]
    %v138 = vld [vmem:[%s2 + $0x368] sm:$0xff]
    %v139 = vld [vmem:[%s2 + $0x370] sm:$0xff]
    %v140 = vld [vmem:[%s2 + $0x378] sm:$0xff]
    %v141 = vld [vmem:[%s2 + $0x380] sm:$0xff]
    %v142 = vld [vmem:[%s2 + $0x388] sm:$0xff]
    %v143 = vld [vmem:[%s2 + $0x390] sm:$0xff]
    %v144 = vld [vmem:[%s2 + $0x398] sm:$0xff]
    %v145 = vld [vmem:[%s2 + $0x3a0] sm:$0xff]
    %v146 = vld [vmem:[%s2 + $0x3a8] sm:$0xff]
    %v147 = vld [vmem:[%s2 + $0x3b0] sm:$0xff]
    %v148 = vld [vmem:[%s2 + $0x3b8] sm:$0xff]
    %v149 = vld [vmem:[%s2 + $0x3c0] sm:$0xff]
    %v150 = vld [vmem:[%s2 + $0x3c8] sm:$0xff]
    %v151 = vld [vmem:[%s2 + $0x3d0] sm:$0xff]
    %v152 = vld [vmem:[%s2 + $0x3d8] sm:$0xff]
    %v153 = vld [vmem:[%s2 + $0x3e0] sm:$0xff]
    %v154 = vld [vmem:[%s2 + $0x3e8] sm:$0xff]
    %v155 = vld [vmem:[%s2 + $0x3f0] sm:$0xff]
    %v156 = vld [vmem:[%s2 + $0x3f8] sm:$0xff]
    %v157 = vld [vmem:[%s2 + $0x400] sm:$0xff]
    %v158 = vld [vmem:[%s2 + $0x408] sm:$0xff]
    %v159 = vld [vmem:[%s2 + $0x410] sm:$0xff]
    %v160 = vld [vmem:[%s2 + $0x418] sm:$0xff]
    %v161 = vld [vmem:[%s2 + $0x420] sm:$0xff]
    %v162 = vld [vmem:[%s2 + $0x428] sm:$0xff]
    %v163 = vld [vmem:[%s2 + $0x430] sm:$0xff]
    %v164 = vld [vmem:[%s2 + $0x438] sm:$0xff]
    %v165 = vld [vmem:[%s2 + $0x440] sm:$0xff]
    %v166 = vld [vmem:[%s2 + $0x448] sm:$0xff]
    %v167 = vld [vmem:[%s2 + $0x450] sm:$0xff]
    %v168 = vld [vmem:[%s2 + $0x458] sm:$0xff]
    %v169 = vld [vmem:[%s2 + $0x460] sm:$0xff]
    %v170 = vld [vmem:[%s2 + $0x468] sm:$0xff]
    %v171 = vld [vmem:[%s2 + $0x470] sm:$0xff]
    %v172 = vld [vmem:[%s2 + $0x478] sm:$0xff]
    %v173 = vld [vmem:[%s2 + $0x480] sm:$0xff]
    %v174 = vld [vmem:[%s2 + $0x488] sm:$0xff]
    %v175 = vld [vmem:[%s2 + $0x490] sm:$0xff]
    %v176 = vld [vmem:[%s2 + $0x498] sm:$0xff]
    %v177 = vld [vmem:[%s2 + $0x4a0] sm:$0xff]
    %v178 = vld [vmem:[%s2 + $0x4a8] sm:$0xff]
    %v179 = vld [vmem:[%s2 + $0x4b0] sm:$0xff]
    %v180 = vld [vmem:[%s2 + $0x4b8] sm:$0xff]
    %v181 = vld [vmem:[%s2 + $0x4c0] sm:$0xff]
    %v182 = vld [vmem:[%s2 + $0x4c8] sm:$0xff]
    %v183 = vld [vmem:[%s2 + $0x4d0] sm:$0xff]
    %v184 = vld [vmem:[%s2 + $0x4d8] sm:$0xff]
    %v185 = vld [vmem:[%s2 + $0x4e0] sm:$0xff]
    %v186 = vld [vmem:[%s2 + $0x4e8] sm:$0xff]
    %v187 = vld [vmem:[%s2 + $0x4f0] sm:$0xff]
    %v188 = vld [vmem:[%s2 + $0x4f8] sm:$0xff]
    %v189 = vld [vmem:[%s2 + $0x500] sm:$0xff]
    %v190 = vld [vmem:[%s2 + $0x508] sm:$0xff]
    %v191 = vld [vmem:[%s2 + $0x510] sm:$0xff]
    %v192 = vld [vmem:[%s2 + $0x518] sm:$0xff]
    %v193 = vld [vmem:[%s2 + $0x520] sm:$0xff]
    %v194 = vld [vmem:[%s2 + $0x528] sm:$0xff]
    %v195 = vld [vmem:[%s2 + $0x530] sm:$0xff]
    %v196 = vld [vmem:[%s2 + $0x538] sm:$0xff]
    %v197 = vld [vmem:[%s2 + $0x540] sm:$0xff]
    %v198 = vld [vmem:[%s2 + $0x548] sm:$0xff]
    %v199 = vld [vmem:[%s2 + $0x550] sm:$0xff]
    %v200 = vld [vmem:[%s2 + $0x558] sm:$0xff]
    %v201 = vld [vmem:[%s2 + $0x560] sm:$0xff]
    %v202 = vld [vmem:[%s2 + $0x568] sm:$0xff]
    %v203 = vld [vmem:[%s2 + $0x570] sm:$0xff]
    %v204 = vld [vmem:[%s2 + $0x578] sm:$0xff]
    %v205 = vld [vmem:[%s2 + $0x580] sm:$0xff]
    %v206 = vld [vmem:[%s2 + $0x588] sm:$0xff]
    %v207 = vld [vmem:[%s2 + $0x590] sm:$0xff]
    %v208 = vld [vmem:[%s2 + $0x598] sm:$0xff]
    %v209 = vld [vmem:[%s2 + $0x5a0] sm:$0xff]
    %v210 = vld [vmem:[%s2 + $0x5a8] sm:$0xff]
    %v211 = vld [vmem:[%s2 + $0x5b0] sm:$0xff]
    %v212 = vld [vmem:[%s2 + $0x5b8] sm:$0xff]
    %v213 = vld [vmem:[%s2 + $0x5c0] sm:$0xff]
    %v214 = vld [vmem:[%s2 + $0x5c8] sm:$0xff]
    %v215 = vld [vmem:[%s2 + $0x5d0] sm:$0xff]
    %v216 = vld [vmem:[%s2 + $0x5d8] sm:$0xff]
    %v217 = vld [vmem:[%s2 + $0x5e0] sm:$0xff]
    %v218 = vld [vmem:[%s2 + $0x5e8] sm:$0xff]
    %v219 = vld [vmem:[%s2 + $0x5f0] sm:$0xff]
    %v220 = vld [vmem:[%s2 + $0x5f8] sm:$0xff]
    %v221 = vld [vmem:[%s1] sm:$0x3f]
    %v222 = vld [vmem:[%s3] sm:$0xff]
    %v223 = vld [vmem:[%s3 + $0x8] sm:$0xff]
    %v224 = vld [vmem:[%s3 + $0x10] sm:$0xff]
    %v225 = vld [vmem:[%s3 + $0x18] sm:$0xff]
    %v226 = vld [vmem:[%s3 + $0x20] sm:$0xff]
    %v227 = vld [vmem:[%s3 + $0x28] sm:$0xff]
    %v228 = vld [vmem:[%s3 + $0x30] sm:$0xff]
    %v229 = vld [vmem:[%s3 + $0x38] sm:$0xff]
    %v230 = vld [vmem:[%s3 + $0x40] sm:$0xff]
    %v231 = vld [vmem:[%s3 + $0x48] sm:$0xff]
    %v232 = vld [vmem:[%s3 + $0x50] sm:$0xff]
    %v233 = vld [vmem:[%s3 + $0x58] sm:$0xff]
    %v234 = vld [vmem:[%s3 + $0x60] sm:$0xff]
    %v235 = vld [vmem:[%s3 + $0x68] sm:$0xff]
    %v236 = vld [vmem:[%s3 + $0x70] sm:$0xff]
    %v237 = vld [vmem:[%s3 + $0x78] sm:$0xff]
    %v238 = vld [vmem:[%s3 + $0x80] sm:$0xff]
    %v239 = vld [vmem:[%s3 + $0x88] sm:$0xff]
    %v240 = vld [vmem:[%s3 + $0x90] sm:$0xff]
    %v241 = vld [vmem:[%s3 + $0x98] sm:$0xff]
    %v242 = vld [vmem:[%s3 + $0xa0] sm:$0xff]
    %v243 = vld [vmem:[%s3 + $0xa8] sm:$0xff]
    %v244 = vld [vmem:[%s3 + $0xb0] sm:$0xff]
    %v245 = vld [vmem:[%s3 + $0xb8] sm:$0xff]
    %v246 = vld [vmem:[%s3 + $0xc0] sm:$0xff]
    %v247 = vld [vmem:[%s3 + $0xc8] sm:$0xff]
    %v248 = vld [vmem:[%s3 + $0xd0] sm:$0xff]
    %v249 = vld [vmem:[%s3 + $0xd8] sm:$0xff]
    %v250 = vld [vmem:[%s3 + $0xe0] sm:$0xff]
    %v251 = vld [vmem:[%s3 + $0xe8] sm:$0xff]
    %v252 = vld [vmem:[%s3 + $0xf0] sm:$0xff]
    %v253 = vld [vmem:[%s3 + $0xf8] sm:$0xff]
    %v254 = vld [vmem:[%s3 + $0x100] sm:$0xff]
    %v255 = vld [vmem:[%s3 + $0x108] sm:$0xff]
    %v256 = vld [vmem:[%s3 + $0x110] sm:$0xff]
    %v257 = vld [vmem:[%s3 + $0x118] sm:$0xff]
    %v258 = vld [vmem:[%s3 + $0x120] sm:$0xff]
    %v259 = vld [vmem:[%s3 + $0x128] sm:$0xff]
    %v260 = vld [vmem:[%s3 + $0x130] sm:$0xff]
    %v261 = vld [vmem:[%s3 + $0x138] sm:$0xff]
    %v262 = vld [vmem:[%s3 + $0x140] sm:$0xff]
    %v263 = vld [vmem:[%s3 + $0x148] sm:$0xff]
    %v264 = vld [vmem:[%s3 + $0x150] sm:$0xff]
    %v265 = vld [vmem:[%s3 + $0x158] sm:$0xff]
    %v266 = vld [vmem:[%s3 + $0x160] sm:$0xff]
    %v267 = vld [vmem:[%s3 + $0x168] sm:$0xff]
    %v268 = vld [vmem:[%s3 + $0x170] sm:$0xff]
    %v269 = vld [vmem:[%s3 + $0x178] sm:$0xff]
    %v270 = vld [vmem:[%s3 + $0x180] sm:$0xff]
    %v271 = vld [vmem:[%s3 + $0x188] sm:$0xff]
    %v272 = vld [vmem:[%s3 + $0x190] sm:$0xff]
    %v273 = vld [vmem:[%s3 + $0x198] sm:$0xff]
    %v274 = vld [vmem:[%s3 + $0x1a0] sm:$0xff]
    %v275 = vld [vmem:[%s3 + $0x1a8] sm:$0xff]
    %v276 = vld [vmem:[%s3 + $0x1b0] sm:$0xff]
    %v277 = vld [vmem:[%s3 + $0x1b8] sm:$0xff]
    %v278 = vld [vmem:[%s3 + $0x1c0] sm:$0xff]
    %v279 = vld [vmem:[%s3 + $0x1c8] sm:$0xff]
    %v280 = vld [vmem:[%s3 + $0x1d0] sm:$0xff]
    %v281 = vld [vmem:[%s3 + $0x1d8] sm:$0xff]
    %v282 = vld [vmem:[%s3 + $0x1e0] sm:$0xff]
    %v283 = vld [vmem:[%s3 + $0x1e8] sm:$0xff]
    %v284 = vld [vmem:[%s3 + $0x1f0] sm:$0xff]
    %v285 = vld [vmem:[%s3 + $0x1f8] sm:$0xff]
    %v286 = vld [vmem:[%s3 + $0x200] sm:$0xff]
    %v287 = vld [vmem:[%s3 + $0x208] sm:$0xff]
    %v288 = vld [vmem:[%s3 + $0x210] sm:$0xff]
    %v289 = vld [vmem:[%s3 + $0x218] sm:$0xff]
    %v290 = vld [vmem:[%s3 + $0x220] sm:$0xff]
    %v291 = vld [vmem:[%s3 + $0x228] sm:$0xff]
    %v292 = vld [vmem:[%s3 + $0x230] sm:$0xff]
    %v293 = vld [vmem:[%s3 + $0x238] sm:$0xff]
    %v294 = vld [vmem:[%s3 + $0x240] sm:$0xff]
    %v295 = vld [vmem:[%s3 + $0x248] sm:$0xff]
    %v296 = vld [vmem:[%s3 + $0x250] sm:$0xff]
    %v297 = vld [vmem:[%s3 + $0x258] sm:$0xff]
    %v298 = vld [vmem:[%s3 + $0x260] sm:$0xff]
    %v299 = vld [vmem:[%s3 + $0x268] sm:$0xff]
    %v300 = vld [vmem:[%s3 + $0x270] sm:$0xff]
    %v301 = vld [vmem:[%s3 + $0x278] sm:$0xff]
    %v302 = vld [vmem:[%s3 + $0x280] sm:$0xff]
    %v303 = vld [vmem:[%s3 + $0x288] sm:$0xff]
    %v304 = vld [vmem:[%s3 + $0x290] sm:$0xff]
    %v305 = vld [vmem:[%s3 + $0x298] sm:$0xff]
    %v306 = vld [vmem:[%s3 + $0x2a0] sm:$0xff]
    %v307 = vld [vmem:[%s3 + $0x2a8] sm:$0xff]
    %v308 = vld [vmem:[%s3 + $0x2b0] sm:$0xff]
    %v309 = vld [vmem:[%s3 + $0x2b8] sm:$0xff]
    %v310 = vld [vmem:[%s3 + $0x2c0] sm:$0xff]
    %v311 = vld [vmem:[%s3 + $0x2c8] sm:$0xff]
    %v312 = vld [vmem:[%s3 + $0x2d0] sm:$0xff]
    %v313 = vld [vmem:[%s3 + $0x2d8] sm:$0xff]
    %v314 = vld [vmem:[%s3 + $0x2e0] sm:$0xff]
    %v315 = vld [vmem:[%s3 + $0x2e8] sm:$0xff]
    %v316 = vld [vmem:[%s3 + $0x2f0] sm:$0xff]
    %v317 = vld [vmem:[%s3 + $0x2f8] sm:$0xff]
    %v318 = vld [vmem:[%s3 + $0x300] sm:$0xff]
    %v319 = vld [vmem:[%s3 + $0x308] sm:$0xff]
    %v320 = vld [vmem:[%s3 + $0x310] sm:$0xff]
    %v321 = vld [vmem:[%s3 + $0x318] sm:$0xff]
    %v322 = vld [vmem:[%s3 + $0x320] sm:$0xff]
    %v323 = vld [vmem:[%s3 + $0x328] sm:$0xff]
    %v324 = vld [vmem:[%s3 + $0x330] sm:$0xff]
    %v325 = vld [vmem:[%s3 + $0x338] sm:$0xff]
    %v326 = vld [vmem:[%s3 + $0x340] sm:$0xff]
    %v327 = vld [vmem:[%s3 + $0x348] sm:$0xff]
    %v328 = vld [vmem:[%s3 + $0x350] sm:$0xff]
    %v329 = vld [vmem:[%s3 + $0x358] sm:$0xff]
    %v330 = vld [vmem:[%s3 + $0x360] sm:$0xff]
    %v331 = vld [vmem:[%s3 + $0x368] sm:$0xff]
    %v332 = vld [vmem:[%s3 + $0x370] sm:$0xff]
    %v333 = vld [vmem:[%s3 + $0x378] sm:$0xff]
    %v334 = vld [vmem:[%s3 + $0x380] sm:$0xff]
    %v335 = vld [vmem:[%s3 + $0x388] sm:$0xff]
    %v336 = vld [vmem:[%s3 + $0x390] sm:$0xff]
    %v337 = vld [vmem:[%s3 + $0x398] sm:$0xff]
    %v338 = vld [vmem:[%s3 + $0x3a0] sm:$0xff]
    %v339 = vld [vmem:[%s3 + $0x3a8] sm:$0xff]
    %v340 = vld [vmem:[%s3 + $0x3b0] sm:$0xff]
    %v341 = vld [vmem:[%s3 + $0x3b8] sm:$0xff]
    %v342 = vld [vmem:[%s3 + $0x3c0] sm:$0xff]
    %v343 = vld [vmem:[%s3 + $0x3c8] sm:$0xff]
    %v344 = vld [vmem:[%s3 + $0x3d0] sm:$0xff]
    %v345 = vld [vmem:[%s3 + $0x3d8] sm:$0xff]
    %v346 = vld [vmem:[%s3 + $0x3e0] sm:$0xff]
    %v347 = vld [vmem:[%s3 + $0x3e8] sm:$0xff]
    %v348 = vld [vmem:[%s3 + $0x3f0] sm:$0xff]
    %v349 = vld [vmem:[%s3 + $0x3f8] sm:$0xff]
    %v350 = vld [vmem:[%s3 + $0x400] sm:$0xff]
    %v351 = vld [vmem:[%s3 + $0x408] sm:$0xff]
    %v352 = vld [vmem:[%s3 + $0x410] sm:$0xff]
    %v353 = vld [vmem:[%s3 + $0x418] sm:$0xff]
    %v354 = vld [vmem:[%s3 + $0x420] sm:$0xff]
    %v355 = vld [vmem:[%s3 + $0x428] sm:$0xff]
    %v356 = vld [vmem:[%s3 + $0x430] sm:$0xff]
    %v357 = vld [vmem:[%s3 + $0x438] sm:$0xff]
    %v358 = vld [vmem:[%s3 + $0x440] sm:$0xff]
    %v359 = vld [vmem:[%s3 + $0x448] sm:$0xff]
    %v360 = vld [vmem:[%s3 + $0x450] sm:$0xff]
    %v361 = vld [vmem:[%s3 + $0x458] sm:$0xff]
    %v362 = vld [vmem:[%s3 + $0x460] sm:$0xff]
    %v363 = vld [vmem:[%s3 + $0x468] sm:$0xff]
    %v364 = vld [vmem:[%s3 + $0x470] sm:$0xff]
    %v365 = vld [vmem:[%s3 + $0x478] sm:$0xff]
    %v366 = vld [vmem:[%s3 + $0x480] sm:$0xff]
    %v367 = vld [vmem:[%s3 + $0x488] sm:$0xff]
    %v368 = vld [vmem:[%s3 + $0x490] sm:$0xff]
    %v369 = vld [vmem:[%s3 + $0x498] sm:$0xff]
    %v370 = vld [vmem:[%s3 + $0x4a0] sm:$0xff]
    %v371 = vld [vmem:[%s3 + $0x4a8] sm:$0xff]
    %v372 = vld [vmem:[%s3 + $0x4b0] sm:$0xff]
    %v373 = vld [vmem:[%s3 + $0x4b8] sm:$0xff]
    %v374 = vld [vmem:[%s3 + $0x4c0] sm:$0xff]
    %v375 = vld [vmem:[%s3 + $0x4c8] sm:$0xff]
    %v376 = vld [vmem:[%s3 + $0x4d0] sm:$0xff]
    %v377 = vld [vmem:[%s3 + $0x4d8] sm:$0xff]
    %v378 = vld [vmem:[%s3 + $0x4e0] sm:$0xff]
    %v379 = vld [vmem:[%s3 + $0x4e8] sm:$0xff]
    %v380 = vld [vmem:[%s3 + $0x4f0] sm:$0xff]
    %v381 = vld [vmem:[%s3 + $0x4f8] sm:$0xff]
    %v382 = vld [vmem:[%s3 + $0x500] sm:$0xff]
    %v383 = vld [vmem:[%s3 + $0x508] sm:$0xff]
    %v384 = vld [vmem:[%s3 + $0x510] sm:$0xff]
    %v385 = vld [vmem:[%s3 + $0x518] sm:$0xff]
    %v386 = vld [vmem:[%s3 + $0x520] sm:$0xff]
    %v387 = vld [vmem:[%s3 + $0x528] sm:$0xff]
    %v388 = vld [vmem:[%s3 + $0x530] sm:$0xff]
    %v389 = vld [vmem:[%s3 + $0x538] sm:$0xff]
    %v390 = vld [vmem:[%s3 + $0x540] sm:$0xff]
    %v391 = vld [vmem:[%s3 + $0x548] sm:$0xff]
    %v392 = vld [vmem:[%s3 + $0x550] sm:$0xff]
    %v393 = vld [vmem:[%s3 + $0x558] sm:$0xff]
    %v394 = vld [vmem:[%s3 + $0x560] sm:$0xff]
    %v395 = vld [vmem:[%s3 + $0x568] sm:$0xff]
    %v396 = vld [vmem:[%s3 + $0x570] sm:$0xff]
    %v397 = vld [vmem:[%s3 + $0x578] sm:$0xff]
    %v398 = vld [vmem:[%s3 + $0x580] sm:$0xff]
    %v399 = vld [vmem:[%s3 + $0x588] sm:$0xff]
    %v400 = vld [vmem:[%s3 + $0x590] sm:$0xff]
    %v401 = vld [vmem:[%s3 + $0x598] sm:$0xff]
    %v402 = vld [vmem:[%s3 + $0x5a0] sm:$0xff]
    %v403 = vld [vmem:[%s3 + $0x5a8] sm:$0xff]
    %v404 = vld [vmem:[%s3 + $0x5b0] sm:$0xff]
    %v405 = vld [vmem:[%s3 + $0x5b8] sm:$0xff]
    %v406 = vld [vmem:[%s3 + $0x5c0] sm:$0xff]
    %v407 = vld [vmem:[%s3 + $0x5c8] sm:$0xff]
    %v408 = vld [vmem:[%s3 + $0x5d0] sm:$0xff]
    %v409 = vld [vmem:[%s3 + $0x5d8] sm:$0xff]
    %v410 = vld [vmem:[%s3 + $0x5e0] sm:$0xff]
    %v411 = vld [vmem:[%s3 + $0x5e8] sm:$0xff]
    %v412 = vld [vmem:[%s3 + $0x5f0] sm:$0xff]
    %v413 = vld [vmem:[%s3 + $0x5f8] sm:$0xff]
    %v415 = vcombine.high %v221, %v221
    %v417 = vunpack.c.l.s4 1966171168
    %v418 = vunpack.c.0.s8 %v417
    %v419 = vlaneseq
    %v420 = vshrl.u32 %v419, 7
    %v421 = vsub.s32 %v418, %v420
    %v422 = vrot.slane %v221, %v421
    %v424 = vunpack.c.l.s4 1966171168
    %v425 = vunpack.c.0.s8 %v424
    %v426 = vlaneseq
    %v427 = vshrl.u32 %v426, 7
    %v428 = vsub.s32 %v425, %v427
    %v429 = vrot.slane %v415, %v428
    %v430 = vcombine.high %v422, %v422
    %v431 = vcombine.high %v429, %v429
    %v433 = vunpack.c.l.s4 1966171168
    %v434 = vunpack.c.0.s8 %v433
    %v435 = vlaneseq
    %v436 = vshrl.u32 %v435, 7
    %v437 = vsub.s32 %v434, %v436
    %v438 = vrot.slane %v422, %v437
    %v440 = vunpack.c.l.s4 1966171168
    %v441 = vunpack.c.0.s8 %v440
    %v442 = vlaneseq
    %v443 = vshrl.u32 %v442, 7
    %v444 = vsub.s32 %v441, %v443
    %v445 = vrot.slane %v429, %v444
    %v447 = vunpack.c.l.s4 1966171168
    %v448 = vunpack.c.0.s8 %v447
    %v449 = vlaneseq
    %v450 = vshrl.u32 %v449, 7
    %v451 = vsub.s32 %v448, %v450
    %v452 = vrot.slane %v430, %v451
    %v454 = vunpack.c.l.s4 1966171168
    %v455 = vunpack.c.0.s8 %v454
    %v456 = vlaneseq
    %v457 = vshrl.u32 %v456, 7
    %v458 = vsub.s32 %v455, %v457
    %v459 = vrot.slane %v431, %v458
    %v460 = vcombine.high %v438, %v438
    %v461 = vcombine.high %v452, %v452
    %v660 = vunpack.c.l.b16 %v222
    %v661 = vunpack.c.h.b16 %v222
    %v662 = vunpack.c.l.b16 %v223
    %v663 = vunpack.c.h.b16 %v223
    %v664 = vunpack.c.l.b16 %v224
    %v665 = vunpack.c.h.b16 %v224
    %v666 = vunpack.c.l.b16 %v225
    %v667 = vunpack.c.h.b16 %v225
    %v668 = vunpack.c.l.b16 %v226
    %v669 = vunpack.c.h.b16 %v226
    %v670 = vunpack.c.l.b16 %v227
    %v671 = vunpack.c.h.b16 %v227
    %v672 = vunpack.c.l.b16 %v228
    %v673 = vunpack.c.h.b16 %v228
    %v674 = vunpack.c.l.b16 %v229
    %v675 = vunpack.c.h.b16 %v229
    %v676 = vunpack.c.l.b16 %v230
    %v677 = vunpack.c.h.b16 %v230
    %v678 = vunpack.c.l.b16 %v231
    %v679 = vunpack.c.h.b16 %v231
    %v680 = vunpack.c.l.b16 %v232
    %v681 = vunpack.c.h.b16 %v232
    %v682 = vunpack.c.l.b16 %v233
    %v683 = vunpack.c.h.b16 %v233
    %v684 = vunpack.c.l.b16 %v234
    %v685 = vunpack.c.h.b16 %v234
    %v686 = vunpack.c.l.b16 %v235
    %v687 = vunpack.c.h.b16 %v235
    %v688 = vunpack.c.l.b16 %v236
    %v689 = vunpack.c.h.b16 %v236
    %v690 = vunpack.c.l.b16 %v237
    %v691 = vunpack.c.h.b16 %v237
    %v692 = vunpack.c.l.b16 %v238
    %v693 = vunpack.c.h.b16 %v238
    %v694 = vunpack.c.l.b16 %v239
    %v695 = vunpack.c.h.b16 %v239
    %v696 = vunpack.c.l.b16 %v240
    %v697 = vunpack.c.h.b16 %v240
    %v698 = vunpack.c.l.b16 %v241
    %v699 = vunpack.c.h.b16 %v241
    %v700 = vunpack.c.l.b16 %v242
    %v701 = vunpack.c.h.b16 %v242
    %v702 = vunpack.c.l.b16 %v243
    %v703 = vunpack.c.h.b16 %v243
    %v704 = vunpack.c.l.b16 %v244
    %v705 = vunpack.c.h.b16 %v244
    %v706 = vunpack.c.l.b16 %v245
    %v707 = vunpack.c.h.b16 %v245
    %v708 = vunpack.c.l.b16 %v246
    %v709 = vunpack.c.h.b16 %v246
    %v710 = vunpack.c.l.b16 %v247
    %v711 = vunpack.c.h.b16 %v247
    %v712 = vunpack.c.l.b16 %v248
    %v713 = vunpack.c.h.b16 %v248
    %v714 = vunpack.c.l.b16 %v249
    %v715 = vunpack.c.h.b16 %v249
    %v716 = vunpack.c.l.b16 %v250
    %v717 = vunpack.c.h.b16 %v250
    %v718 = vunpack.c.l.b16 %v251
    %v719 = vunpack.c.h.b16 %v251
    %v720 = vunpack.c.l.b16 %v252
    %v721 = vunpack.c.h.b16 %v252
    %v722 = vunpack.c.l.b16 %v253
    %v723 = vunpack.c.h.b16 %v253
    %v724 = vunpack.c.l.b16 %v254
    %v725 = vunpack.c.h.b16 %v254
    %v726 = vunpack.c.l.b16 %v255
    %v727 = vunpack.c.h.b16 %v255
    %v728 = vunpack.c.l.b16 %v256
    %v729 = vunpack.c.h.b16 %v256
    %v730 = vunpack.c.l.b16 %v257
    %v731 = vunpack.c.h.b16 %v257
    %v732 = vunpack.c.l.b16 %v258
    %v733 = vunpack.c.h.b16 %v258
    %v734 = vunpack.c.l.b16 %v259
    %v735 = vunpack.c.h.b16 %v259
    %v736 = vunpack.c.l.b16 %v260
    %v737 = vunpack.c.h.b16 %v260
    %v738 = vunpack.c.l.b16 %v261
    %v739 = vunpack.c.h.b16 %v261
    %v740 = vunpack.c.l.b16 %v262
    %v741 = vunpack.c.h.b16 %v262
    %v742 = vunpack.c.l.b16 %v263
    %v743 = vunpack.c.h.b16 %v263
    %v744 = vunpack.c.l.b16 %v264
    %v745 = vunpack.c.h.b16 %v264
    %v746 = vunpack.c.l.b16 %v265
    %v747 = vunpack.c.h.b16 %v265
    %v748 = vunpack.c.l.b16 %v266
    %v749 = vunpack.c.h.b16 %v266
    %v750 = vunpack.c.l.b16 %v267
    %v751 = vunpack.c.h.b16 %v267
    %v752 = vunpack.c.l.b16 %v268
    %v753 = vunpack.c.h.b16 %v268
    %v754 = vunpack.c.l.b16 %v269
    %v755 = vunpack.c.h.b16 %v269
    %v756 = vunpack.c.l.b16 %v270
    %v757 = vunpack.c.h.b16 %v270
    %v758 = vunpack.c.l.b16 %v271
    %v759 = vunpack.c.h.b16 %v271
    %v760 = vunpack.c.l.b16 %v272
    %v761 = vunpack.c.h.b16 %v272
    %v762 = vunpack.c.l.b16 %v273
    %v763 = vunpack.c.h.b16 %v273
    %v764 = vunpack.c.l.b16 %v274
    %v765 = vunpack.c.h.b16 %v274
    %v766 = vunpack.c.l.b16 %v275
    %v767 = vunpack.c.h.b16 %v275
    %v768 = vunpack.c.l.b16 %v276
    %v769 = vunpack.c.h.b16 %v276
    %v770 = vunpack.c.l.b16 %v277
    %v771 = vunpack.c.h.b16 %v277
    %v772 = vunpack.c.l.b16 %v278
    %v773 = vunpack.c.h.b16 %v278
    %v774 = vunpack.c.l.b16 %v279
    %v775 = vunpack.c.h.b16 %v279
    %v776 = vunpack.c.l.b16 %v280
    %v777 = vunpack.c.h.b16 %v280
    %v778 = vunpack.c.l.b16 %v281
    %v779 = vunpack.c.h.b16 %v281
    %v780 = vunpack.c.l.b16 %v282
    %v781 = vunpack.c.h.b16 %v282
    %v782 = vunpack.c.l.b16 %v283
    %v783 = vunpack.c.h.b16 %v283
    %v784 = vunpack.c.l.b16 %v284
    %v785 = vunpack.c.h.b16 %v284
    %v786 = vunpack.c.l.b16 %v285
    %v787 = vunpack.c.h.b16 %v285
    %v788 = vunpack.c.l.b16 %v286
    %v789 = vunpack.c.h.b16 %v286
    %v790 = vunpack.c.l.b16 %v287
    %v791 = vunpack.c.h.b16 %v287
    %v792 = vunpack.c.l.b16 %v288
    %v793 = vunpack.c.h.b16 %v288
    %v794 = vunpack.c.l.b16 %v289
    %v795 = vunpack.c.h.b16 %v289
    %v796 = vunpack.c.l.b16 %v290
    %v797 = vunpack.c.h.b16 %v290
    %v798 = vunpack.c.l.b16 %v291
    %v799 = vunpack.c.h.b16 %v291
    %v800 = vunpack.c.l.b16 %v292
    %v801 = vunpack.c.h.b16 %v292
    %v802 = vunpack.c.l.b16 %v293
    %v803 = vunpack.c.h.b16 %v293
    %v804 = vunpack.c.l.b16 %v294
    %v805 = vunpack.c.h.b16 %v294
    %v806 = vunpack.c.l.b16 %v295
    %v807 = vunpack.c.h.b16 %v295
    %v808 = vunpack.c.l.b16 %v296
    %v809 = vunpack.c.h.b16 %v296
    %v810 = vunpack.c.l.b16 %v297
    %v811 = vunpack.c.h.b16 %v297
    %v812 = vunpack.c.l.b16 %v298
    %v813 = vunpack.c.h.b16 %v298
    %v814 = vunpack.c.l.b16 %v299
    %v815 = vunpack.c.h.b16 %v299
    %v816 = vunpack.c.l.b16 %v300
    %v817 = vunpack.c.h.b16 %v300
    %v818 = vunpack.c.l.b16 %v301
    %v819 = vunpack.c.h.b16 %v301
    %v820 = vunpack.c.l.b16 %v302
    %v821 = vunpack.c.h.b16 %v302
    %v822 = vunpack.c.l.b16 %v303
    %v823 = vunpack.c.h.b16 %v303
    %v824 = vunpack.c.l.b16 %v304
    %v825 = vunpack.c.h.b16 %v304
    %v826 = vunpack.c.l.b16 %v305
    %v827 = vunpack.c.h.b16 %v305
    %v828 = vunpack.c.l.b16 %v306
    %v829 = vunpack.c.h.b16 %v306
    %v830 = vunpack.c.l.b16 %v307
    %v831 = vunpack.c.h.b16 %v307
    %v832 = vunpack.c.l.b16 %v308
    %v833 = vunpack.c.h.b16 %v308
    %v834 = vunpack.c.l.b16 %v309
    %v835 = vunpack.c.h.b16 %v309
    %v836 = vunpack.c.l.b16 %v310
    %v837 = vunpack.c.h.b16 %v310
    %v838 = vunpack.c.l.b16 %v311
    %v839 = vunpack.c.h.b16 %v311
    %v840 = vunpack.c.l.b16 %v312
    %v841 = vunpack.c.h.b16 %v312
    %v842 = vunpack.c.l.b16 %v313
    %v843 = vunpack.c.h.b16 %v313
    %v844 = vunpack.c.l.b16 %v314
    %v845 = vunpack.c.h.b16 %v314
    %v846 = vunpack.c.l.b16 %v315
    %v847 = vunpack.c.h.b16 %v315
    %v848 = vunpack.c.l.b16 %v316
    %v849 = vunpack.c.h.b16 %v316
    %v850 = vunpack.c.l.b16 %v317
    %v851 = vunpack.c.h.b16 %v317
    %v852 = vunpack.c.l.b16 %v318
    %v853 = vunpack.c.h.b16 %v318
    %v854 = vunpack.c.l.b16 %v319
    %v855 = vunpack.c.h.b16 %v319
    %v856 = vunpack.c.l.b16 %v320
    %v857 = vunpack.c.h.b16 %v320
    %v858 = vunpack.c.l.b16 %v321
    %v859 = vunpack.c.h.b16 %v321
    %v860 = vunpack.c.l.b16 %v322
    %v861 = vunpack.c.h.b16 %v322
    %v862 = vunpack.c.l.b16 %v323
    %v863 = vunpack.c.h.b16 %v323
    %v864 = vunpack.c.l.b16 %v324
    %v865 = vunpack.c.h.b16 %v324
    %v866 = vunpack.c.l.b16 %v325
    %v867 = vunpack.c.h.b16 %v325
    %v868 = vunpack.c.l.b16 %v326
    %v869 = vunpack.c.h.b16 %v326
    %v870 = vunpack.c.l.b16 %v327
    %v871 = vunpack.c.h.b16 %v327
    %v872 = vunpack.c.l.b16 %v328
    %v873 = vunpack.c.h.b16 %v328
    %v874 = vunpack.c.l.b16 %v329
    %v875 = vunpack.c.h.b16 %v329
    %v876 = vunpack.c.l.b16 %v330
    %v877 = vunpack.c.h.b16 %v330
    %v878 = vunpack.c.l.b16 %v331
    %v879 = vunpack.c.h.b16 %v331
    %v880 = vunpack.c.l.b16 %v332
    %v881 = vunpack.c.h.b16 %v332
    %v882 = vunpack.c.l.b16 %v333
    %v883 = vunpack.c.h.b16 %v333
    %v884 = vunpack.c.l.b16 %v334
    %v885 = vunpack.c.h.b16 %v334
    %v886 = vunpack.c.l.b16 %v335
    %v887 = vunpack.c.h.b16 %v335
    %v888 = vunpack.c.l.b16 %v336
    %v889 = vunpack.c.h.b16 %v336
    %v890 = vunpack.c.l.b16 %v337
    %v891 = vunpack.c.h.b16 %v337
    %v892 = vunpack.c.l.b16 %v338
    %v893 = vunpack.c.h.b16 %v338
    %v894 = vunpack.c.l.b16 %v339
    %v895 = vunpack.c.h.b16 %v339
    %v896 = vunpack.c.l.b16 %v340
    %v897 = vunpack.c.h.b16 %v340
    %v898 = vunpack.c.l.b16 %v341
    %v899 = vunpack.c.h.b16 %v341
    %v900 = vunpack.c.l.b16 %v342
    %v901 = vunpack.c.h.b16 %v342
    %v902 = vunpack.c.l.b16 %v343
    %v903 = vunpack.c.h.b16 %v343
    %v904 = vunpack.c.l.b16 %v344
    %v905 = vunpack.c.h.b16 %v344
    %v906 = vunpack.c.l.b16 %v345
    %v907 = vunpack.c.h.b16 %v345
    %v908 = vunpack.c.l.b16 %v346
    %v909 = vunpack.c.h.b16 %v346
    %v910 = vunpack.c.l.b16 %v347
    %v911 = vunpack.c.h.b16 %v347
    %v912 = vunpack.c.l.b16 %v348
    %v913 = vunpack.c.h.b16 %v348
    %v914 = vunpack.c.l.b16 %v349
    %v915 = vunpack.c.h.b16 %v349
    %v916 = vunpack.c.l.b16 %v350
    %v917 = vunpack.c.h.b16 %v350
    %v918 = vunpack.c.l.b16 %v351
    %v919 = vunpack.c.h.b16 %v351
    %v920 = vunpack.c.l.b16 %v352
    %v921 = vunpack.c.h.b16 %v352
    %v922 = vunpack.c.l.b16 %v353
    %v923 = vunpack.c.h.b16 %v353
    %v924 = vunpack.c.l.b16 %v354
    %v925 = vunpack.c.h.b16 %v354
    %v926 = vunpack.c.l.b16 %v355
    %v927 = vunpack.c.h.b16 %v355
    %v928 = vunpack.c.l.b16 %v356
    %v929 = vunpack.c.h.b16 %v356
    %v930 = vunpack.c.l.b16 %v357
    %v931 = vunpack.c.h.b16 %v357
    %v932 = vunpack.c.l.b16 %v358
    %v933 = vunpack.c.h.b16 %v358
    %v934 = vunpack.c.l.b16 %v359
    %v935 = vunpack.c.h.b16 %v359
    %v936 = vunpack.c.l.b16 %v360
    %v937 = vunpack.c.h.b16 %v360
    %v938 = vunpack.c.l.b16 %v361
    %v939 = vunpack.c.h.b16 %v361
    %v940 = vunpack.c.l.b16 %v362
    %v941 = vunpack.c.h.b16 %v362
    %v942 = vunpack.c.l.b16 %v363
    %v943 = vunpack.c.h.b16 %v363
    %v944 = vunpack.c.l.b16 %v364
    %v945 = vunpack.c.h.b16 %v364
    %v946 = vunpack.c.l.b16 %v365
    %v947 = vunpack.c.h.b16 %v365
    %v948 = vunpack.c.l.b16 %v366
    %v949 = vunpack.c.h.b16 %v366
    %v950 = vunpack.c.l.b16 %v367
    %v951 = vunpack.c.h.b16 %v367
    %v952 = vunpack.c.l.b16 %v368
    %v953 = vunpack.c.h.b16 %v368
    %v954 = vunpack.c.l.b16 %v369
    %v955 = vunpack.c.h.b16 %v369
    %v956 = vunpack.c.l.b16 %v370
    %v957 = vunpack.c.h.b16 %v370
    %v958 = vunpack.c.l.b16 %v371
    %v959 = vunpack.c.h.b16 %v371
    %v960 = vunpack.c.l.b16 %v372
    %v961 = vunpack.c.h.b16 %v372
    %v962 = vunpack.c.l.b16 %v373
    %v963 = vunpack.c.h.b16 %v373
    %v964 = vunpack.c.l.b16 %v374
    %v965 = vunpack.c.h.b16 %v374
    %v966 = vunpack.c.l.b16 %v375
    %v967 = vunpack.c.h.b16 %v375
    %v968 = vunpack.c.l.b16 %v376
    %v969 = vunpack.c.h.b16 %v376
    %v970 = vunpack.c.l.b16 %v377
    %v971 = vunpack.c.h.b16 %v377
    %v972 = vunpack.c.l.b16 %v378
    %v973 = vunpack.c.h.b16 %v378
    %v974 = vunpack.c.l.b16 %v379
    %v975 = vunpack.c.h.b16 %v379
    %v976 = vunpack.c.l.b16 %v380
    %v977 = vunpack.c.h.b16 %v380
    %v978 = vunpack.c.l.b16 %v381
    %v979 = vunpack.c.h.b16 %v381
    %v980 = vunpack.c.l.b16 %v382
    %v981 = vunpack.c.h.b16 %v382
    %v982 = vunpack.c.l.b16 %v383
    %v983 = vunpack.c.h.b16 %v383
    %v984 = vunpack.c.l.b16 %v384
    %v985 = vunpack.c.h.b16 %v384
    %v986 = vunpack.c.l.b16 %v385
    %v987 = vunpack.c.h.b16 %v385
    %v988 = vunpack.c.l.b16 %v386
    %v989 = vunpack.c.h.b16 %v386
    %v990 = vunpack.c.l.b16 %v387
    %v991 = vunpack.c.h.b16 %v387
    %v992 = vunpack.c.l.b16 %v388
    %v993 = vunpack.c.h.b16 %v388
    %v994 = vunpack.c.l.b16 %v389
    %v995 = vunpack.c.h.b16 %v389
    %v996 = vunpack.c.l.b16 %v390
    %v997 = vunpack.c.h.b16 %v390
    %v998 = vunpack.c.l.b16 %v391
    %v999 = vunpack.c.h.b16 %v391
    %v1000 = vunpack.c.l.b16 %v392
    %v1001 = vunpack.c.h.b16 %v392
    %v1002 = vunpack.c.l.b16 %v393
    %v1003 = vunpack.c.h.b16 %v393
    %v1004 = vunpack.c.l.b16 %v394
    %v1005 = vunpack.c.h.b16 %v394
    %v1006 = vunpack.c.l.b16 %v395
    %v1007 = vunpack.c.h.b16 %v395
    %v1008 = vunpack.c.l.b16 %v396
    %v1009 = vunpack.c.h.b16 %v396
    %v1010 = vunpack.c.l.b16 %v397
    %v1011 = vunpack.c.h.b16 %v397
    %v1012 = vunpack.c.l.b16 %v398
    %v1013 = vunpack.c.h.b16 %v398
    %v1014 = vunpack.c.l.b16 %v399
    %v1015 = vunpack.c.h.b16 %v399
    %v1016 = vunpack.c.l.b16 %v400
    %v1017 = vunpack.c.h.b16 %v400
    %v1018 = vunpack.c.l.b16 %v401
    %v1019 = vunpack.c.h.b16 %v401
    %v1020 = vunpack.c.l.b16 %v402
    %v1021 = vunpack.c.h.b16 %v402
    %v1022 = vunpack.c.l.b16 %v403
    %v1023 = vunpack.c.h.b16 %v403
    %v1024 = vunpack.c.l.b16 %v404
    %v1025 = vunpack.c.h.b16 %v404
    %v1026 = vunpack.c.l.b16 %v405
    %v1027 = vunpack.c.h.b16 %v405
    %v1028 = vunpack.c.l.b16 %v406
    %v1029 = vunpack.c.h.b16 %v406
    %v1030 = vunpack.c.l.b16 %v407
    %v1031 = vunpack.c.h.b16 %v407
    %v1032 = vunpack.c.l.b16 %v408
    %v1033 = vunpack.c.h.b16 %v408
    %v1034 = vunpack.c.l.b16 %v409
    %v1035 = vunpack.c.h.b16 %v409
    %v1036 = vunpack.c.l.b16 %v410
    %v1037 = vunpack.c.h.b16 %v410
    %v1038 = vunpack.c.l.b16 %v411
    %v1039 = vunpack.c.h.b16 %v411
    %v1040 = vunpack.c.l.b16 %v412
    %v1041 = vunpack.c.h.b16 %v412
    %v1042 = vunpack.c.l.b16 %v413
    %v1043 = vunpack.c.h.b16 %v413
    %v1044 = vpack.c.b16 %v664, %v660
    %v1045 = vpack.c.b16 %v665, %v661
    %v1046 = vpack.c.b16 %v666, %v662
    %v1047 = vpack.c.b16 %v667, %v663
    %v1048 = vpack.c.b16 %v672, %v668
    %v1049 = vpack.c.b16 %v673, %v669
    %v1050 = vpack.c.b16 %v674, %v670
    %v1051 = vpack.c.b16 %v675, %v671
    %v1052 = vpack.c.b16 %v680, %v676
    %v1053 = vpack.c.b16 %v681, %v677
    %v1054 = vpack.c.b16 %v682, %v678
    %v1055 = vpack.c.b16 %v683, %v679
    %v1056 = vpack.c.b16 %v688, %v684
    %v1057 = vpack.c.b16 %v689, %v685
    %v1058 = vpack.c.b16 %v690, %v686
    %v1059 = vpack.c.b16 %v691, %v687
    %v1060 = vpack.c.b16 %v696, %v692
    %v1061 = vpack.c.b16 %v697, %v693
    %v1062 = vpack.c.b16 %v698, %v694
    %v1063 = vpack.c.b16 %v699, %v695
    %v1064 = vpack.c.b16 %v704, %v700
    %v1065 = vpack.c.b16 %v705, %v701
    %v1066 = vpack.c.b16 %v706, %v702
    %v1067 = vpack.c.b16 %v707, %v703
    %v1068 = vpack.c.b16 %v712, %v708
    %v1069 = vpack.c.b16 %v713, %v709
    %v1070 = vpack.c.b16 %v714, %v710
    %v1071 = vpack.c.b16 %v715, %v711
    %v1072 = vpack.c.b16 %v720, %v716
    %v1073 = vpack.c.b16 %v721, %v717
    %v1074 = vpack.c.b16 %v722, %v718
    %v1075 = vpack.c.b16 %v723, %v719
    %v1076 = vpack.c.b16 %v728, %v724
    %v1077 = vpack.c.b16 %v729, %v725
    %v1078 = vpack.c.b16 %v730, %v726
    %v1079 = vpack.c.b16 %v731, %v727
    %v1080 = vpack.c.b16 %v736, %v732
    %v1081 = vpack.c.b16 %v737, %v733
    %v1082 = vpack.c.b16 %v738, %v734
    %v1083 = vpack.c.b16 %v739, %v735
    %v1084 = vpack.c.b16 %v744, %v740
    %v1085 = vpack.c.b16 %v745, %v741
    %v1086 = vpack.c.b16 %v746, %v742
    %v1087 = vpack.c.b16 %v747, %v743
    %v1088 = vpack.c.b16 %v752, %v748
    %v1089 = vpack.c.b16 %v753, %v749
    %v1090 = vpack.c.b16 %v754, %v750
    %v1091 = vpack.c.b16 %v755, %v751
    %v1092 = vpack.c.b16 %v760, %v756
    %v1093 = vpack.c.b16 %v761, %v757
    %v1094 = vpack.c.b16 %v762, %v758
    %v1095 = vpack.c.b16 %v763, %v759
    %v1096 = vpack.c.b16 %v768, %v764
    %v1097 = vpack.c.b16 %v769, %v765
    %v1098 = vpack.c.b16 %v770, %v766
    %v1099 = vpack.c.b16 %v771, %v767
    %v1100 = vpack.c.b16 %v776, %v772
    %v1101 = vpack.c.b16 %v777, %v773
    %v1102 = vpack.c.b16 %v778, %v774
    %v1103 = vpack.c.b16 %v779, %v775
    %v1104 = vpack.c.b16 %v784, %v780
    %v1105 = vpack.c.b16 %v785, %v781
    %v1106 = vpack.c.b16 %v786, %v782
    %v1107 = vpack.c.b16 %v787, %v783
    %v1108 = vpack.c.b16 %v792, %v788
    %v1109 = vpack.c.b16 %v793, %v789
    %v1110 = vpack.c.b16 %v794, %v790
    %v1111 = vpack.c.b16 %v795, %v791
    %v1112 = vpack.c.b16 %v800, %v796
    %v1113 = vpack.c.b16 %v801, %v797
    %v1114 = vpack.c.b16 %v802, %v798
    %v1115 = vpack.c.b16 %v803, %v799
    %v1116 = vpack.c.b16 %v808, %v804
    %v1117 = vpack.c.b16 %v809, %v805
    %v1118 = vpack.c.b16 %v810, %v806
    %v1119 = vpack.c.b16 %v811, %v807
    %v1120 = vpack.c.b16 %v816, %v812
    %v1121 = vpack.c.b16 %v817, %v813
    %v1122 = vpack.c.b16 %v818, %v814
    %v1123 = vpack.c.b16 %v819, %v815
    %v1124 = vpack.c.b16 %v824, %v820
    %v1125 = vpack.c.b16 %v825, %v821
    %v1126 = vpack.c.b16 %v826, %v822
    %v1127 = vpack.c.b16 %v827, %v823
    %v1128 = vpack.c.b16 %v832, %v828
    %v1129 = vpack.c.b16 %v833, %v829
    %v1130 = vpack.c.b16 %v834, %v830
    %v1131 = vpack.c.b16 %v835, %v831
    %v1132 = vpack.c.b16 %v840, %v836
    %v1133 = vpack.c.b16 %v841, %v837
    %v1134 = vpack.c.b16 %v842, %v838
    %v1135 = vpack.c.b16 %v843, %v839
    %v1136 = vpack.c.b16 %v848, %v844
    %v1137 = vpack.c.b16 %v849, %v845
    %v1138 = vpack.c.b16 %v850, %v846
    %v1139 = vpack.c.b16 %v851, %v847
    %v1140 = vpack.c.b16 %v856, %v852
    %v1141 = vpack.c.b16 %v857, %v853
    %v1142 = vpack.c.b16 %v858, %v854
    %v1143 = vpack.c.b16 %v859, %v855
    %v1144 = vpack.c.b16 %v864, %v860
    %v1145 = vpack.c.b16 %v865, %v861
    %v1146 = vpack.c.b16 %v866, %v862
    %v1147 = vpack.c.b16 %v867, %v863
    %v1148 = vpack.c.b16 %v872, %v868
    %v1149 = vpack.c.b16 %v873, %v869
    %v1150 = vpack.c.b16 %v874, %v870
    %v1151 = vpack.c.b16 %v875, %v871
    %v1152 = vpack.c.b16 %v880, %v876
    %v1153 = vpack.c.b16 %v881, %v877
    %v1154 = vpack.c.b16 %v882, %v878
    %v1155 = vpack.c.b16 %v883, %v879
    %v1156 = vpack.c.b16 %v888, %v884
    %v1157 = vpack.c.b16 %v889, %v885
    %v1158 = vpack.c.b16 %v890, %v886
    %v1159 = vpack.c.b16 %v891, %v887
    %v1160 = vpack.c.b16 %v896, %v892
    %v1161 = vpack.c.b16 %v897, %v893
    %v1162 = vpack.c.b16 %v898, %v894
    %v1163 = vpack.c.b16 %v899, %v895
    %v1164 = vpack.c.b16 %v904, %v900
    %v1165 = vpack.c.b16 %v905, %v901
    %v1166 = vpack.c.b16 %v906, %v902
    %v1167 = vpack.c.b16 %v907, %v903
    %v1168 = vpack.c.b16 %v912, %v908
    %v1169 = vpack.c.b16 %v913, %v909
    %v1170 = vpack.c.b16 %v914, %v910
    %v1171 = vpack.c.b16 %v915, %v911
    %v1172 = vpack.c.b16 %v920, %v916
    %v1173 = vpack.c.b16 %v921, %v917
    %v1174 = vpack.c.b16 %v922, %v918
    %v1175 = vpack.c.b16 %v923, %v919
    %v1176 = vpack.c.b16 %v928, %v924
    %v1177 = vpack.c.b16 %v929, %v925
    %v1178 = vpack.c.b16 %v930, %v926
    %v1179 = vpack.c.b16 %v931, %v927
    %v1180 = vpack.c.b16 %v936, %v932
    %v1181 = vpack.c.b16 %v937, %v933
    %v1182 = vpack.c.b16 %v938, %v934
    %v1183 = vpack.c.b16 %v939, %v935
    %v1184 = vpack.c.b16 %v944, %v940
    %v1185 = vpack.c.b16 %v945, %v941
    %v1186 = vpack.c.b16 %v946, %v942
    %v1187 = vpack.c.b16 %v947, %v943
    %v1188 = vpack.c.b16 %v952, %v948
    %v1189 = vpack.c.b16 %v953, %v949
    %v1190 = vpack.c.b16 %v954, %v950
    %v1191 = vpack.c.b16 %v955, %v951
    %v1192 = vpack.c.b16 %v960, %v956
    %v1193 = vpack.c.b16 %v961, %v957
    %v1194 = vpack.c.b16 %v962, %v958
    %v1195 = vpack.c.b16 %v963, %v959
    %v1196 = vpack.c.b16 %v968, %v964
    %v1197 = vpack.c.b16 %v969, %v965
    %v1198 = vpack.c.b16 %v970, %v966
    %v1199 = vpack.c.b16 %v971, %v967
    %v1200 = vpack.c.b16 %v976, %v972
    %v1201 = vpack.c.b16 %v977, %v973
    %v1202 = vpack.c.b16 %v978, %v974
    %v1203 = vpack.c.b16 %v979, %v975
    %v1204 = vpack.c.b16 %v984, %v980
    %v1205 = vpack.c.b16 %v985, %v981
    %v1206 = vpack.c.b16 %v986, %v982
    %v1207 = vpack.c.b16 %v987, %v983
    %v1208 = vpack.c.b16 %v992, %v988
    %v1209 = vpack.c.b16 %v993, %v989
    %v1210 = vpack.c.b16 %v994, %v990
    %v1211 = vpack.c.b16 %v995, %v991
    %v1212 = vpack.c.b16 %v1000, %v996
    %v1213 = vpack.c.b16 %v1001, %v997
    %v1214 = vpack.c.b16 %v1002, %v998
    %v1215 = vpack.c.b16 %v1003, %v999
    %v1216 = vpack.c.b16 %v1008, %v1004
    %v1217 = vpack.c.b16 %v1009, %v1005
    %v1218 = vpack.c.b16 %v1010, %v1006
    %v1219 = vpack.c.b16 %v1011, %v1007
    %v1220 = vpack.c.b16 %v1016, %v1012
    %v1221 = vpack.c.b16 %v1017, %v1013
    %v1222 = vpack.c.b16 %v1018, %v1014
    %v1223 = vpack.c.b16 %v1019, %v1015
    %v1224 = vpack.c.b16 %v1024, %v1020
    %v1225 = vpack.c.b16 %v1025, %v1021
    %v1226 = vpack.c.b16 %v1026, %v1022
    %v1227 = vpack.c.b16 %v1027, %v1023
    %v1228 = vpack.c.b16 %v1032, %v1028
    %v1229 = vpack.c.b16 %v1033, %v1029
    %v1230 = vpack.c.b16 %v1034, %v1030
    %v1231 = vpack.c.b16 %v1035, %v1031
    %v1232 = vpack.c.b16 %v1040, %v1036
    %v1233 = vpack.c.b16 %v1041, %v1037
    %v1234 = vpack.c.b16 %v1042, %v1038
    %v1235 = vpack.c.b16 %v1043, %v1039
    %1428 = vmatprep.subr.bf16.mxu0 %v1045
    %1429 = vmatpush1.bf16.msra.mxu0 %v1044
    %1430 = vmatprep.subr.bf16.mxu0 %v1049
    %1431 = vmatpush1.bf16.msra.mxu0 %v1048
    %1432 = vmatprep.subr.bf16.mxu0 %v1053
    %1433 = vmatpush1.bf16.msra.mxu0 %v1052
    %1434 = vmatprep.subr.bf16.mxu0 %v1057
    %1435 = vmatpush1.bf16.msra.mxu0 %v1056
    %1436 = vmatprep.subr.bf16.mxu0 %v1061
    %1437 = vmatpush1.bf16.msra.mxu0 %v1060
    %1438 = vmatprep.subr.bf16.mxu0 %v1065
    %1439 = vmatpush1.bf16.msra.mxu0 %v1064
    %1440 = vmatprep.subr.bf16.mxu0 %v1069
    %1441 = vmatpush1.bf16.msra.mxu0 %v1068
    %1442 = vmatprep.subr.bf16.mxu0 %v1073
    %1443 = vmatpush1.bf16.msra.mxu0 %v1072
    %1444 = vmatprep.subr.bf16.mxu0 %v1077
    %1445 = vmatpush1.bf16.msra.mxu0 %v1076
    %1446 = vmatprep.subr.bf16.mxu0 %v1081
    %1447 = vmatpush1.bf16.msra.mxu0 %v1080
    %1448 = vmatprep.subr.bf16.mxu0 %v1085
    %1449 = vmatpush1.bf16.msra.mxu0 %v1084
    %1450 = vmatprep.subr.bf16.mxu0 %v1089
    %1451 = vmatpush1.bf16.msra.mxu0 %v1088
    %1452 = vmatprep.subr.bf16.mxu0 %v1093
    %1453 = vmatpush1.bf16.msra.mxu0 %v1092
    %1454 = vmatprep.subr.bf16.mxu0 %v1097
    %1455 = vmatpush1.bf16.msra.mxu0 %v1096
    %1456 = vmatprep.subr.bf16.mxu0 %v1101
    %1457 = vmatpush1.bf16.msra.mxu0 %v1100
    %1458 = vmatprep.subr.bf16.mxu0 %v1105
    %1459 = vmatpush1.bf16.msra.mxu0 %v1104
    %1460 = vmatprep.mubr.bf16.mxu0 %v452
    %1461 = vmatmul.mubr.bf16.gmra.mrb[0].mxu0 %v438
    %v1462 = vpop.f32.mrb[0].mxu0
    %v1463 = vadd.f32 0.0, %v1462
    %v1464 = vpop.f32.mrb[0].mxu0
    %v1465 = vadd.f32 0.0, %v1464
    %v1466 = vpop.f32.mrb[0].mxu0
    %v1467 = vpop.f32.mrb[0].mxu0
    %1468 = vdwg.mxu0
    %1469 = vmatprep.subr.bf16.mxu0 %v1109
    %1470 = vmatpush1.bf16.msra.mxu0 %v1108
    %1471 = vmatprep.subr.bf16.mxu0 %v1113
    %1472 = vmatpush1.bf16.msra.mxu0 %v1112
    %1473 = vmatprep.subr.bf16.mxu0 %v1117
    %1474 = vmatpush1.bf16.msra.mxu0 %v1116
    %1475 = vmatprep.subr.bf16.mxu0 %v1121
    %1476 = vmatpush1.bf16.msra.mxu0 %v1120
    %1477 = vmatprep.subr.bf16.mxu0 %v1125
    %1478 = vmatpush1.bf16.msra.mxu0 %v1124
    %1479 = vmatprep.subr.bf16.mxu0 %v1129
    %1480 = vmatpush1.bf16.msra.mxu0 %v1128
    %1481 = vmatprep.subr.bf16.mxu0 %v1133
    %1482 = vmatpush1.bf16.msra.mxu0 %v1132
    %1483 = vmatprep.subr.bf16.mxu0 %v1137
    %1484 = vmatpush1.bf16.msra.mxu0 %v1136
    %1485 = vmatprep.subr.bf16.mxu0 %v1141
    %1486 = vmatpush1.bf16.msra.mxu0 %v1140
    %1487 = vmatprep.subr.bf16.mxu0 %v1145
    %1488 = vmatpush1.bf16.msra.mxu0 %v1144
    %1489 = vmatprep.subr.bf16.mxu0 %v1149
    %1490 = vmatpush1.bf16.msra.mxu0 %v1148
    %1491 = vmatprep.subr.bf16.mxu0 %v1153
    %1492 = vmatpush1.bf16.msra.mxu0 %v1152
    %1493 = vmatprep.subr.bf16.mxu0 %v1157
    %1494 = vmatpush1.bf16.msra.mxu0 %v1156
    %1495 = vmatprep.subr.bf16.mxu0 %v1161
    %1496 = vmatpush1.bf16.msra.mxu0 %v1160
    %1497 = vmatprep.subr.bf16.mxu0 %v1165
    %1498 = vmatpush1.bf16.msra.mxu0 %v1164
    %1499 = vmatprep.subr.bf16.mxu0 %v1169
    %1500 = vmatpush1.bf16.msra.mxu0 %v1168
    %1501 = vmatprep.mubr.bf16.mxu0 %v461
    %1502 = vmatmul.mubr.bf16.gmra.mrb[0].mxu0 %v460
    %v1503 = vpop.f32.mrb[0].mxu0
    %v1504 = vadd.f32 %v1463, %v1503
    %v1505 = vpop.f32.mrb[0].mxu0
    %v1506 = vadd.f32 %v1465, %v1505
    %v1507 = vpop.f32.mrb[0].mxu0
    %v1508 = vpop.f32.mrb[0].mxu0
    %1509 = vdwg.mxu0
    %1510 = vmatprep.subr.bf16.mxu0 %v1173
    %1511 = vmatpush1.bf16.msra.mxu0 %v1172
    %1512 = vmatprep.subr.bf16.mxu0 %v1177
    %1513 = vmatpush1.bf16.msra.mxu0 %v1176
    %1514 = vmatprep.subr.bf16.mxu0 %v1181
    %1515 = vmatpush1.bf16.msra.mxu0 %v1180
    %1516 = vmatprep.subr.bf16.mxu0 %v1185
    %1517 = vmatpush1.bf16.msra.mxu0 %v1184
    %1518 = vmatprep.subr.bf16.mxu0 %v1189
    %1519 = vmatpush1.bf16.msra.mxu0 %v1188
    %1520 = vmatprep.subr.bf16.mxu0 %v1193
    %1521 = vmatpush1.bf16.msra.mxu0 %v1192
    %1522 = vmatprep.subr.bf16.mxu0 %v1197
    %1523 = vmatpush1.bf16.msra.mxu0 %v1196
    %1524 = vmatprep.subr.bf16.mxu0 %v1201
    %1525 = vmatpush1.bf16.msra.mxu0 %v1200
    %1526 = vmatprep.subr.bf16.mxu0 %v1205
    %1527 = vmatpush1.bf16.msra.mxu0 %v1204
    %1528 = vmatprep.subr.bf16.mxu0 %v1209
    %1529 = vmatpush1.bf16.msra.mxu0 %v1208
    %1530 = vmatprep.subr.bf16.mxu0 %v1213
    %1531 = vmatpush1.bf16.msra.mxu0 %v1212
    %1532 = vmatprep.subr.bf16.mxu0 %v1217
    %1533 = vmatpush1.bf16.msra.mxu0 %v1216
    %1534 = vmatprep.subr.bf16.mxu0 %v1221
    %1535 = vmatpush1.bf16.msra.mxu0 %v1220
    %1536 = vmatprep.subr.bf16.mxu0 %v1225
    %1537 = vmatpush1.bf16.msra.mxu0 %v1224
    %1538 = vmatprep.subr.bf16.mxu0 %v1229
    %1539 = vmatpush1.bf16.msra.mxu0 %v1228
    %1540 = vmatprep.subr.bf16.mxu0 %v1233
    %1541 = vmatpush1.bf16.msra.mxu0 %v1232
    %1542 = vmatprep.mubr.bf16.mxu0 %v459
    %1543 = vmatmul.mubr.bf16.gmra.mrb[0].mxu0 %v445
    %v1544 = vpop.f32.mrb[0].mxu0
    %v1545 = vadd.f32 %v1504, %v1544
    %v1546 = vpop.f32.mrb[0].mxu0
    %v1547 = vadd.f32 %v1506, %v1546
    %v1548 = vpop.f32.mrb[0].mxu0
    %v1549 = vpop.f32.mrb[0].mxu0
    %1550 = vdwg.mxu0
    %1551 = vmatprep.subr.bf16.mxu0 %v1047
    %1552 = vmatpush1.bf16.msra.mxu0 %v1046
    %1553 = vmatprep.subr.bf16.mxu0 %v1051
    %1554 = vmatpush1.bf16.msra.mxu0 %v1050
    %1555 = vmatprep.subr.bf16.mxu0 %v1055
    %1556 = vmatpush1.bf16.msra.mxu0 %v1054
    %1557 = vmatprep.subr.bf16.mxu0 %v1059
    %1558 = vmatpush1.bf16.msra.mxu0 %v1058
    %1559 = vmatprep.subr.bf16.mxu0 %v1063
    %1560 = vmatpush1.bf16.msra.mxu0 %v1062
    %1561 = vmatprep.subr.bf16.mxu0 %v1067
    %1562 = vmatpush1.bf16.msra.mxu0 %v1066
    %1563 = vmatprep.subr.bf16.mxu0 %v1071
    %1564 = vmatpush1.bf16.msra.mxu0 %v1070
    %1565 = vmatprep.subr.bf16.mxu0 %v1075
    %1566 = vmatpush1.bf16.msra.mxu0 %v1074
    %1567 = vmatprep.subr.bf16.mxu0 %v1079
    %1568 = vmatpush1.bf16.msra.mxu0 %v1078
    %1569 = vmatprep.subr.bf16.mxu0 %v1083
    %1570 = vmatpush1.bf16.msra.mxu0 %v1082
    %1571 = vmatprep.subr.bf16.mxu0 %v1087
    %1572 = vmatpush1.bf16.msra.mxu0 %v1086
    %1573 = vmatprep.subr.bf16.mxu0 %v1091
    %1574 = vmatpush1.bf16.msra.mxu0 %v1090
    %1575 = vmatprep.subr.bf16.mxu0 %v1095
    %1576 = vmatpush1.bf16.msra.mxu0 %v1094
    %1577 = vmatprep.subr.bf16.mxu0 %v1099
    %1578 = vmatpush1.bf16.msra.mxu0 %v1098
    %1579 = vmatprep.subr.bf16.mxu0 %v1103
    %1580 = vmatpush1.bf16.msra.mxu0 %v1102
    %1581 = vmatprep.subr.bf16.mxu0 %v1107
    %1582 = vmatpush1.bf16.msra.mxu0 %v1106
    %1583 = vmatprep.mubr.bf16.mxu0 %v452
    %1584 = vmatmul.mubr.bf16.gmra.mrb[0].mxu0 %v438
    %v1585 = vpop.f32.mrb[0].mxu0
    %v1586 = vadd.f32 0.0, %v1585
    %v1587 = vpop.f32.mrb[0].mxu0
    %v1588 = vadd.f32 0.0, %v1587
    %v1589 = vpop.f32.mrb[0].mxu0
    %v1590 = vpop.f32.mrb[0].mxu0
    %1591 = vdwg.mxu0
    %1592 = vmatprep.subr.bf16.mxu0 %v1111
    %1593 = vmatpush1.bf16.msra.mxu0 %v1110
    %1594 = vmatprep.subr.bf16.mxu0 %v1115
    %1595 = vmatpush1.bf16.msra.mxu0 %v1114
    %1596 = vmatprep.subr.bf16.mxu0 %v1119
    %1597 = vmatpush1.bf16.msra.mxu0 %v1118
    %1598 = vmatprep.subr.bf16.mxu0 %v1123
    %1599 = vmatpush1.bf16.msra.mxu0 %v1122
    %1600 = vmatprep.subr.bf16.mxu0 %v1127
    %1601 = vmatpush1.bf16.msra.mxu0 %v1126
    %1602 = vmatprep.subr.bf16.mxu0 %v1131
    %1603 = vmatpush1.bf16.msra.mxu0 %v1130
    %1604 = vmatprep.subr.bf16.mxu0 %v1135
    %1605 = vmatpush1.bf16.msra.mxu0 %v1134
    %1606 = vmatprep.subr.bf16.mxu0 %v1139
    %1607 = vmatpush1.bf16.msra.mxu0 %v1138
    %1608 = vmatprep.subr.bf16.mxu0 %v1143
    %1609 = vmatpush1.bf16.msra.mxu0 %v1142
    %1610 = vmatprep.subr.bf16.mxu0 %v1147
    %1611 = vmatpush1.bf16.msra.mxu0 %v1146
    %1612 = vmatprep.subr.bf16.mxu0 %v1151
    %1613 = vmatpush1.bf16.msra.mxu0 %v1150
    %1614 = vmatprep.subr.bf16.mxu0 %v1155
    %1615 = vmatpush1.bf16.msra.mxu0 %v1154
    %1616 = vmatprep.subr.bf16.mxu0 %v1159
    %1617 = vmatpush1.bf16.msra.mxu0 %v1158
    %1618 = vmatprep.subr.bf16.mxu0 %v1163
    %1619 = vmatpush1.bf16.msra.mxu0 %v1162
    %1620 = vmatprep.subr.bf16.mxu0 %v1167
    %1621 = vmatpush1.bf16.msra.mxu0 %v1166
    %1622 = vmatprep.subr.bf16.mxu0 %v1171
    %1623 = vmatpush1.bf16.msra.mxu0 %v1170
    %1624 = vmatprep.mubr.bf16.mxu0 %v461
    %1625 = vmatmul.mubr.bf16.gmra.mrb[0].mxu0 %v460
    %v1626 = vpop.f32.mrb[0].mxu0
    %v1627 = vadd.f32 %v1586, %v1626
    %v1628 = vpop.f32.mrb[0].mxu0
    %v1629 = vadd.f32 %v1588, %v1628
    %v1630 = vpop.f32.mrb[0].mxu0
    %v1631 = vpop.f32.mrb[0].mxu0
    %1632 = vdwg.mxu0
    %1633 = vmatprep.subr.bf16.mxu0 %v1175
    %1634 = vmatpush1.bf16.msra.mxu0 %v1174
    %1635 = vmatprep.subr.bf16.mxu0 %v1179
    %1636 = vmatpush1.bf16.msra.mxu0 %v1178
    %1637 = vmatprep.subr.bf16.mxu0 %v1183
    %1638 = vmatpush1.bf16.msra.mxu0 %v1182
    %1639 = vmatprep.subr.bf16.mxu0 %v1187
    %1640 = vmatpush1.bf16.msra.mxu0 %v1186
    %1641 = vmatprep.subr.bf16.mxu0 %v1191
    %1642 = vmatpush1.bf16.msra.mxu0 %v1190
    %1643 = vmatprep.subr.bf16.mxu0 %v1195
    %1644 = vmatpush1.bf16.msra.mxu0 %v1194
    %1645 = vmatprep.subr.bf16.mxu0 %v1199
    %1646 = vmatpush1.bf16.msra.mxu0 %v1198
    %1647 = vmatprep.subr.bf16.mxu0 %v1203
    %1648 = vmatpush1.bf16.msra.mxu0 %v1202
    %1649 = vmatprep.subr.bf16.mxu0 %v1207
    %1650 = vmatpush1.bf16.msra.mxu0 %v1206
    %1651 = vmatprep.subr.bf16.mxu0 %v1211
    %1652 = vmatpush1.bf16.msra.mxu0 %v1210
    %1653 = vmatprep.subr.bf16.mxu0 %v1215
    %1654 = vmatpush1.bf16.msra.mxu0 %v1214
    %1655 = vmatprep.subr.bf16.mxu0 %v1219
    %1656 = vmatpush1.bf16.msra.mxu0 %v1218
    %1657 = vmatprep.subr.bf16.mxu0 %v1223
    %1658 = vmatpush1.bf16.msra.mxu0 %v1222
    %1659 = vmatprep.subr.bf16.mxu0 %v1227
    %1660 = vmatpush1.bf16.msra.mxu0 %v1226
    %1661 = vmatprep.subr.bf16.mxu0 %v1231
    %1662 = vmatpush1.bf16.msra.mxu0 %v1230
    %1663 = vmatprep.subr.bf16.mxu0 %v1235
    %1664 = vmatpush1.bf16.msra.mxu0 %v1234
    %1665 = vmatprep.mubr.bf16.mxu0 %v459
    %1666 = vmatmul.mubr.bf16.gmra.mrb[0].mxu0 %v445
    %v1667 = vpop.f32.mrb[0].mxu0
    %v1668 = vadd.f32 %v1627, %v1667
    %v1669 = vpop.f32.mrb[0].mxu0
    %v1670 = vadd.f32 %v1629, %v1669
    %v1671 = vpop.f32.mrb[0].mxu0
    %v1672 = vpop.f32.mrb[0].mxu0
    %1673 = vdwg.mxu0
    %v1675 = vcombine.high %v28, %v28
    %v1677 = vunpack.c.l.s4 1966171168
    %v1678 = vunpack.c.0.s8 %v1677
    %v1679 = vlaneseq
    %v1680 = vshrl.u32 %v1679, 7
    %v1681 = vsub.s32 %v1678, %v1680
    %v1682 = vrot.slane %v28, %v1681
    %v1684 = vunpack.c.l.s4 1966171168
    %v1685 = vunpack.c.0.s8 %v1684
    %v1686 = vlaneseq
    %v1687 = vshrl.u32 %v1686, 7
    %v1688 = vsub.s32 %v1685, %v1687
    %v1689 = vrot.slane %v1675, %v1688
    %v1690 = vcombine.high %v1682, %v1682
    %v1691 = vcombine.high %v1689, %v1689
    %v1693 = vunpack.c.l.s4 1966171168
    %v1694 = vunpack.c.0.s8 %v1693
    %v1695 = vlaneseq
    %v1696 = vshrl.u32 %v1695, 7
    %v1697 = vsub.s32 %v1694, %v1696
    %v1698 = vrot.slane %v1682, %v1697
    %v1700 = vunpack.c.l.s4 1966171168
    %v1701 = vunpack.c.0.s8 %v1700
    %v1702 = vlaneseq
    %v1703 = vshrl.u32 %v1702, 7
    %v1704 = vsub.s32 %v1701, %v1703
    %v1705 = vrot.slane %v1689, %v1704
    %v1707 = vunpack.c.l.s4 1966171168
    %v1708 = vunpack.c.0.s8 %v1707
    %v1709 = vlaneseq
    %v1710 = vshrl.u32 %v1709, 7
    %v1711 = vsub.s32 %v1708, %v1710
    %v1712 = vrot.slane %v1690, %v1711
    %v1714 = vunpack.c.l.s4 1966171168
    %v1715 = vunpack.c.0.s8 %v1714
    %v1716 = vlaneseq
    %v1717 = vshrl.u32 %v1716, 7
    %v1718 = vsub.s32 %v1715, %v1717
    %v1719 = vrot.slane %v1691, %v1718
    %v1720 = vcombine.high %v1698, %v1698
    %v1721 = vcombine.high %v1712, %v1712
    %v1920 = vunpack.c.l.b16 %v29
    %v1921 = vunpack.c.h.b16 %v29
    %v1922 = vunpack.c.l.b16 %v30
    %v1923 = vunpack.c.h.b16 %v30
    %v1924 = vunpack.c.l.b16 %v31
    %v1925 = vunpack.c.h.b16 %v31
    %v1926 = vunpack.c.l.b16 %v32
    %v1927 = vunpack.c.h.b16 %v32
    %v1928 = vunpack.c.l.b16 %v33
    %v1929 = vunpack.c.h.b16 %v33
    %v1930 = vunpack.c.l.b16 %v34
    %v1931 = vunpack.c.h.b16 %v34
    %v1932 = vunpack.c.l.b16 %v35
    %v1933 = vunpack.c.h.b16 %v35
    %v1934 = vunpack.c.l.b16 %v36
    %v1935 = vunpack.c.h.b16 %v36
    %v1936 = vunpack.c.l.b16 %v37
    %v1937 = vunpack.c.h.b16 %v37
    %v1938 = vunpack.c.l.b16 %v38
    %v1939 = vunpack.c.h.b16 %v38
    %v1940 = vunpack.c.l.b16 %v39
    %v1941 = vunpack.c.h.b16 %v39
    %v1942 = vunpack.c.l.b16 %v40
    %v1943 = vunpack.c.h.b16 %v40
    %v1944 = vunpack.c.l.b16 %v41
    %v1945 = vunpack.c.h.b16 %v41
    %v1946 = vunpack.c.l.b16 %v42
    %v1947 = vunpack.c.h.b16 %v42
    %v1948 = vunpack.c.l.b16 %v43
    %v1949 = vunpack.c.h.b16 %v43
    %v1950 = vunpack.c.l.b16 %v44
    %v1951 = vunpack.c.h.b16 %v44
    %v1952 = vunpack.c.l.b16 %v45
    %v1953 = vunpack.c.h.b16 %v45
    %v1954 = vunpack.c.l.b16 %v46
    %v1955 = vunpack.c.h.b16 %v46
    %v1956 = vunpack.c.l.b16 %v47
    %v1957 = vunpack.c.h.b16 %v47
    %v1958 = vunpack.c.l.b16 %v48
    %v1959 = vunpack.c.h.b16 %v48
    %v1960 = vunpack.c.l.b16 %v49
    %v1961 = vunpack.c.h.b16 %v49
    %v1962 = vunpack.c.l.b16 %v50
    %v1963 = vunpack.c.h.b16 %v50
    %v1964 = vunpack.c.l.b16 %v51
    %v1965 = vunpack.c.h.b16 %v51
    %v1966 = vunpack.c.l.b16 %v52
    %v1967 = vunpack.c.h.b16 %v52
    %v1968 = vunpack.c.l.b16 %v53
    %v1969 = vunpack.c.h.b16 %v53
    %v1970 = vunpack.c.l.b16 %v54
    %v1971 = vunpack.c.h.b16 %v54
    %v1972 = vunpack.c.l.b16 %v55
    %v1973 = vunpack.c.h.b16 %v55
    %v1974 = vunpack.c.l.b16 %v56
    %v1975 = vunpack.c.h.b16 %v56
    %v1976 = vunpack.c.l.b16 %v57
    %v1977 = vunpack.c.h.b16 %v57
    %v1978 = vunpack.c.l.b16 %v58
    %v1979 = vunpack.c.h.b16 %v58
    %v1980 = vunpack.c.l.b16 %v59
    %v1981 = vunpack.c.h.b16 %v59
    %v1982 = vunpack.c.l.b16 %v60
    %v1983 = vunpack.c.h.b16 %v60
    %v1984 = vunpack.c.l.b16 %v61
    %v1985 = vunpack.c.h.b16 %v61
    %v1986 = vunpack.c.l.b16 %v62
    %v1987 = vunpack.c.h.b16 %v62
    %v1988 = vunpack.c.l.b16 %v63
    %v1989 = vunpack.c.h.b16 %v63
    %v1990 = vunpack.c.l.b16 %v64
    %v1991 = vunpack.c.h.b16 %v64
    %v1992 = vunpack.c.l.b16 %v65
    %v1993 = vunpack.c.h.b16 %v65
    %v1994 = vunpack.c.l.b16 %v66
    %v1995 = vunpack.c.h.b16 %v66
    %v1996 = vunpack.c.l.b16 %v67
    %v1997 = vunpack.c.h.b16 %v67
    %v1998 = vunpack.c.l.b16 %v68
    %v1999 = vunpack.c.h.b16 %v68
    %v2000 = vunpack.c.l.b16 %v69
    %v2001 = vunpack.c.h.b16 %v69
    %v2002 = vunpack.c.l.b16 %v70
    %v2003 = vunpack.c.h.b16 %v70
    %v2004 = vunpack.c.l.b16 %v71
    %v2005 = vunpack.c.h.b16 %v71
    %v2006 = vunpack.c.l.b16 %v72
    %v2007 = vunpack.c.h.b16 %v72
    %v2008 = vunpack.c.l.b16 %v73
    %v2009 = vunpack.c.h.b16 %v73
    %v2010 = vunpack.c.l.b16 %v74
    %v2011 = vunpack.c.h.b16 %v74
    %v2012 = vunpack.c.l.b16 %v75
    %v2013 = vunpack.c.h.b16 %v75
    %v2014 = vunpack.c.l.b16 %v76
    %v2015 = vunpack.c.h.b16 %v76
    %v2016 = vunpack.c.l.b16 %v77
    %v2017 = vunpack.c.h.b16 %v77
    %v2018 = vunpack.c.l.b16 %v78
    %v2019 = vunpack.c.h.b16 %v78
    %v2020 = vunpack.c.l.b16 %v79
    %v2021 = vunpack.c.h.b16 %v79
    %v2022 = vunpack.c.l.b16 %v80
    %v2023 = vunpack.c.h.b16 %v80
    %v2024 = vunpack.c.l.b16 %v81
    %v2025 = vunpack.c.h.b16 %v81
    %v2026 = vunpack.c.l.b16 %v82
    %v2027 = vunpack.c.h.b16 %v82
    %v2028 = vunpack.c.l.b16 %v83
    %v2029 = vunpack.c.h.b16 %v83
    %v2030 = vunpack.c.l.b16 %v84
    %v2031 = vunpack.c.h.b16 %v84
    %v2032 = vunpack.c.l.b16 %v85
    %v2033 = vunpack.c.h.b16 %v85
    %v2034 = vunpack.c.l.b16 %v86
    %v2035 = vunpack.c.h.b16 %v86
    %v2036 = vunpack.c.l.b16 %v87
    %v2037 = vunpack.c.h.b16 %v87
    %v2038 = vunpack.c.l.b16 %v88
    %v2039 = vunpack.c.h.b16 %v88
    %v2040 = vunpack.c.l.b16 %v89
    %v2041 = vunpack.c.h.b16 %v89
    %v2042 = vunpack.c.l.b16 %v90
    %v2043 = vunpack.c.h.b16 %v90
    %v2044 = vunpack.c.l.b16 %v91
    %v2045 = vunpack.c.h.b16 %v91
    %v2046 = vunpack.c.l.b16 %v92
    %v2047 = vunpack.c.h.b16 %v92
    %v2048 = vunpack.c.l.b16 %v93
    %v2049 = vunpack.c.h.b16 %v93
    %v2050 = vunpack.c.l.b16 %v94
    %v2051 = vunpack.c.h.b16 %v94
    %v2052 = vunpack.c.l.b16 %v95
    %v2053 = vunpack.c.h.b16 %v95
    %v2054 = vunpack.c.l.b16 %v96
    %v2055 = vunpack.c.h.b16 %v96
    %v2056 = vunpack.c.l.b16 %v97
    %v2057 = vunpack.c.h.b16 %v97
    %v2058 = vunpack.c.l.b16 %v98
    %v2059 = vunpack.c.h.b16 %v98
    %v2060 = vunpack.c.l.b16 %v99
    %v2061 = vunpack.c.h.b16 %v99
    %v2062 = vunpack.c.l.b16 %v100
    %v2063 = vunpack.c.h.b16 %v100
    %v2064 = vunpack.c.l.b16 %v101
    %v2065 = vunpack.c.h.b16 %v101
    %v2066 = vunpack.c.l.b16 %v102
    %v2067 = vunpack.c.h.b16 %v102
    %v2068 = vunpack.c.l.b16 %v103
    %v2069 = vunpack.c.h.b16 %v103
    %v2070 = vunpack.c.l.b16 %v104
    %v2071 = vunpack.c.h.b16 %v104
    %v2072 = vunpack.c.l.b16 %v105
    %v2073 = vunpack.c.h.b16 %v105
    %v2074 = vunpack.c.l.b16 %v106
    %v2075 = vunpack.c.h.b16 %v106
    %v2076 = vunpack.c.l.b16 %v107
    %v2077 = vunpack.c.h.b16 %v107
    %v2078 = vunpack.c.l.b16 %v108
    %v2079 = vunpack.c.h.b16 %v108
    %v2080 = vunpack.c.l.b16 %v109
    %v2081 = vunpack.c.h.b16 %v109
    %v2082 = vunpack.c.l.b16 %v110
    %v2083 = vunpack.c.h.b16 %v110
    %v2084 = vunpack.c.l.b16 %v111
    %v2085 = vunpack.c.h.b16 %v111
    %v2086 = vunpack.c.l.b16 %v112
    %v2087 = vunpack.c.h.b16 %v112
    %v2088 = vunpack.c.l.b16 %v113
    %v2089 = vunpack.c.h.b16 %v113
    %v2090 = vunpack.c.l.b16 %v114
    %v2091 = vunpack.c.h.b16 %v114
    %v2092 = vunpack.c.l.b16 %v115
    %v2093 = vunpack.c.h.b16 %v115
    %v2094 = vunpack.c.l.b16 %v116
    %v2095 = vunpack.c.h.b16 %v116
    %v2096 = vunpack.c.l.b16 %v117
    %v2097 = vunpack.c.h.b16 %v117
    %v2098 = vunpack.c.l.b16 %v118
    %v2099 = vunpack.c.h.b16 %v118
    %v2100 = vunpack.c.l.b16 %v119
    %v2101 = vunpack.c.h.b16 %v119
    %v2102 = vunpack.c.l.b16 %v120
    %v2103 = vunpack.c.h.b16 %v120
    %v2104 = vunpack.c.l.b16 %v121
    %v2105 = vunpack.c.h.b16 %v121
    %v2106 = vunpack.c.l.b16 %v122
    %v2107 = vunpack.c.h.b16 %v122
    %v2108 = vunpack.c.l.b16 %v123
    %v2109 = vunpack.c.h.b16 %v123
    %v2110 = vunpack.c.l.b16 %v124
    %v2111 = vunpack.c.h.b16 %v124
    %v2112 = vunpack.c.l.b16 %v125
    %v2113 = vunpack.c.h.b16 %v125
    %v2114 = vunpack.c.l.b16 %v126
    %v2115 = vunpack.c.h.b16 %v126
    %v2116 = vunpack.c.l.b16 %v127
    %v2117 = vunpack.c.h.b16 %v127
    %v2118 = vunpack.c.l.b16 %v128
    %v2119 = vunpack.c.h.b16 %v128
    %v2120 = vunpack.c.l.b16 %v129
    %v2121 = vunpack.c.h.b16 %v129
    %v2122 = vunpack.c.l.b16 %v130
    %v2123 = vunpack.c.h.b16 %v130
    %v2124 = vunpack.c.l.b16 %v131
    %v2125 = vunpack.c.h.b16 %v131
    %v2126 = vunpack.c.l.b16 %v132
    %v2127 = vunpack.c.h.b16 %v132
    %v2128 = vunpack.c.l.b16 %v133
    %v2129 = vunpack.c.h.b16 %v133
    %v2130 = vunpack.c.l.b16 %v134
    %v2131 = vunpack.c.h.b16 %v134
    %v2132 = vunpack.c.l.b16 %v135
    %v2133 = vunpack.c.h.b16 %v135
    %v2134 = vunpack.c.l.b16 %v136
    %v2135 = vunpack.c.h.b16 %v136
    %v2136 = vunpack.c.l.b16 %v137
    %v2137 = vunpack.c.h.b16 %v137
    %v2138 = vunpack.c.l.b16 %v138
    %v2139 = vunpack.c.h.b16 %v138
    %v2140 = vunpack.c.l.b16 %v139
    %v2141 = vunpack.c.h.b16 %v139
    %v2142 = vunpack.c.l.b16 %v140
    %v2143 = vunpack.c.h.b16 %v140
    %v2144 = vunpack.c.l.b16 %v141
    %v2145 = vunpack.c.h.b16 %v141
    %v2146 = vunpack.c.l.b16 %v142
    %v2147 = vunpack.c.h.b16 %v142
    %v2148 = vunpack.c.l.b16 %v143
    %v2149 = vunpack.c.h.b16 %v143
    %v2150 = vunpack.c.l.b16 %v144
    %v2151 = vunpack.c.h.b16 %v144
    %v2152 = vunpack.c.l.b16 %v145
    %v2153 = vunpack.c.h.b16 %v145
    %v2154 = vunpack.c.l.b16 %v146
    %v2155 = vunpack.c.h.b16 %v146
    %v2156 = vunpack.c.l.b16 %v147
    %v2157 = vunpack.c.h.b16 %v147
    %v2158 = vunpack.c.l.b16 %v148
    %v2159 = vunpack.c.h.b16 %v148
    %v2160 = vunpack.c.l.b16 %v149
    %v2161 = vunpack.c.h.b16 %v149
    %v2162 = vunpack.c.l.b16 %v150
    %v2163 = vunpack.c.h.b16 %v150
    %v2164 = vunpack.c.l.b16 %v151
    %v2165 = vunpack.c.h.b16 %v151
    %v2166 = vunpack.c.l.b16 %v152
    %v2167 = vunpack.c.h.b16 %v152
    %v2168 = vunpack.c.l.b16 %v153
    %v2169 = vunpack.c.h.b16 %v153
    %v2170 = vunpack.c.l.b16 %v154
    %v2171 = vunpack.c.h.b16 %v154
    %v2172 = vunpack.c.l.b16 %v155
    %v2173 = vunpack.c.h.b16 %v155
    %v2174 = vunpack.c.l.b16 %v156
    %v2175 = vunpack.c.h.b16 %v156
    %v2176 = vunpack.c.l.b16 %v157
    %v2177 = vunpack.c.h.b16 %v157
    %v2178 = vunpack.c.l.b16 %v158
    %v2179 = vunpack.c.h.b16 %v158
    %v2180 = vunpack.c.l.b16 %v159
    %v2181 = vunpack.c.h.b16 %v159
    %v2182 = vunpack.c.l.b16 %v160
    %v2183 = vunpack.c.h.b16 %v160
    %v2184 = vunpack.c.l.b16 %v161
    %v2185 = vunpack.c.h.b16 %v161
    %v2186 = vunpack.c.l.b16 %v162
    %v2187 = vunpack.c.h.b16 %v162
    %v2188 = vunpack.c.l.b16 %v163
    %v2189 = vunpack.c.h.b16 %v163
    %v2190 = vunpack.c.l.b16 %v164
    %v2191 = vunpack.c.h.b16 %v164
    %v2192 = vunpack.c.l.b16 %v165
    %v2193 = vunpack.c.h.b16 %v165
    %v2194 = vunpack.c.l.b16 %v166
    %v2195 = vunpack.c.h.b16 %v166
    %v2196 = vunpack.c.l.b16 %v167
    %v2197 = vunpack.c.h.b16 %v167
    %v2198 = vunpack.c.l.b16 %v168
    %v2199 = vunpack.c.h.b16 %v168
    %v2200 = vunpack.c.l.b16 %v169
    %v2201 = vunpack.c.h.b16 %v169
    %v2202 = vunpack.c.l.b16 %v170
    %v2203 = vunpack.c.h.b16 %v170
    %v2204 = vunpack.c.l.b16 %v171
    %v2205 = vunpack.c.h.b16 %v171
    %v2206 = vunpack.c.l.b16 %v172
    %v2207 = vunpack.c.h.b16 %v172
    %v2208 = vunpack.c.l.b16 %v173
    %v2209 = vunpack.c.h.b16 %v173
    %v2210 = vunpack.c.l.b16 %v174
    %v2211 = vunpack.c.h.b16 %v174
    %v2212 = vunpack.c.l.b16 %v175
    %v2213 = vunpack.c.h.b16 %v175
    %v2214 = vunpack.c.l.b16 %v176
    %v2215 = vunpack.c.h.b16 %v176
    %v2216 = vunpack.c.l.b16 %v177
    %v2217 = vunpack.c.h.b16 %v177
    %v2218 = vunpack.c.l.b16 %v178
    %v2219 = vunpack.c.h.b16 %v178
    %v2220 = vunpack.c.l.b16 %v179
    %v2221 = vunpack.c.h.b16 %v179
    %v2222 = vunpack.c.l.b16 %v180
    %v2223 = vunpack.c.h.b16 %v180
    %v2224 = vunpack.c.l.b16 %v181
    %v2225 = vunpack.c.h.b16 %v181
    %v2226 = vunpack.c.l.b16 %v182
    %v2227 = vunpack.c.h.b16 %v182
    %v2228 = vunpack.c.l.b16 %v183
    %v2229 = vunpack.c.h.b16 %v183
    %v2230 = vunpack.c.l.b16 %v184
    %v2231 = vunpack.c.h.b16 %v184
    %v2232 = vunpack.c.l.b16 %v185
    %v2233 = vunpack.c.h.b16 %v185
    %v2234 = vunpack.c.l.b16 %v186
    %v2235 = vunpack.c.h.b16 %v186
    %v2236 = vunpack.c.l.b16 %v187
    %v2237 = vunpack.c.h.b16 %v187
    %v2238 = vunpack.c.l.b16 %v188
    %v2239 = vunpack.c.h.b16 %v188
    %v2240 = vunpack.c.l.b16 %v189
    %v2241 = vunpack.c.h.b16 %v189
    %v2242 = vunpack.c.l.b16 %v190
    %v2243 = vunpack.c.h.b16 %v190
    %v2244 = vunpack.c.l.b16 %v191
    %v2245 = vunpack.c.h.b16 %v191
    %v2246 = vunpack.c.l.b16 %v192
    %v2247 = vunpack.c.h.b16 %v192
    %v2248 = vunpack.c.l.b16 %v193
    %v2249 = vunpack.c.h.b16 %v193
    %v2250 = vunpack.c.l.b16 %v194
    %v2251 = vunpack.c.h.b16 %v194
    %v2252 = vunpack.c.l.b16 %v195
    %v2253 = vunpack.c.h.b16 %v195
    %v2254 = vunpack.c.l.b16 %v196
    %v2255 = vunpack.c.h.b16 %v196
    %v2256 = vunpack.c.l.b16 %v197
    %v2257 = vunpack.c.h.b16 %v197
    %v2258 = vunpack.c.l.b16 %v198
    %v2259 = vunpack.c.h.b16 %v198
    %v2260 = vunpack.c.l.b16 %v199
    %v2261 = vunpack.c.h.b16 %v199
    %v2262 = vunpack.c.l.b16 %v200
    %v2263 = vunpack.c.h.b16 %v200
    %v2264 = vunpack.c.l.b16 %v201
    %v2265 = vunpack.c.h.b16 %v201
    %v2266 = vunpack.c.l.b16 %v202
    %v2267 = vunpack.c.h.b16 %v202
    %v2268 = vunpack.c.l.b16 %v203
    %v2269 = vunpack.c.h.b16 %v203
    %v2270 = vunpack.c.l.b16 %v204
    %v2271 = vunpack.c.h.b16 %v204
    %v2272 = vunpack.c.l.b16 %v205
    %v2273 = vunpack.c.h.b16 %v205
    %v2274 = vunpack.c.l.b16 %v206
    %v2275 = vunpack.c.h.b16 %v206
    %v2276 = vunpack.c.l.b16 %v207
    %v2277 = vunpack.c.h.b16 %v207
    %v2278 = vunpack.c.l.b16 %v208
    %v2279 = vunpack.c.h.b16 %v208
    %v2280 = vunpack.c.l.b16 %v209
    %v2281 = vunpack.c.h.b16 %v209
    %v2282 = vunpack.c.l.b16 %v210
    %v2283 = vunpack.c.h.b16 %v210
    %v2284 = vunpack.c.l.b16 %v211
    %v2285 = vunpack.c.h.b16 %v211
    %v2286 = vunpack.c.l.b16 %v212
    %v2287 = vunpack.c.h.b16 %v212
    %v2288 = vunpack.c.l.b16 %v213
    %v2289 = vunpack.c.h.b16 %v213
    %v2290 = vunpack.c.l.b16 %v214
    %v2291 = vunpack.c.h.b16 %v214
    %v2292 = vunpack.c.l.b16 %v215
    %v2293 = vunpack.c.h.b16 %v215
    %v2294 = vunpack.c.l.b16 %v216
    %v2295 = vunpack.c.h.b16 %v216
    %v2296 = vunpack.c.l.b16 %v217
    %v2297 = vunpack.c.h.b16 %v217
    %v2298 = vunpack.c.l.b16 %v218
    %v2299 = vunpack.c.h.b16 %v218
    %v2300 = vunpack.c.l.b16 %v219
    %v2301 = vunpack.c.h.b16 %v219
    %v2302 = vunpack.c.l.b16 %v220
    %v2303 = vunpack.c.h.b16 %v220
    %v2304 = vpack.c.b16 %v1924, %v1920
    %v2305 = vpack.c.b16 %v1925, %v1921
    %v2306 = vpack.c.b16 %v1926, %v1922
    %v2307 = vpack.c.b16 %v1927, %v1923
    %v2308 = vpack.c.b16 %v1932, %v1928
    %v2309 = vpack.c.b16 %v1933, %v1929
    %v2310 = vpack.c.b16 %v1934, %v1930
    %v2311 = vpack.c.b16 %v1935, %v1931
    %v2312 = vpack.c.b16 %v1940, %v1936
    %v2313 = vpack.c.b16 %v1941, %v1937
    %v2314 = vpack.c.b16 %v1942, %v1938
    %v2315 = vpack.c.b16 %v1943, %v1939
    %v2316 = vpack.c.b16 %v1948, %v1944
    %v2317 = vpack.c.b16 %v1949, %v1945
    %v2318 = vpack.c.b16 %v1950, %v1946
    %v2319 = vpack.c.b16 %v1951, %v1947
    %v2320 = vpack.c.b16 %v1956, %v1952
    %v2321 = vpack.c.b16 %v1957, %v1953
    %v2322 = vpack.c.b16 %v1958, %v1954
    %v2323 = vpack.c.b16 %v1959, %v1955
    %v2324 = vpack.c.b16 %v1964, %v1960
    %v2325 = vpack.c.b16 %v1965, %v1961
    %v2326 = vpack.c.b16 %v1966, %v1962
    %v2327 = vpack.c.b16 %v1967, %v1963
    %v2328 = vpack.c.b16 %v1972, %v1968
    %v2329 = vpack.c.b16 %v1973, %v1969
    %v2330 = vpack.c.b16 %v1974, %v1970
    %v2331 = vpack.c.b16 %v1975, %v1971
    %v2332 = vpack.c.b16 %v1980, %v1976
    %v2333 = vpack.c.b16 %v1981, %v1977
    %v2334 = vpack.c.b16 %v1982, %v1978
    %v2335 = vpack.c.b16 %v1983, %v1979
    %v2336 = vpack.c.b16 %v1988, %v1984
    %v2337 = vpack.c.b16 %v1989, %v1985
    %v2338 = vpack.c.b16 %v1990, %v1986
    %v2339 = vpack.c.b16 %v1991, %v1987
    %v2340 = vpack.c.b16 %v1996, %v1992
    %v2341 = vpack.c.b16 %v1997, %v1993
    %v2342 = vpack.c.b16 %v1998, %v1994
    %v2343 = vpack.c.b16 %v1999, %v1995
    %v2344 = vpack.c.b16 %v2004, %v2000
    %v2345 = vpack.c.b16 %v2005, %v2001
    %v2346 = vpack.c.b16 %v2006, %v2002
    %v2347 = vpack.c.b16 %v2007, %v2003
    %v2348 = vpack.c.b16 %v2012, %v2008
    %v2349 = vpack.c.b16 %v2013, %v2009
    %v2350 = vpack.c.b16 %v2014, %v2010
    %v2351 = vpack.c.b16 %v2015, %v2011
    %v2352 = vpack.c.b16 %v2020, %v2016
    %v2353 = vpack.c.b16 %v2021, %v2017
    %v2354 = vpack.c.b16 %v2022, %v2018
    %v2355 = vpack.c.b16 %v2023, %v2019
    %v2356 = vpack.c.b16 %v2028, %v2024
    %v2357 = vpack.c.b16 %v2029, %v2025
    %v2358 = vpack.c.b16 %v2030, %v2026
    %v2359 = vpack.c.b16 %v2031, %v2027
    %v2360 = vpack.c.b16 %v2036, %v2032
    %v2361 = vpack.c.b16 %v2037, %v2033
    %v2362 = vpack.c.b16 %v2038, %v2034
    %v2363 = vpack.c.b16 %v2039, %v2035
    %v2364 = vpack.c.b16 %v2044, %v2040
    %v2365 = vpack.c.b16 %v2045, %v2041
    %v2366 = vpack.c.b16 %v2046, %v2042
    %v2367 = vpack.c.b16 %v2047, %v2043
    %v2368 = vpack.c.b16 %v2052, %v2048
    %v2369 = vpack.c.b16 %v2053, %v2049
    %v2370 = vpack.c.b16 %v2054, %v2050
    %v2371 = vpack.c.b16 %v2055, %v2051
    %v2372 = vpack.c.b16 %v2060, %v2056
    %v2373 = vpack.c.b16 %v2061, %v2057
    %v2374 = vpack.c.b16 %v2062, %v2058
    %v2375 = vpack.c.b16 %v2063, %v2059
    %v2376 = vpack.c.b16 %v2068, %v2064
    %v2377 = vpack.c.b16 %v2069, %v2065
    %v2378 = vpack.c.b16 %v2070, %v2066
    %v2379 = vpack.c.b16 %v2071, %v2067
    %v2380 = vpack.c.b16 %v2076, %v2072
    %v2381 = vpack.c.b16 %v2077, %v2073
    %v2382 = vpack.c.b16 %v2078, %v2074
    %v2383 = vpack.c.b16 %v2079, %v2075
    %v2384 = vpack.c.b16 %v2084, %v2080
    %v2385 = vpack.c.b16 %v2085, %v2081
    %v2386 = vpack.c.b16 %v2086, %v2082
    %v2387 = vpack.c.b16 %v2087, %v2083
    %v2388 = vpack.c.b16 %v2092, %v2088
    %v2389 = vpack.c.b16 %v2093, %v2089
    %v2390 = vpack.c.b16 %v2094, %v2090
    %v2391 = vpack.c.b16 %v2095, %v2091
    %v2392 = vpack.c.b16 %v2100, %v2096
    %v2393 = vpack.c.b16 %v2101, %v2097
    %v2394 = vpack.c.b16 %v2102, %v2098
    %v2395 = vpack.c.b16 %v2103, %v2099
    %v2396 = vpack.c.b16 %v2108, %v2104
    %v2397 = vpack.c.b16 %v2109, %v2105
    %v2398 = vpack.c.b16 %v2110, %v2106
    %v2399 = vpack.c.b16 %v2111, %v2107
    %v2400 = vpack.c.b16 %v2116, %v2112
    %v2401 = vpack.c.b16 %v2117, %v2113
    %v2402 = vpack.c.b16 %v2118, %v2114
    %v2403 = vpack.c.b16 %v2119, %v2115
    %v2404 = vpack.c.b16 %v2124, %v2120
    %v2405 = vpack.c.b16 %v2125, %v2121
    %v2406 = vpack.c.b16 %v2126, %v2122
    %v2407 = vpack.c.b16 %v2127, %v2123
    %v2408 = vpack.c.b16 %v2132, %v2128
    %v2409 = vpack.c.b16 %v2133, %v2129
    %v2410 = vpack.c.b16 %v2134, %v2130
    %v2411 = vpack.c.b16 %v2135, %v2131
    %v2412 = vpack.c.b16 %v2140, %v2136
    %v2413 = vpack.c.b16 %v2141, %v2137
    %v2414 = vpack.c.b16 %v2142, %v2138
    %v2415 = vpack.c.b16 %v2143, %v2139
    %v2416 = vpack.c.b16 %v2148, %v2144
    %v2417 = vpack.c.b16 %v2149, %v2145
    %v2418 = vpack.c.b16 %v2150, %v2146
    %v2419 = vpack.c.b16 %v2151, %v2147
    %v2420 = vpack.c.b16 %v2156, %v2152
    %v2421 = vpack.c.b16 %v2157, %v2153
    %v2422 = vpack.c.b16 %v2158, %v2154
    %v2423 = vpack.c.b16 %v2159, %v2155
    %v2424 = vpack.c.b16 %v2164, %v2160
    %v2425 = vpack.c.b16 %v2165, %v2161
    %v2426 = vpack.c.b16 %v2166, %v2162
    %v2427 = vpack.c.b16 %v2167, %v2163
    %v2428 = vpack.c.b16 %v2172, %v2168
    %v2429 = vpack.c.b16 %v2173, %v2169
    %v2430 = vpack.c.b16 %v2174, %v2170
    %v2431 = vpack.c.b16 %v2175, %v2171
    %v2432 = vpack.c.b16 %v2180, %v2176
    %v2433 = vpack.c.b16 %v2181, %v2177
    %v2434 = vpack.c.b16 %v2182, %v2178
    %v2435 = vpack.c.b16 %v2183, %v2179
    %v2436 = vpack.c.b16 %v2188, %v2184
    %v2437 = vpack.c.b16 %v2189, %v2185
    %v2438 = vpack.c.b16 %v2190, %v2186
    %v2439 = vpack.c.b16 %v2191, %v2187
    %v2440 = vpack.c.b16 %v2196, %v2192
    %v2441 = vpack.c.b16 %v2197, %v2193
    %v2442 = vpack.c.b16 %v2198, %v2194
    %v2443 = vpack.c.b16 %v2199, %v2195
    %v2444 = vpack.c.b16 %v2204, %v2200
    %v2445 = vpack.c.b16 %v2205, %v2201
    %v2446 = vpack.c.b16 %v2206, %v2202
    %v2447 = vpack.c.b16 %v2207, %v2203
    %v2448 = vpack.c.b16 %v2212, %v2208
    %v2449 = vpack.c.b16 %v2213, %v2209
    %v2450 = vpack.c.b16 %v2214, %v2210
    %v2451 = vpack.c.b16 %v2215, %v2211
    %v2452 = vpack.c.b16 %v2220, %v2216
    %v2453 = vpack.c.b16 %v2221, %v2217
    %v2454 = vpack.c.b16 %v2222, %v2218
    %v2455 = vpack.c.b16 %v2223, %v2219
    %v2456 = vpack.c.b16 %v2228, %v2224
    %v2457 = vpack.c.b16 %v2229, %v2225
    %v2458 = vpack.c.b16 %v2230, %v2226
    %v2459 = vpack.c.b16 %v2231, %v2227
    %v2460 = vpack.c.b16 %v2236, %v2232
    %v2461 = vpack.c.b16 %v2237, %v2233
    %v2462 = vpack.c.b16 %v2238, %v2234
    %v2463 = vpack.c.b16 %v2239, %v2235
    %v2464 = vpack.c.b16 %v2244, %v2240
    %v2465 = vpack.c.b16 %v2245, %v2241
    %v2466 = vpack.c.b16 %v2246, %v2242
    %v2467 = vpack.c.b16 %v2247, %v2243
    %v2468 = vpack.c.b16 %v2252, %v2248
    %v2469 = vpack.c.b16 %v2253, %v2249
    %v2470 = vpack.c.b16 %v2254, %v2250
    %v2471 = vpack.c.b16 %v2255, %v2251
    %v2472 = vpack.c.b16 %v2260, %v2256
    %v2473 = vpack.c.b16 %v2261, %v2257
    %v2474 = vpack.c.b16 %v2262, %v2258
    %v2475 = vpack.c.b16 %v2263, %v2259
    %v2476 = vpack.c.b16 %v2268, %v2264
    %v2477 = vpack.c.b16 %v2269, %v2265
    %v2478 = vpack.c.b16 %v2270, %v2266
    %v2479 = vpack.c.b16 %v2271, %v2267
    %v2480 = vpack.c.b16 %v2276, %v2272
    %v2481 = vpack.c.b16 %v2277, %v2273
    %v2482 = vpack.c.b16 %v2278, %v2274
    %v2483 = vpack.c.b16 %v2279, %v2275
    %v2484 = vpack.c.b16 %v2284, %v2280
    %v2485 = vpack.c.b16 %v2285, %v2281
    %v2486 = vpack.c.b16 %v2286, %v2282
    %v2487 = vpack.c.b16 %v2287, %v2283
    %v2488 = vpack.c.b16 %v2292, %v2288
    %v2489 = vpack.c.b16 %v2293, %v2289
    %v2490 = vpack.c.b16 %v2294, %v2290
    %v2491 = vpack.c.b16 %v2295, %v2291
    %v2492 = vpack.c.b16 %v2300, %v2296
    %v2493 = vpack.c.b16 %v2301, %v2297
    %v2494 = vpack.c.b16 %v2302, %v2298
    %v2495 = vpack.c.b16 %v2303, %v2299
    %2688 = vmatprep.subr.bf16.mxu0 %v2305
    %2689 = vmatpush1.bf16.msra.mxu0 %v2304
    %2690 = vmatprep.subr.bf16.mxu0 %v2309
    %2691 = vmatpush1.bf16.msra.mxu0 %v2308
    %2692 = vmatprep.subr.bf16.mxu0 %v2313
    %2693 = vmatpush1.bf16.msra.mxu0 %v2312
    %2694 = vmatprep.subr.bf16.mxu0 %v2317
    %2695 = vmatpush1.bf16.msra.mxu0 %v2316
    %2696 = vmatprep.subr.bf16.mxu0 %v2321
    %2697 = vmatpush1.bf16.msra.mxu0 %v2320
    %2698 = vmatprep.subr.bf16.mxu0 %v2325
    %2699 = vmatpush1.bf16.msra.mxu0 %v2324
    %2700 = vmatprep.subr.bf16.mxu0 %v2329
    %2701 = vmatpush1.bf16.msra.mxu0 %v2328
    %2702 = vmatprep.subr.bf16.mxu0 %v2333
    %2703 = vmatpush1.bf16.msra.mxu0 %v2332
    %2704 = vmatprep.subr.bf16.mxu0 %v2337
    %2705 = vmatpush1.bf16.msra.mxu0 %v2336
    %2706 = vmatprep.subr.bf16.mxu0 %v2341
    %2707 = vmatpush1.bf16.msra.mxu0 %v2340
    %2708 = vmatprep.subr.bf16.mxu0 %v2345
    %2709 = vmatpush1.bf16.msra.mxu0 %v2344
    %2710 = vmatprep.subr.bf16.mxu0 %v2349
    %2711 = vmatpush1.bf16.msra.mxu0 %v2348
    %2712 = vmatprep.subr.bf16.mxu0 %v2353
    %2713 = vmatpush1.bf16.msra.mxu0 %v2352
    %2714 = vmatprep.subr.bf16.mxu0 %v2357
    %2715 = vmatpush1.bf16.msra.mxu0 %v2356
    %2716 = vmatprep.subr.bf16.mxu0 %v2361
    %2717 = vmatpush1.bf16.msra.mxu0 %v2360
    %2718 = vmatprep.subr.bf16.mxu0 %v2365
    %2719 = vmatpush1.bf16.msra.mxu0 %v2364
    %2720 = vmatprep.mubr.bf16.mxu0 %v1712
    %2721 = vmatmul.mubr.bf16.gmra.mrb[0].mxu0 %v1698
    %v2722 = vpop.f32.mrb[0].mxu0
    %v2723 = vadd.f32 %v1545, %v2722
    %v2724 = vpop.f32.mrb[0].mxu0
    %v2725 = vadd.f32 %v1547, %v2724
    %v2726 = vpop.f32.mrb[0].mxu0
    %v2727 = vpop.f32.mrb[0].mxu0
    %2728 = vdwg.mxu0
    %2729 = vmatprep.subr.bf16.mxu0 %v2369
    %2730 = vmatpush1.bf16.msra.mxu0 %v2368
    %2731 = vmatprep.subr.bf16.mxu0 %v2373
    %2732 = vmatpush1.bf16.msra.mxu0 %v2372
    %2733 = vmatprep.subr.bf16.mxu0 %v2377
    %2734 = vmatpush1.bf16.msra.mxu0 %v2376
    %2735 = vmatprep.subr.bf16.mxu0 %v2381
    %2736 = vmatpush1.bf16.msra.mxu0 %v2380
    %2737 = vmatprep.subr.bf16.mxu0 %v2385
    %2738 = vmatpush1.bf16.msra.mxu0 %v2384
    %2739 = vmatprep.subr.bf16.mxu0 %v2389
    %2740 = vmatpush1.bf16.msra.mxu0 %v2388
    %2741 = vmatprep.subr.bf16.mxu0 %v2393
    %2742 = vmatpush1.bf16.msra.mxu0 %v2392
    %2743 = vmatprep.subr.bf16.mxu0 %v2397
    %2744 = vmatpush1.bf16.msra.mxu0 %v2396
    %2745 = vmatprep.subr.bf16.mxu0 %v2401
    %2746 = vmatpush1.bf16.msra.mxu0 %v2400
    %2747 = vmatprep.subr.bf16.mxu0 %v2405
    %2748 = vmatpush1.bf16.msra.mxu0 %v2404
    %2749 = vmatprep.subr.bf16.mxu0 %v2409
    %2750 = vmatpush1.bf16.msra.mxu0 %v2408
    %2751 = vmatprep.subr.bf16.mxu0 %v2413
    %2752 = vmatpush1.bf16.msra.mxu0 %v2412
    %2753 = vmatprep.subr.bf16.mxu0 %v2417
    %2754 = vmatpush1.bf16.msra.mxu0 %v2416
    %2755 = vmatprep.subr.bf16.mxu0 %v2421
    %2756 = vmatpush1.bf16.msra.mxu0 %v2420
    %2757 = vmatprep.subr.bf16.mxu0 %v2425
    %2758 = vmatpush1.bf16.msra.mxu0 %v2424
    %2759 = vmatprep.subr.bf16.mxu0 %v2429
    %2760 = vmatpush1.bf16.msra.mxu0 %v2428
    %2761 = vmatprep.mubr.bf16.mxu0 %v1721
    %2762 = vmatmul.mubr.bf16.gmra.mrb[0].mxu0 %v1720
    %v2763 = vpop.f32.mrb[0].mxu0
    %v2764 = vadd.f32 %v2723, %v2763
    %v2765 = vpop.f32.mrb[0].mxu0
    %v2766 = vadd.f32 %v2725, %v2765
    %v2767 = vpop.f32.mrb[0].mxu0
    %v2768 = vpop.f32.mrb[0].mxu0
    %2769 = vdwg.mxu0
    %2770 = vmatprep.subr.bf16.mxu0 %v2433
    %2771 = vmatpush1.bf16.msra.mxu0 %v2432
    %2772 = vmatprep.subr.bf16.mxu0 %v2437
    %2773 = vmatpush1.bf16.msra.mxu0 %v2436
    %2774 = vmatprep.subr.bf16.mxu0 %v2441
    %2775 = vmatpush1.bf16.msra.mxu0 %v2440
    %2776 = vmatprep.subr.bf16.mxu0 %v2445
    %2777 = vmatpush1.bf16.msra.mxu0 %v2444
    %2778 = vmatprep.subr.bf16.mxu0 %v2449
    %2779 = vmatpush1.bf16.msra.mxu0 %v2448
    %2780 = vmatprep.subr.bf16.mxu0 %v2453
    %2781 = vmatpush1.bf16.msra.mxu0 %v2452
    %2782 = vmatprep.subr.bf16.mxu0 %v2457
    %2783 = vmatpush1.bf16.msra.mxu0 %v2456
    %2784 = vmatprep.subr.bf16.mxu0 %v2461
    %2785 = vmatpush1.bf16.msra.mxu0 %v2460
    %2786 = vmatprep.subr.bf16.mxu0 %v2465
    %2787 = vmatpush1.bf16.msra.mxu0 %v2464
    %2788 = vmatprep.subr.bf16.mxu0 %v2469
    %2789 = vmatpush1.bf16.msra.mxu0 %v2468
    %2790 = vmatprep.subr.bf16.mxu0 %v2473
    %2791 = vmatpush1.bf16.msra.mxu0 %v2472
    %2792 = vmatprep.subr.bf16.mxu0 %v2477
    %2793 = vmatpush1.bf16.msra.mxu0 %v2476
    %2794 = vmatprep.subr.bf16.mxu0 %v2481
    %2795 = vmatpush1.bf16.msra.mxu0 %v2480
    %2796 = vmatprep.subr.bf16.mxu0 %v2485
    %2797 = vmatpush1.bf16.msra.mxu0 %v2484
    %2798 = vmatprep.subr.bf16.mxu0 %v2489
    %2799 = vmatpush1.bf16.msra.mxu0 %v2488
    %2800 = vmatprep.subr.bf16.mxu0 %v2493
    %2801 = vmatpush1.bf16.msra.mxu0 %v2492
    %2802 = vmatprep.mubr.bf16.mxu0 %v1719
    %2803 = vmatmul.mubr.bf16.gmra.mrb[0].mxu0 %v1705
    %v2804 = vpop.f32.mrb[0].mxu0
    %v2805 = vadd.f32 %v2764, %v2804
    %v2806 = vpop.f32.mrb[0].mxu0
    %v2807 = vadd.f32 %v2766, %v2806
    %v2808 = vpop.f32.mrb[0].mxu0
    %v2809 = vpop.f32.mrb[0].mxu0
    %2810 = vdwg.mxu0
    %2811 = vmatprep.subr.bf16.mxu0 %v2307
    %2812 = vmatpush1.bf16.msra.mxu0 %v2306
    %2813 = vmatprep.subr.bf16.mxu0 %v2311
    %2814 = vmatpush1.bf16.msra.mxu0 %v2310
    %2815 = vmatprep.subr.bf16.mxu0 %v2315
    %2816 = vmatpush1.bf16.msra.mxu0 %v2314
    %2817 = vmatprep.subr.bf16.mxu0 %v2319
    %2818 = vmatpush1.bf16.msra.mxu0 %v2318
    %2819 = vmatprep.subr.bf16.mxu0 %v2323
    %2820 = vmatpush1.bf16.msra.mxu0 %v2322
    %2821 = vmatprep.subr.bf16.mxu0 %v2327
    %2822 = vmatpush1.bf16.msra.mxu0 %v2326
    %2823 = vmatprep.subr.bf16.mxu0 %v2331
    %2824 = vmatpush1.bf16.msra.mxu0 %v2330
    %2825 = vmatprep.subr.bf16.mxu0 %v2335
    %2826 = vmatpush1.bf16.msra.mxu0 %v2334
    %2827 = vmatprep.subr.bf16.mxu0 %v2339
    %2828 = vmatpush1.bf16.msra.mxu0 %v2338
    %2829 = vmatprep.subr.bf16.mxu0 %v2343
    %2830 = vmatpush1.bf16.msra.mxu0 %v2342
    %2831 = vmatprep.subr.bf16.mxu0 %v2347
    %2832 = vmatpush1.bf16.msra.mxu0 %v2346
    %2833 = vmatprep.subr.bf16.mxu0 %v2351
    %2834 = vmatpush1.bf16.msra.mxu0 %v2350
    %2835 = vmatprep.subr.bf16.mxu0 %v2355
    %2836 = vmatpush1.bf16.msra.mxu0 %v2354
    %2837 = vmatprep.subr.bf16.mxu0 %v2359
    %2838 = vmatpush1.bf16.msra.mxu0 %v2358
    %2839 = vmatprep.subr.bf16.mxu0 %v2363
    %2840 = vmatpush1.bf16.msra.mxu0 %v2362
    %2841 = vmatprep.subr.bf16.mxu0 %v2367
    %2842 = vmatpush1.bf16.msra.mxu0 %v2366
    %2843 = vmatprep.mubr.bf16.mxu0 %v1712
    %2844 = vmatmul.mubr.bf16.gmra.mrb[0].mxu0 %v1698
    %v2845 = vpop.f32.mrb[0].mxu0
    %v2846 = vadd.f32 %v1668, %v2845
    %v2847 = vpop.f32.mrb[0].mxu0
    %v2848 = vadd.f32 %v1670, %v2847
    %v2849 = vpop.f32.mrb[0].mxu0
    %v2850 = vpop.f32.mrb[0].mxu0
    %2851 = vdwg.mxu0
    %2852 = vmatprep.subr.bf16.mxu0 %v2371
    %2853 = vmatpush1.bf16.msra.mxu0 %v2370
    %2854 = vmatprep.subr.bf16.mxu0 %v2375
    %2855 = vmatpush1.bf16.msra.mxu0 %v2374
    %2856 = vmatprep.subr.bf16.mxu0 %v2379
    %2857 = vmatpush1.bf16.msra.mxu0 %v2378
    %2858 = vmatprep.subr.bf16.mxu0 %v2383
    %2859 = vmatpush1.bf16.msra.mxu0 %v2382
    %2860 = vmatprep.subr.bf16.mxu0 %v2387
    %2861 = vmatpush1.bf16.msra.mxu0 %v2386
    %2862 = vmatprep.subr.bf16.mxu0 %v2391
    %2863 = vmatpush1.bf16.msra.mxu0 %v2390
    %2864 = vmatprep.subr.bf16.mxu0 %v2395
    %2865 = vmatpush1.bf16.msra.mxu0 %v2394
    %2866 = vmatprep.subr.bf16.mxu0 %v2399
    %2867 = vmatpush1.bf16.msra.mxu0 %v2398
    %2868 = vmatprep.subr.bf16.mxu0 %v2403
    %2869 = vmatpush1.bf16.msra.mxu0 %v2402
    %2870 = vmatprep.subr.bf16.mxu0 %v2407
    %2871 = vmatpush1.bf16.msra.mxu0 %v2406
    %2872 = vmatprep.subr.bf16.mxu0 %v2411
    %2873 = vmatpush1.bf16.msra.mxu0 %v2410
    %2874 = vmatprep.subr.bf16.mxu0 %v2415
    %2875 = vmatpush1.bf16.msra.mxu0 %v2414
    %2876 = vmatprep.subr.bf16.mxu0 %v2419
    %2877 = vmatpush1.bf16.msra.mxu0 %v2418
    %2878 = vmatprep.subr.bf16.mxu0 %v2423
    %2879 = vmatpush1.bf16.msra.mxu0 %v2422
    %2880 = vmatprep.subr.bf16.mxu0 %v2427
    %2881 = vmatpush1.bf16.msra.mxu0 %v2426
    %2882 = vmatprep.subr.bf16.mxu0 %v2431
    %2883 = vmatpush1.bf16.msra.mxu0 %v2430
    %2884 = vmatprep.mubr.bf16.mxu0 %v1721
    %2885 = vmatmul.mubr.bf16.gmra.mrb[0].mxu0 %v1720
    %v2886 = vpop.f32.mrb[0].mxu0
    %v2887 = vadd.f32 %v2846, %v2886
    %v2888 = vpop.f32.mrb[0].mxu0
    %v2889 = vadd.f32 %v2848, %v2888
    %v2890 = vpop.f32.mrb[0].mxu0
    %v2891 = vpop.f32.mrb[0].mxu0
    %2892 = vdwg.mxu0
    %2893 = vmatprep.subr.bf16.mxu0 %v2435
    %2894 = vmatpush1.bf16.msra.mxu0 %v2434
    %2895 = vmatprep.subr.bf16.mxu0 %v2439
    %2896 = vmatpush1.bf16.msra.mxu0 %v2438
    %2897 = vmatprep.subr.bf16.mxu0 %v2443
    %2898 = vmatpush1.bf16.msra.mxu0 %v2442
    %2899 = vmatprep.subr.bf16.mxu0 %v2447
    %2900 = vmatpush1.bf16.msra.mxu0 %v2446
    %2901 = vmatprep.subr.bf16.mxu0 %v2451
    %2902 = vmatpush1.bf16.msra.mxu0 %v2450
    %2903 = vmatprep.subr.bf16.mxu0 %v2455
    %2904 = vmatpush1.bf16.msra.mxu0 %v2454
    %2905 = vmatprep.subr.bf16.mxu0 %v2459
    %2906 = vmatpush1.bf16.msra.mxu0 %v2458
    %2907 = vmatprep.subr.bf16.mxu0 %v2463
    %2908 = vmatpush1.bf16.msra.mxu0 %v2462
    %2909 = vmatprep.subr.bf16.mxu0 %v2467
    %2910 = vmatpush1.bf16.msra.mxu0 %v2466
    %2911 = vmatprep.subr.bf16.mxu0 %v2471
    %2912 = vmatpush1.bf16.msra.mxu0 %v2470
    %2913 = vmatprep.subr.bf16.mxu0 %v2475
    %2914 = vmatpush1.bf16.msra.mxu0 %v2474
    %2915 = vmatprep.subr.bf16.mxu0 %v2479
    %2916 = vmatpush1.bf16.msra.mxu0 %v2478
    %2917 = vmatprep.subr.bf16.mxu0 %v2483
    %2918 = vmatpush1.bf16.msra.mxu0 %v2482
    %2919 = vmatprep.subr.bf16.mxu0 %v2487
    %2920 = vmatpush1.bf16.msra.mxu0 %v2486
    %2921 = vmatprep.subr.bf16.mxu0 %v2491
    %2922 = vmatpush1.bf16.msra.mxu0 %v2490
    %2923 = vmatprep.subr.bf16.mxu0 %v2495
    %2924 = vmatpush1.bf16.msra.mxu0 %v2494
    %2925 = vmatprep.mubr.bf16.mxu0 %v1719
    %2926 = vmatmul.mubr.bf16.gmra.mrb[0].mxu0 %v1705
    %v2927 = vpop.f32.mrb[0].mxu0
    %v2928 = vadd.f32 %v2887, %v2927
    %v2929 = vpop.f32.mrb[0].mxu0
    %v2930 = vadd.f32 %v2889, %v2929
    %v2931 = vpop.f32.mrb[0].mxu0
    %v2932 = vpop.f32.mrb[0].mxu0
    %2933 = vdwg.mxu0
    %v2934 = vld [vmem:[%s4] sm:$0xf]
    %v2936 = vlaneseq
    %v2937 = vshrl.u32 %v2936, 7
    %v2938 = vsub.s32 0, %v2937
    %v2939 = vrot.slane %v2934, %v2938
    %v2940 = vlaneseq
    %v2941 = vshrl.u32 %v2940, 7
    %v2942 = vsub.s32 1, %v2941
    %v2943 = vrot.slane %v2934, %v2942
    %v2944 = vlaneseq
    %v2945 = vshrl.u32 %v2944, 7
    %v2946 = vsub.s32 2, %v2945
    %v2947 = vrot.slane %v2934, %v2946
    %v2948 = vlaneseq
    %v2949 = vshrl.u32 %v2948, 7
    %v2950 = vsub.s32 3, %v2949
    %v2951 = vrot.slane %v2934, %v2950
    %v2956 = vadd.f32 %v2805, %v2939
    %v2957 = vadd.f32 %v2807, %v2943
    %v2958 = vadd.f32 %v2928, %v2947
    %v2959 = vadd.f32 %v2930, %v2951
    %v2960 = vmax.f32 %v2956, 0.0
    %v2961 = vmax.f32 %v2957, 0.0
    %v2962 = vmax.f32 %v2958, 0.0
    %v2963 = vmax.f32 %v2959, 0.0
    %v2964 = vpack.c.bf16 %v2960, %v2960
    %v2965 = vpack.c.bf16 %v2961, %v2961
    %v2966 = vpack.c.bf16 %v2962, %v2962
    %v2967 = vpack.c.bf16 %v2963, %v2963
    %v2968 = vld [vmem:[%s5] sm:$0xf]
    %v2969 = vld [vmem:[%s5 + $0x4] sm:$0xf]
    %v2970 = vld [vmem:[%s5 + $0x8] sm:$0xf]
    %v2971 = vld [vmem:[%s5 + $0xc] sm:$0xf]
    %v2972 = vld [vmem:[%s5 + $0x10] sm:$0xf]
    %v2973 = vld [vmem:[%s5 + $0x14] sm:$0xf]
    %v2974 = vld [vmem:[%s5 + $0x18] sm:$0xf]
    %v2975 = vld [vmem:[%s5 + $0x1c] sm:$0xf]
    %v2976 = vld [vmem:[%s5 + $0x20] sm:$0xf]
    %v2977 = vld [vmem:[%s5 + $0x24] sm:$0xf]
    %v2978 = vld [vmem:[%s5 + $0x28] sm:$0xf]
    %v2979 = vld [vmem:[%s5 + $0x2c] sm:$0xf]
    %v2980 = vld [vmem:[%s5 + $0x30] sm:$0xf]
    %v2981 = vld [vmem:[%s5 + $0x34] sm:$0xf]
    %v2982 = vld [vmem:[%s5 + $0x38] sm:$0xf]
    %v2983 = vld [vmem:[%s5 + $0x3c] sm:$0xf]
    %v2984 = vld [vmem:[%s5 + $0x40] sm:$0xf]
    %v2985 = vld [vmem:[%s5 + $0x44] sm:$0xf]
    %v2986 = vld [vmem:[%s5 + $0x48] sm:$0xf]
    %v2987 = vld [vmem:[%s5 + $0x4c] sm:$0xf]
    %v2988 = vld [vmem:[%s5 + $0x50] sm:$0xf]
    %v2989 = vld [vmem:[%s5 + $0x54] sm:$0xf]
    %v2990 = vld [vmem:[%s5 + $0x58] sm:$0xf]
    %v2991 = vld [vmem:[%s5 + $0x5c] sm:$0xf]
    %v2992 = vld [vmem:[%s5 + $0x60] sm:$0xf]
    %v2993 = vld [vmem:[%s5 + $0x64] sm:$0xf]
    %v2994 = vld [vmem:[%s5 + $0x68] sm:$0xf]
    %v2995 = vld [vmem:[%s5 + $0x6c] sm:$0xf]
    %v2996 = vld [vmem:[%s5 + $0x70] sm:$0xf]
    %v2997 = vld [vmem:[%s5 + $0x74] sm:$0xf]
    %v2998 = vld [vmem:[%s5 + $0x78] sm:$0xf]
    %v2999 = vld [vmem:[%s5 + $0x7c] sm:$0xf]
    %v3000 = vld [vmem:[%s5 + $0x80] sm:$0xf]
    %v3001 = vld [vmem:[%s5 + $0x84] sm:$0xf]
    %v3002 = vld [vmem:[%s5 + $0x88] sm:$0xf]
    %v3003 = vld [vmem:[%s5 + $0x8c] sm:$0xf]
    %v3004 = vld [vmem:[%s5 + $0x90] sm:$0xf]
    %v3005 = vld [vmem:[%s5 + $0x94] sm:$0xf]
    %v3006 = vld [vmem:[%s5 + $0x98] sm:$0xf]
    %v3007 = vld [vmem:[%s5 + $0x9c] sm:$0xf]
    %v3008 = vld [vmem:[%s5 + $0xa0] sm:$0xf]
    %v3009 = vld [vmem:[%s5 + $0xa4] sm:$0xf]
    %v3010 = vld [vmem:[%s5 + $0xa8] sm:$0xf]
    %v3011 = vld [vmem:[%s5 + $0xac] sm:$0xf]
    %v3012 = vld [vmem:[%s5 + $0xb0] sm:$0xf]
    %v3013 = vld [vmem:[%s5 + $0xb4] sm:$0xf]
    %v3014 = vld [vmem:[%s5 + $0xb8] sm:$0xf]
    %v3015 = vld [vmem:[%s5 + $0xbc] sm:$0xf]
    %v3016 = vld [vmem:[%s5 + $0xc0] sm:$0xf]
    %v3017 = vld [vmem:[%s5 + $0xc4] sm:$0xf]
    %v3018 = vld [vmem:[%s5 + $0xc8] sm:$0xf]
    %v3019 = vld [vmem:[%s5 + $0xcc] sm:$0xf]
    %v3020 = vld [vmem:[%s5 + $0xd0] sm:$0xf]
    %v3021 = vld [vmem:[%s5 + $0xd4] sm:$0xf]
    %v3022 = vld [vmem:[%s5 + $0xd8] sm:$0xf]
    %v3023 = vld [vmem:[%s5 + $0xdc] sm:$0xf]
    %v3024 = vld [vmem:[%s5 + $0xe0] sm:$0xf]
    %v3025 = vld [vmem:[%s5 + $0xe4] sm:$0xf]
    %v3026 = vld [vmem:[%s5 + $0xe8] sm:$0xf]
    %v3027 = vld [vmem:[%s5 + $0xec] sm:$0xf]
    %v3028 = vld [vmem:[%s5 + $0xf0] sm:$0xf]
    %v3029 = vld [vmem:[%s5 + $0xf4] sm:$0xf]
    %v3030 = vld [vmem:[%s5 + $0xf8] sm:$0xf]
    %v3031 = vld [vmem:[%s5 + $0xfc] sm:$0xf]
    %v3032 = vld [vmem:[%s6] sm:$0x1]
    %v3034 = vlaneseq
    %v3035 = vshrl.u32 %v3034, 7
    %v3036 = vsub.s32 0, %v3035
    %v3037 = vrot.slane %v3032, %v3036
    %v3103 = vunpack.c.l.b16 %v2968
    %v3104 = vunpack.c.l.b16 %v2969
    %v3105 = vunpack.c.l.b16 %v2970
    %v3106 = vunpack.c.l.b16 %v2971
    %v3107 = vunpack.c.l.b16 %v2972
    %v3108 = vunpack.c.l.b16 %v2973
    %v3109 = vunpack.c.l.b16 %v2974
    %v3110 = vunpack.c.l.b16 %v2975
    %v3111 = vunpack.c.l.b16 %v2976
    %v3112 = vunpack.c.l.b16 %v2977
    %v3113 = vunpack.c.l.b16 %v2978
    %v3114 = vunpack.c.l.b16 %v2979
    %v3115 = vunpack.c.l.b16 %v2980
    %v3116 = vunpack.c.l.b16 %v2981
    %v3117 = vunpack.c.l.b16 %v2982
    %v3118 = vunpack.c.l.b16 %v2983
    %v3119 = vunpack.c.l.b16 %v2984
    %v3120 = vunpack.c.l.b16 %v2985
    %v3121 = vunpack.c.l.b16 %v2986
    %v3122 = vunpack.c.l.b16 %v2987
    %v3123 = vunpack.c.l.b16 %v2988
    %v3124 = vunpack.c.l.b16 %v2989
    %v3125 = vunpack.c.l.b16 %v2990
    %v3126 = vunpack.c.l.b16 %v2991
    %v3127 = vunpack.c.l.b16 %v2992
    %v3128 = vunpack.c.l.b16 %v2993
    %v3129 = vunpack.c.l.b16 %v2994
    %v3130 = vunpack.c.l.b16 %v2995
    %v3131 = vunpack.c.l.b16 %v2996
    %v3132 = vunpack.c.l.b16 %v2997
    %v3133 = vunpack.c.l.b16 %v2998
    %v3134 = vunpack.c.l.b16 %v2999
    %v3135 = vunpack.c.l.b16 %v3000
    %v3136 = vunpack.c.l.b16 %v3001
    %v3137 = vunpack.c.l.b16 %v3002
    %v3138 = vunpack.c.l.b16 %v3003
    %v3139 = vunpack.c.l.b16 %v3004
    %v3140 = vunpack.c.l.b16 %v3005
    %v3141 = vunpack.c.l.b16 %v3006
    %v3142 = vunpack.c.l.b16 %v3007
    %v3143 = vunpack.c.l.b16 %v3008
    %v3144 = vunpack.c.l.b16 %v3009
    %v3145 = vunpack.c.l.b16 %v3010
    %v3146 = vunpack.c.l.b16 %v3011
    %v3147 = vunpack.c.l.b16 %v3012
    %v3148 = vunpack.c.l.b16 %v3013
    %v3149 = vunpack.c.l.b16 %v3014
    %v3150 = vunpack.c.l.b16 %v3015
    %v3151 = vunpack.c.l.b16 %v3016
    %v3152 = vunpack.c.l.b16 %v3017
    %v3153 = vunpack.c.l.b16 %v3018
    %v3154 = vunpack.c.l.b16 %v3019
    %v3155 = vunpack.c.l.b16 %v3020
    %v3156 = vunpack.c.l.b16 %v3021
    %v3157 = vunpack.c.l.b16 %v3022
    %v3158 = vunpack.c.l.b16 %v3023
    %v3159 = vunpack.c.l.b16 %v3024
    %v3160 = vunpack.c.l.b16 %v3025
    %v3161 = vunpack.c.l.b16 %v3026
    %v3162 = vunpack.c.l.b16 %v3027
    %v3163 = vunpack.c.l.b16 %v3028
    %v3164 = vunpack.c.l.b16 %v3029
    %v3165 = vunpack.c.l.b16 %v3030
    %v3166 = vunpack.c.l.b16 %v3031
    %v3167 = vpack.c.b16 %v3104, %v3103
    %v3168 = vpack.c.b16 %v3106, %v3105
    %v3169 = vpack.c.b16 %v3108, %v3107
    %v3170 = vpack.c.b16 %v3110, %v3109
    %v3171 = vpack.c.b16 %v3112, %v3111
    %v3172 = vpack.c.b16 %v3114, %v3113
    %v3173 = vpack.c.b16 %v3116, %v3115
    %v3174 = vpack.c.b16 %v3118, %v3117
    %v3175 = vpack.c.b16 %v3120, %v3119
    %v3176 = vpack.c.b16 %v3122, %v3121
    %v3177 = vpack.c.b16 %v3124, %v3123
    %v3178 = vpack.c.b16 %v3126, %v3125
    %v3179 = vpack.c.b16 %v3128, %v3127
    %v3180 = vpack.c.b16 %v3130, %v3129
    %v3181 = vpack.c.b16 %v3132, %v3131
    %v3182 = vpack.c.b16 %v3134, %v3133
    %v3183 = vpack.c.b16 %v3136, %v3135
    %v3184 = vpack.c.b16 %v3138, %v3137
    %v3185 = vpack.c.b16 %v3140, %v3139
    %v3186 = vpack.c.b16 %v3142, %v3141
    %v3187 = vpack.c.b16 %v3144, %v3143
    %v3188 = vpack.c.b16 %v3146, %v3145
    %v3189 = vpack.c.b16 %v3148, %v3147
    %v3190 = vpack.c.b16 %v3150, %v3149
    %v3191 = vpack.c.b16 %v3152, %v3151
    %v3192 = vpack.c.b16 %v3154, %v3153
    %v3193 = vpack.c.b16 %v3156, %v3155
    %v3194 = vpack.c.b16 %v3158, %v3157
    %v3195 = vpack.c.b16 %v3160, %v3159
    %v3196 = vpack.c.b16 %v3162, %v3161
    %v3197 = vpack.c.b16 %v3164, %v3163
    %v3198 = vpack.c.b16 %v3166, %v3165
    %3231 = vmatprep.subr.bf16.mxu0 0
    %3232 = vmatpush1.bf16.msra.mxu0 %v3167
    %3233 = vmatprep.subr.bf16.mxu0 0
    %3234 = vmatpush1.bf16.msra.mxu0 %v3168
    %3235 = vmatprep.subr.bf16.mxu0 0
    %3236 = vmatpush1.bf16.msra.mxu0 %v3169
    %3237 = vmatprep.subr.bf16.mxu0 0
    %3238 = vmatpush1.bf16.msra.mxu0 %v3170
    %3239 = vmatprep.subr.bf16.mxu0 0
    %3240 = vmatpush1.bf16.msra.mxu0 %v3171
    %3241 = vmatprep.subr.bf16.mxu0 0
    %3242 = vmatpush1.bf16.msra.mxu0 %v3172
    %3243 = vmatprep.subr.bf16.mxu0 0
    %3244 = vmatpush1.bf16.msra.mxu0 %v3173
    %3245 = vmatprep.subr.bf16.mxu0 0
    %3246 = vmatpush1.bf16.msra.mxu0 %v3174
    %3247 = vmatprep.subr.bf16.mxu0 0
    %3248 = vmatpush1.bf16.msra.mxu0 %v3175
    %3249 = vmatprep.subr.bf16.mxu0 0
    %3250 = vmatpush1.bf16.msra.mxu0 %v3176
    %3251 = vmatprep.subr.bf16.mxu0 0
    %3252 = vmatpush1.bf16.msra.mxu0 %v3177
    %3253 = vmatprep.subr.bf16.mxu0 0
    %3254 = vmatpush1.bf16.msra.mxu0 %v3178
    %3255 = vmatprep.subr.bf16.mxu0 0
    %3256 = vmatpush1.bf16.msra.mxu0 %v3179
    %3257 = vmatprep.subr.bf16.mxu0 0
    %3258 = vmatpush1.bf16.msra.mxu0 %v3180
    %3259 = vmatprep.subr.bf16.mxu0 0
    %3260 = vmatpush1.bf16.msra.mxu0 %v3181
    %3261 = vmatprep.subr.bf16.mxu0 0
    %3262 = vmatpush1.bf16.msra.mxu0 %v3182
    %3263 = vmatprep.mubr.bf16.mxu0 %v2965
    %3264 = vmatmul.mubr.bf16.gmra.mrb[0].mxu0 %v2964
    %v3265 = vpop.f32.mrb[0].mxu0
    %v3266 = vadd.f32 %v3037, %v3265
    %v3267 = vpop.f32.mrb[0].mxu0
    %v3268 = vpop.f32.mrb[0].mxu0
    %v3269 = vpop.f32.mrb[0].mxu0
    %3270 = vdwg.mxu0
    %3271 = vmatprep.subr.bf16.mxu0 0
    %3272 = vmatpush1.bf16.msra.mxu0 %v3183
    %3273 = vmatprep.subr.bf16.mxu0 0
    %3274 = vmatpush1.bf16.msra.mxu0 %v3184
    %3275 = vmatprep.subr.bf16.mxu0 0
    %3276 = vmatpush1.bf16.msra.mxu0 %v3185
    %3277 = vmatprep.subr.bf16.mxu0 0
    %3278 = vmatpush1.bf16.msra.mxu0 %v3186
    %3279 = vmatprep.subr.bf16.mxu0 0
    %3280 = vmatpush1.bf16.msra.mxu0 %v3187
    %3281 = vmatprep.subr.bf16.mxu0 0
    %3282 = vmatpush1.bf16.msra.mxu0 %v3188
    %3283 = vmatprep.subr.bf16.mxu0 0
    %3284 = vmatpush1.bf16.msra.mxu0 %v3189
    %3285 = vmatprep.subr.bf16.mxu0 0
    %3286 = vmatpush1.bf16.msra.mxu0 %v3190
    %3287 = vmatprep.subr.bf16.mxu0 0
    %3288 = vmatpush1.bf16.msra.mxu0 %v3191
    %3289 = vmatprep.subr.bf16.mxu0 0
    %3290 = vmatpush1.bf16.msra.mxu0 %v3192
    %3291 = vmatprep.subr.bf16.mxu0 0
    %3292 = vmatpush1.bf16.msra.mxu0 %v3193
    %3293 = vmatprep.subr.bf16.mxu0 0
    %3294 = vmatpush1.bf16.msra.mxu0 %v3194
    %3295 = vmatprep.subr.bf16.mxu0 0
    %3296 = vmatpush1.bf16.msra.mxu0 %v3195
    %3297 = vmatprep.subr.bf16.mxu0 0
    %3298 = vmatpush1.bf16.msra.mxu0 %v3196
    %3299 = vmatprep.subr.bf16.mxu0 0
    %3300 = vmatpush1.bf16.msra.mxu0 %v3197
    %3301 = vmatprep.subr.bf16.mxu0 0
    %3302 = vmatpush1.bf16.msra.mxu0 %v3198
    %3303 = vmatprep.mubr.bf16.mxu0 %v2967
    %3304 = vmatmul.mubr.bf16.gmra.mrb[0].mxu0 %v2966
    %v3305 = vpop.f32.mrb[0].mxu0
    %v3306 = vadd.f32 %v3266, %v3305
    %v3307 = vpop.f32.mrb[0].mxu0
    %v3308 = vpop.f32.mrb[0].mxu0
    %v3309 = vpop.f32.mrb[0].mxu0
    %3310 = vdwg.mxu0
    %3311 = vst [vmem:[#allocation2] sm:$0x3] %v3306
    // Predicated region
    $region30: #{rigidnet120_forward.5} parent=1 // pred_check
      _
    $region31: #{rigidnet120_forward.5} parent=1 // pred_check_branch
      %3313 = sbr.rel (0) target = $region33
    $region32: #{rigidnet120_forward.5} parent=1 // pred_region
      %s3315 = ssub.s32 32, 32
      %3316 = vsyncadd [#allocation3], %s3315
      %s3318 = sshll.u32 [#allocation2], 4
      %s3319 = int_to_ptr.vmem [resolvable:$true] %s3318
      %3321 = dma.vmem_to_hbm [thread:$0]  %s3319, 32, %s7, [#allocation3]
    $region33: #{rigidnet120_forward.5} parent=1 // pred_fallthru
      _
    // Predicated region
    $region34: #{rigidnet120_forward.5} parent=1 // pred_check
      _
    $region35: #{rigidnet120_forward.5} parent=1 // pred_check_branch
      %3323 = sbr.rel (0) target = $region37
    $region36: #{rigidnet120_forward.5} parent=1 // pred_region
      %3324 = dma.done [#allocation3], 32
    $region37: #{rigidnet120_forward.5} parent=1 // pred_fallthru
      _
    %3325 = vsyncpa [#allocation3], 1

</llo_original>
